<compile_context>
chip_gen: v6e
topology: v6e:2x2x1
jax: 0.10.0
libtpu: 0.0.40
codegen_flags: <defaults>
</compile_context>

<pallas_src>
import functools

import jax
import jax.numpy as jnp
import numpy as np
from jax import lax
from jax.experimental import pallas as pl
from jax.experimental.pallas import tpu as pltpu

OUT_CHANNELS = 64
BACKBONE_DIMS = [64, 160, 400]           # c3 / c4 / c5 channels of regnet_x_400mf trunk
FPN_STRIDES = {"p3": 8, "p4": 16, "p5": 32}

# Explicit scoped-VMEM budget.  Largest per-step working set here is the conv kernel:
# 2x double-buffered (P, C) bf16 input slabs + 2x (R, Co) f32 output blocks + weights,
# which stays well under 32 MiB even for 1024x1024 images (p3 level ~13 MiB).
# 32 MiB is safe on v5e (128 MiB phys), v6e (128 MiB) and v7x (64 MiB).
_VMEM_LIMIT = 32 * 1024 * 1024


def _cparams(n_grid_dims=1):
    return pltpu.CompilerParams(
        dimension_semantics=("parallel",) * n_grid_dims,
        vmem_limit_bytes=_VMEM_LIMIT)


# ----------------------------- Pallas kernels ------------------------------

def _proj3_kernel(x_ref, w_ref, b_ref, o_ref):
    # Fused (backbone stand-in ∘ FPN lateral) pointwise projection, K=3, done on the VPU.
    # x_ref: (TM, 3) f32, w_ref: (3, Co) f32, b_ref: (1, Co) f32, o_ref: (TM, Co) bf16.
    x = x_ref[...]
    w = w_ref[...]
    acc = b_ref[...] + x[:, 0:1] * w[0:1, :]
    acc = acc + x[:, 1:2] * w[1:2, :]
    acc = acc + x[:, 2:3] * w[2:3, :]
    o_ref[...] = acc.astype(o_ref.dtype)


def _upsample2x_add_kernel(top_ref, lat_ref, o_ref):
    # Nearest-neighbor 2x upsample of `top` fused with the FPN lateral add, lane-dense.
    # top_ref: (TR, 1, Wt, C); lat_ref / o_ref: (TR, 2, Wt, 2*C)   (all bf16).
    t = top_ref[...]
    t2 = jnp.concatenate([t, t], axis=-1)       # duplicate channels along lanes -> 2*C wide
    o_ref[...] = lat_ref[...] + t2              # broadcast over the row-pair (sublane) dim


def _conv3x3_kernel(Wp, R, x_ref, w_ref, b_ref, o_ref):
    # Fused-im2col 3x3 'same' conv for one image.
    # x_ref: (P, C) bf16   -- spatially padded map, flattened row-major: P = (H+2)*(W+2)
    # w_ref: (9, C, Co) bf16, b_ref: (1, Co) f32, o_ref: (R, Co) f32 with R = H*(W+2)-2.
    # Output band index t corresponds to padded flat position t + (Wp+1); tap (dh, dw)
    # therefore reads the contiguous row slice starting at dh*Wp + dw.
    acc = jnp.dot(x_ref[pl.ds(0, R), :], w_ref[0],
                  preferred_element_type=jnp.float32)
    for dh in range(3):
        for dw in range(3):
            if dh == 0 and dw == 0:
                continue
            acc = acc + jnp.dot(x_ref[pl.ds(dh * Wp + dw, R), :],
                                w_ref[dh * 3 + dw],
                                preferred_element_type=jnp.float32)
    o_ref[...] = acc + b_ref[...]


# ------------------------------ Pallas wrappers -----------------------------

def fused_lateral_proj(x_sub, w3, b):
    """(B,h,w,3) f32 --[x @ w3 + b]--> (B,h,w,Co) bf16 on the VPU (K=3)."""
    B, h, w, _ = x_sub.shape
    Co = w3.shape[1]
    M = B * h * w
    x2 = x_sub.reshape(M, 3)
    TM = min(512, ((M + 7) // 8) * 8)           # fixed tile, pad M up to a multiple of it
    M_pad = ((M + TM - 1) // TM) * TM
    if M_pad != M:
        x2 = jnp.pad(x2, ((0, M_pad - M), (0, 0)))
    out = pl.pallas_call(
        _proj3_kernel,
        out_shape=jax.ShapeDtypeStruct((M_pad, Co), jnp.bfloat16),
        grid_spec=pltpu.PrefetchScalarGridSpec(
            num_scalar_prefetch=0,
            grid=(M_pad // TM,),
            in_specs=[pl.BlockSpec((TM, 3), lambda i: (i, 0)),
                      pl.BlockSpec((3, Co), lambda i: (0, 0)),
                      pl.BlockSpec((1, Co), lambda i: (0, 0))],
            out_specs=pl.BlockSpec((TM, Co), lambda i: (i, 0))),
        compiler_params=_cparams(1),
    )(x2, w3, b.reshape(1, Co))
    return out[:M].reshape(B, h, w, Co)


def upsample2x_add(top, lat):
    """nearest-neighbor 2x upsample of `top`, added to `lat` (both NHWC bf16)."""
    B, Ht, Wt, C = top.shape
    assert lat.shape == (B, 2 * Ht, 2 * Wt, C)
    Rt = B * Ht
    # Pure reshapes (no data motion): output/lat rows hold (row-pair, W, pos-pair*C)
    # so the minor dim is 2*C = 128 -> full-lane, unmasked stores.
    top4 = top.reshape(Rt, 1, Wt, C)
    lat4 = lat.reshape(Rt, 2, Wt, 2 * C)
    TR = min(256, Rt)
    R_pad = ((Rt + TR - 1) // TR) * TR
    if R_pad != Rt:
        top4 = jnp.pad(top4, ((0, R_pad - Rt), (0, 0), (0, 0), (0, 0)))
        lat4 = jnp.pad(lat4, ((0, R_pad - Rt), (0, 0), (0, 0), (0, 0)))
    out = pl.pallas_call(
        _upsample2x_add_kernel,
        out_shape=jax.ShapeDtypeStruct((R_pad, 2, Wt, 2 * C), lat.dtype),
        grid_spec=pltpu.PrefetchScalarGridSpec(
            num_scalar_prefetch=0,
            grid=(R_pad // TR,),
            in_specs=[pl.BlockSpec((TR, 1, Wt, C), lambda i: (i, 0, 0, 0)),
                      pl.BlockSpec((TR, 2, Wt, 2 * C), lambda i: (i, 0, 0, 0))],
            out_specs=pl.BlockSpec((TR, 2, Wt, 2 * C), lambda i: (i, 0, 0, 0))),
        compiler_params=_cparams(1),
    )(top4, lat4)
    return out[:Rt].reshape(B, 2 * Ht, 2 * Wt, C)


def conv3x3_same(x, w, b):
    """3x3 stride-1 'same' conv.  x: NHWC (bf16), w: (3,3,Ci,Co) f32, b: (Co,) f32 -> f32 NHWC.

    im2col is fused into the kernel: only a ~1.07x spatial zero-pad of the input is
    materialized (glue), instead of the former 9x im2col tensor.
    """
    B, H, W, Ci = x.shape
    Co = w.shape[-1]
    Hp, Wp = H + 2, W + 2
    P = Hp * Wp
    R = H * Wp - 2                      # contiguous output band covering every valid row
    xp = jnp.pad(x.astype(jnp.bfloat16),
                 ((0, 0), (1, 1), (1, 1), (0, 0))).reshape(B, P, Ci)
    w9 = w.reshape(9, Ci, Co).astype(jnp.bfloat16)
    # TODO(synk): for v5e lane density one could zero-pad Co 64->128 and slice at the end.
    out = pl.pallas_call(
        functools.partial(_conv3x3_kernel, Wp, R),
        out_shape=jax.ShapeDtypeStruct((B, R, Co), jnp.float32),
        grid_spec=pltpu.PrefetchScalarGridSpec(
            num_scalar_prefetch=0,
            grid=(B,),                  # >= 2 parallel tiles for batch >= 2 (megacore)
            in_specs=[pl.BlockSpec((None, P, Ci), lambda i: (i, 0, 0)),
                      pl.BlockSpec((9, Ci, Co), lambda i: (0, 0, 0)),
                      pl.BlockSpec((1, Co), lambda i: (0, 0))],
            out_specs=pl.BlockSpec((None, R, Co), lambda i: (i, 0, 0))),
        compiler_params=_cparams(1),
    )(xp, w9, b.reshape(1, Co))
    # Band index t = h*Wp + w_ for the valid outputs; drop the 2-wide pad columns.
    out = jnp.pad(out, ((0, 0), (0, 2), (0, 0))).reshape(B, H, Wp, Co)
    return out[:, :, :W, :]


# ------------------------------ parameters ----------------------------------

def init_params(key, out_channels=OUT_CHANNELS):
    dims = BACKBONE_DIMS
    keys = jax.random.split(key, 16)

    def dense(k, ci, co):
        return jax.random.normal(k, (ci, co), jnp.float32) / np.sqrt(ci)

    def conv3(k, ci, co):
        return jax.random.normal(k, (3, 3, ci, co), jnp.float32) / np.sqrt(9 * ci)

    def bias(k, co):
        return 0.01 * jax.random.normal(k, (co,), jnp.float32)

    p = {}
    # deterministic backbone stand-in: pointwise projections 3 -> (64, 160, 400)
    p["bb3_w"], p["bb3_b"] = dense(keys[0], 3, dims[0]), jnp.zeros((dims[0],), jnp.float32)
    p["bb4_w"], p["bb4_b"] = dense(keys[1], 3, dims[1]), jnp.zeros((dims[1],), jnp.float32)
    p["bb5_w"], p["bb5_b"] = dense(keys[2], 3, dims[2]), jnp.zeros((dims[2],), jnp.float32)
    # FPN lateral 1x1 convs (lat1: 64->oc, lat2: 160->oc, lat3: 400->oc)
    p["lat1_w"], p["lat1_b"] = dense(keys[3], dims[0], out_channels), bias(keys[4], out_channels)
    p["lat2_w"], p["lat2_b"] = dense(keys[5], dims[1], out_channels), bias(keys[6], out_channels)
    p["lat3_w"], p["lat3_b"] = dense(keys[7], dims[2], out_channels), bias(keys[8], out_channels)
    # FPN output 3x3 convs (oc -> oc)
    p["conv1_w"], p["conv1_b"] = conv3(keys[9], out_channels, out_channels), bias(keys[10], out_channels)
    p["conv2_w"], p["conv2_b"] = conv3(keys[11], out_channels, out_channels), bias(keys[12], out_channels)
    p["conv3_w"], p["conv3_b"] = conv3(keys[13], out_channels, out_channels), bias(keys[14], out_channels)
    return p


# ------------------------------ forward pass ---------------------------------

def detector_backbone_with_fpn_forward(images_nchw, params):
    x = jnp.transpose(images_nchw, (0, 2, 3, 1)).astype(jnp.float32)   # NHWC

    # TODO(synk): the pretrained torchvision regnet_x_400mf trunk cannot be reproduced
    # in-script; it is replaced by a deterministic stand-in (strided subsample + pointwise
    # projection) producing c3/c4/c5 with the exact channels (64/160/400) and strides
    # (8/16/32) the real backbone would give.
    #
    # The stand-in (3->dims) and the FPN lateral conv (dims->oc) are both 1x1 convs, so
    # they are composed algebraically into a single 3->oc projection (exact math, removes
    # one HBM round trip and a nearly-empty MXU pass).
    def fuse(bw, bb, lw, lb):
        return bw @ lw, bb @ lw + lb

    w5, b5 = fuse(params["bb5_w"], params["bb5_b"], params["lat3_w"], params["lat3_b"])
    w4, b4 = fuse(params["bb4_w"], params["bb4_b"], params["lat2_w"], params["lat2_b"])
    w3, b3 = fuse(params["bb3_w"], params["bb3_b"], params["lat1_w"], params["lat1_b"])

    m5 = fused_lateral_proj(x[:, ::32, ::32, :], w5, b5)   # (B, H/32, W/32, oc) bf16
    m4 = fused_lateral_proj(x[:, ::16, ::16, :], w4, b4)   # (B, H/16, W/16, oc) bf16
    m3 = fused_lateral_proj(x[:, ::8, ::8, :], w3, b3)     # (B, H/8,  W/8,  oc) bf16

    # ---- FPN top-down pathway (mirrors the PyTorch forward exactly) ----
    p5 = conv3x3_same(m5, params["conv3_w"], params["conv3_b"])
    m4_ = upsample2x_add(m5, m4)
    p4 = conv3x3_same(m4_, params["conv2_w"], params["conv2_b"])
    m3_ = upsample2x_add(m4_, m3)
    p3 = conv3x3_same(m3_, params["conv1_w"], params["conv1_b"])

    to_nchw = lambda t: jnp.transpose(t, (0, 3, 1, 2))
    return {"p3": to_nchw(p3), "p4": to_nchw(p4), "p5": to_nchw(p5)}


# --------------------------- pure-JAX reference ------------------------------

def _reference_forward(images_nchw, params):
    x = jnp.transpose(images_nchw, (0, 2, 3, 1)).astype(jnp.float32)

    def c1(t, w, b):
        return jnp.einsum("bhwc,cd->bhwd", t, w) + b

    def c3(t, w, b):
        return lax.conv_general_dilated(
            t, w, window_strides=(1, 1), padding="SAME",
            dimension_numbers=("NHWC", "HWIO", "NHWC")) + b

    def up(t):
        return jnp.repeat(jnp.repeat(t, 2, axis=1), 2, axis=2)

    c3f = c1(x[:, ::8, ::8, :], params["bb3_w"], params["bb3_b"])
    c4f = c1(x[:, ::16, ::16, :], params["bb4_w"], params["bb4_b"])
    c5f = c1(x[:, ::32, ::32, :], params["bb5_w"], params["bb5_b"])
    m5 = c1(c5f, params["lat3_w"], params["lat3_b"])
    m4 = c1(c4f, params["lat2_w"], params["lat2_b"])
    m3 = c1(c3f, params["lat1_w"], params["lat1_b"])
    p5 = c3(m5, params["conv3_w"], params["conv3_b"])
    m4_ = up(m5) + m4
    p4 = c3(m4_, params["conv2_w"], params["conv2_b"])
    m3_ = up(m4_) + m3
    p3 = c3(m3_, params["conv1_w"], params["conv1_b"])
    to_nchw = lambda t: jnp.transpose(t, (0, 3, 1, 2))
    return {"p3": to_nchw(p3), "p4": to_nchw(p4), "p5": to_nchw(p5)}


# ---------------------------------- main --------------------------------------

if __name__ == "__main__":
    key = jax.random.PRNGKey(0)
    k_img, k_par = jax.random.split(key)
    images = jax.random.normal(k_img, (2, 3, 64, 64), jnp.float32)   # NCHW like PyTorch
    params = init_params(k_par)

    fwd = jax.jit(detector_backbone_with_fpn_forward)
    feats = jax.block_until_ready(fwd(images, params))

    # shape contract: p3 = H/8, p4 = H/16, p5 = H/32 with OUT_CHANNELS channels (NCHW)
    assert feats["p3"].shape == (2, OUT_CHANNELS, 8, 8)
    assert feats["p4"].shape == (2, OUT_CHANNELS, 4, 4)
    assert feats["p5"].shape == (2, OUT_CHANNELS, 2, 2)

    ref = _reference_forward(images, params)
    # bf16 MXU operands / bf16 feature maps (f32 accumulation) vs. an f32 reference:
    # expected element-wise differences are ~1e-2 scale on O(1) activations.
    for lvl in ("p3", "p4", "p5"):
        np.testing.assert_allclose(
            np.asarray(feats[lvl]), np.asarray(ref[lvl]), rtol=2e-2, atol=4e-2)

    print("KERNEL_OK")
</pallas_src>

<mosaic_0001>
module attributes {stable_mosaic.version = 11 : i64} {
  func.func @_proj3_kernel(%arg0: i32, %arg1: memref<8x3xf32, #tpu.memory_space<vmem>>, %arg2: memref<3x64xf32, #tpu.memory_space<vmem>>, %arg3: memref<1x64xf32, #tpu.memory_space<vmem>>, %arg4: memref<8x64xbf16, #tpu.memory_space<vmem>>) attributes {dimension_semantics = [#tpu.dimension_semantics<parallel>], iteration_bounds = array<i64: 1>, scalar_prefetch = 0 : i64, scratch_operands = 0 : i64, tpu.core_type = #tpu.core_type<tc>, window_params = [{transform_indices = @transform_0, window_bounds = array<i64: 8, 3>}, {pipeline_mode = #tpu.pipeline_mode<synchronous>, transform_indices = @transform_1, window_bounds = array<i64: 3, 64>}, {pipeline_mode = #tpu.pipeline_mode<synchronous>, transform_indices = @transform_2, window_bounds = array<i64: 1, 64>}, {transform_indices = @transform_3, window_bounds = array<i64: 8, 64>}]} {
    %c0 = arith.constant 0 : index
    %c0_0 = arith.constant 0 : index
    %0 = vector.load %arg1[%c0, %c0_0] : memref<8x3xf32, #tpu.memory_space<vmem>>, vector<8x3xf32>
    %c0_1 = arith.constant 0 : index
    %c0_2 = arith.constant 0 : index
    %1 = vector.load %arg2[%c0_1, %c0_2] : memref<3x64xf32, #tpu.memory_space<vmem>>, vector<3x64xf32>
    %c0_3 = arith.constant 0 : index
    %c0_4 = arith.constant 0 : index
    %2 = vector.load %arg3[%c0_3, %c0_4] : memref<1x64xf32, #tpu.memory_space<vmem>>, vector<1x64xf32>
    %3 = vector.extract_strided_slice %0 {offsets = [0, 0], sizes = [8, 1], strides = [1, 1]} : vector<8x3xf32> to vector<8x1xf32>
    %4 = vector.extract_strided_slice %1 {offsets = [0, 0], sizes = [1, 64], strides = [1, 1]} : vector<3x64xf32> to vector<1x64xf32>
    %5 = vector.broadcast %3 : vector<8x1xf32> to vector<8x64xf32>
    %6 = vector.broadcast %4 : vector<1x64xf32> to vector<8x64xf32>
    %7 = arith.mulf %5, %6 : vector<8x64xf32>
    %8 = vector.broadcast %2 : vector<1x64xf32> to vector<8x64xf32>
    %9 = arith.addf %8, %7 : vector<8x64xf32>
    %10 = vector.extract_strided_slice %0 {offsets = [0, 1], sizes = [8, 1], strides = [1, 1]} : vector<8x3xf32> to vector<8x1xf32>
    %11 = vector.extract_strided_slice %1 {offsets = [1, 0], sizes = [1, 64], strides = [1, 1]} : vector<3x64xf32> to vector<1x64xf32>
    %12 = vector.broadcast %10 : vector<8x1xf32> to vector<8x64xf32>
    %13 = vector.broadcast %11 : vector<1x64xf32> to vector<8x64xf32>
    %14 = arith.mulf %12, %13 : vector<8x64xf32>
    %15 = arith.addf %9, %14 : vector<8x64xf32>
    %16 = vector.extract_strided_slice %0 {offsets = [0, 2], sizes = [8, 1], strides = [1, 1]} : vector<8x3xf32> to vector<8x1xf32>
    %17 = vector.extract_strided_slice %1 {offsets = [2, 0], sizes = [1, 64], strides = [1, 1]} : vector<3x64xf32> to vector<1x64xf32>
    %18 = vector.broadcast %16 : vector<8x1xf32> to vector<8x64xf32>
    %19 = vector.broadcast %17 : vector<1x64xf32> to vector<8x64xf32>
    %20 = arith.mulf %18, %19 : vector<8x64xf32>
    %21 = arith.addf %15, %20 : vector<8x64xf32>
    %22 = arith.truncf %21 : vector<8x64xf32> to vector<8x64xbf16>
    %c0_5 = arith.constant 0 : index
    %c0_6 = arith.constant 0 : index
    %23 = vector.load %arg4[%c0_5, %c0_6] : memref<8x64xbf16, #tpu.memory_space<vmem>>, vector<8x64xbf16>
    tpu.vector_store %arg4[%c0_5, %c0_6], %22 {strides = array<i32>} : memref<8x64xbf16, #tpu.memory_space<vmem>>, vector<8x64xbf16>,
    return
  }
  func.func @transform_0(%arg0: i32) -> (i32, i32) {
    %c0_i32 = arith.constant 0 : i32
    %c0_i32_0 = arith.constant 0 : i32
    return %arg0, %c0_i32 : i32, i32
  }
  func.func @transform_1(%arg0: i32) -> (i32, i32) {
    %c0_i32 = arith.constant 0 : i32
    %c0_i32_0 = arith.constant 0 : i32
    %c0_i32_1 = arith.constant 0 : i32
    return %c0_i32, %c0_i32_0 : i32, i32
  }
  func.func @transform_2(%arg0: i32) -> (i32, i32) {
    %c0_i32 = arith.constant 0 : i32
    %c0_i32_0 = arith.constant 0 : i32
    %c0_i32_1 = arith.constant 0 : i32
    return %c0_i32, %c0_i32_0 : i32, i32
  }
  func.func @transform_3(%arg0: i32) -> (i32, i32) {
    %c0_i32 = arith.constant 0 : i32
    %c0_i32_0 = arith.constant 0 : i32
    return %arg0, %c0_i32 : i32, i32
  }
}

module attributes {stable_mosaic.version = 11 : i64} {
  func.func @_proj3_kernel(%arg0: i32, %arg1: memref<32x3xf32, #tpu.memory_space<vmem>>, %arg2: memref<3x64xf32, #tpu.memory_space<vmem>>, %arg3: memref<1x64xf32, #tpu.memory_space<vmem>>, %arg4: memref<32x64xbf16, #tpu.memory_space<vmem>>) attributes {dimension_semantics = [#tpu.dimension_semantics<parallel>], iteration_bounds = array<i64: 1>, scalar_prefetch = 0 : i64, scratch_operands = 0 : i64, tpu.core_type = #tpu.core_type<tc>, window_params = [{transform_indices = @transform_0, window_bounds = array<i64: 32, 3>}, {pipeline_mode = #tpu.pipeline_mode<synchronous>, transform_indices = @transform_1, window_bounds = array<i64: 3, 64>}, {pipeline_mode = #tpu.pipeline_mode<synchronous>, transform_indices = @transform_2, window_bounds = array<i64: 1, 64>}, {transform_indices = @transform_3, window_bounds = array<i64: 32, 64>}]} {
    %c0 = arith.constant 0 : index
    %c0_0 = arith.constant 0 : index
    %0 = vector.load %arg1[%c0, %c0_0] : memref<32x3xf32, #tpu.memory_space<vmem>>, vector<32x3xf32>
    %c0_1 = arith.constant 0 : index
    %c0_2 = arith.constant 0 : index
    %1 = vector.load %arg2[%c0_1, %c0_2] : memref<3x64xf32, #tpu.memory_space<vmem>>, vector<3x64xf32>
    %c0_3 = arith.constant 0 : index
    %c0_4 = arith.constant 0 : index
    %2 = vector.load %arg3[%c0_3, %c0_4] : memref<1x64xf32, #tpu.memory_space<vmem>>, vector<1x64xf32>
    %3 = vector.extract_strided_slice %0 {offsets = [0, 0], sizes = [32, 1], strides = [1, 1]} : vector<32x3xf32> to vector<32x1xf32>
    %4 = vector.extract_strided_slice %1 {offsets = [0, 0], sizes = [1, 64], strides = [1, 1]} : vector<3x64xf32> to vector<1x64xf32>
    %5 = vector.broadcast %3 : vector<32x1xf32> to vector<32x64xf32>
    %6 = vector.broadcast %4 : vector<1x64xf32> to vector<32x64xf32>
    %7 = arith.mulf %5, %6 : vector<32x64xf32>
    %8 = vector.broadcast %2 : vector<1x64xf32> to vector<32x64xf32>
    %9 = arith.addf %8, %7 : vector<32x64xf32>
    %10 = vector.extract_strided_slice %0 {offsets = [0, 1], sizes = [32, 1], strides = [1, 1]} : vector<32x3xf32> to vector<32x1xf32>
    %11 = vector.extract_strided_slice %1 {offsets = [1, 0], sizes = [1, 64], strides = [1, 1]} : vector<3x64xf32> to vector<1x64xf32>
    %12 = vector.broadcast %10 : vector<32x1xf32> to vector<32x64xf32>
    %13 = vector.broadcast %11 : vector<1x64xf32> to vector<32x64xf32>
    %14 = arith.mulf %12, %13 : vector<32x64xf32>
    %15 = arith.addf %9, %14 : vector<32x64xf32>
    %16 = vector.extract_strided_slice %0 {offsets = [0, 2], sizes = [32, 1], strides = [1, 1]} : vector<32x3xf32> to vector<32x1xf32>
    %17 = vector.extract_strided_slice %1 {offsets = [2, 0], sizes = [1, 64], strides = [1, 1]} : vector<3x64xf32> to vector<1x64xf32>
    %18 = vector.broadcast %16 : vector<32x1xf32> to vector<32x64xf32>
    %19 = vector.broadcast %17 : vector<1x64xf32> to vector<32x64xf32>
    %20 = arith.mulf %18, %19 : vector<32x64xf32>
    %21 = arith.addf %15, %20 : vector<32x64xf32>
    %22 = arith.truncf %21 : vector<32x64xf32> to vector<32x64xbf16>
    %c0_5 = arith.constant 0 : index
    %c0_6 = arith.constant 0 : index
    %23 = vector.load %arg4[%c0_5, %c0_6] : memref<32x64xbf16, #tpu.memory_space<vmem>>, vector<32x64xbf16>
    tpu.vector_store %arg4[%c0_5, %c0_6], %22 {strides = array<i32>} : memref<32x64xbf16, #tpu.memory_space<vmem>>, vector<32x64xbf16>,
    return
  }
  func.func @transform_0(%arg0: i32) -> (i32, i32) {
    %c0_i32 = arith.constant 0 : i32
    %c0_i32_0 = arith.constant 0 : i32
    return %arg0, %c0_i32 : i32, i32
  }
  func.func @transform_1(%arg0: i32) -> (i32, i32) {
    %c0_i32 = arith.constant 0 : i32
    %c0_i32_0 = arith.constant 0 : i32
    %c0_i32_1 = arith.constant 0 : i32
    return %c0_i32, %c0_i32_0 : i32, i32
  }
  func.func @transform_2(%arg0: i32) -> (i32, i32) {
    %c0_i32 = arith.constant 0 : i32
    %c0_i32_0 = arith.constant 0 : i32
    %c0_i32_1 = arith.constant 0 : i32
    return %c0_i32, %c0_i32_0 : i32, i32
  }
  func.func @transform_3(%arg0: i32) -> (i32, i32) {
    %c0_i32 = arith.constant 0 : i32
    %c0_i32_0 = arith.constant 0 : i32
    return %arg0, %c0_i32 : i32, i32
  }
}

module attributes {stable_mosaic.version = 11 : i64} {
  func.func @_upsample2x_add_kernel(%arg0: i32, %arg1: memref<4x1x2x64xbf16, #tpu.memory_space<vmem>>, %arg2: memref<4x2x2x128xbf16, #tpu.memory_space<vmem>>, %arg3: memref<4x2x2x128xbf16, #tpu.memory_space<vmem>>) attributes {dimension_semantics = [#tpu.dimension_semantics<parallel>], iteration_bounds = array<i64: 1>, scalar_prefetch = 0 : i64, scratch_operands = 0 : i64, tpu.core_type = #tpu.core_type<tc>, window_params = [{transform_indices = @transform_0, window_bounds = array<i64: 4, 1, 2, 64>}, {transform_indices = @transform_1, window_bounds = array<i64: 4, 2, 2, 128>}, {transform_indices = @transform_2, window_bounds = array<i64: 4, 2, 2, 128>}]} {
    %c0 = arith.constant 0 : index
    %c0_0 = arith.constant 0 : index
    %c0_1 = arith.constant 0 : index
    %c0_2 = arith.constant 0 : index
    %0 = vector.load %arg1[%c0, %c0_0, %c0_1, %c0_2] : memref<4x1x2x64xbf16, #tpu.memory_space<vmem>>, vector<4x1x2x64xbf16>
    %1 = tpu.concatenate %0, %0 in 3 : vector<4x1x2x64xbf16>, vector<4x1x2x64xbf16> -> vector<4x1x2x128xbf16>
    %c0_3 = arith.constant 0 : index
    %c0_4 = arith.constant 0 : index
    %c0_5 = arith.constant 0 : index
    %c0_6 = arith.constant 0 : index
    %2 = vector.load %arg2[%c0_3, %c0_4, %c0_5, %c0_6] : memref<4x2x2x128xbf16, #tpu.memory_space<vmem>>, vector<4x2x2x128xbf16>
    %3 = vector.broadcast %1 : vector<4x1x2x128xbf16> to vector<4x2x2x128xbf16>
    %4 = arith.addf %2, %3 : vector<4x2x2x128xbf16>
    %c0_7 = arith.constant 0 : index
    %c0_8 = arith.constant 0 : index
    %c0_9 = arith.constant 0 : index
    %c0_10 = arith.constant 0 : index
    %5 = vector.load %arg3[%c0_7, %c0_8, %c0_9, %c0_10] : memref<4x2x2x128xbf16, #tpu.memory_space<vmem>>, vector<4x2x2x128xbf16>
    tpu.vector_store %arg3[%c0_7, %c0_8, %c0_9, %c0_10], %4 {strides = array<i32>} : memref<4x2x2x128xbf16, #tpu.memory_space<vmem>>, vector<4x2x2x128xbf16>,
    return
  }
  func.func @transform_0(%arg0: i32) -> (i32, i32, i32, i32) {
    %c0_i32 = arith.constant 0 : i32
    %c0_i32_0 = arith.constant 0 : i32
    %c0_i32_1 = arith.constant 0 : i32
    %c0_i32_2 = arith.constant 0 : i32
    return %arg0, %c0_i32, %c0_i32_0, %c0_i32_1 : i32, i32, i32, i32
  }
  func.func @transform_1(%arg0: i32) -> (i32, i32, i32, i32) {
    %c0_i32 = arith.constant 0 : i32
    %c0_i32_0 = arith.constant 0 : i32
    %c0_i32_1 = arith.constant 0 : i32
    %c0_i32_2 = arith.constant 0 : i32
    return %arg0, %c0_i32, %c0_i32_0, %c0_i32_1 : i32, i32, i32, i32
  }
  func.func @transform_2(%arg0: i32) -> (i32, i32, i32, i32) {
    %c0_i32 = arith.constant 0 : i32
    %c0_i32_0 = arith.constant 0 : i32
    %c0_i32_1 = arith.constant 0 : i32
    %c0_i32_2 = arith.constant 0 : i32
    return %arg0, %c0_i32, %c0_i32_0, %c0_i32_1 : i32, i32, i32, i32
  }
}

module attributes {stable_mosaic.version = 11 : i64} {
  func.func @_proj3_kernel(%arg0: i32, %arg1: memref<128x3xf32, #tpu.memory_space<vmem>>, %arg2: memref<3x64xf32, #tpu.memory_space<vmem>>, %arg3: memref<1x64xf32, #tpu.memory_space<vmem>>, %arg4: memref<128x64xbf16, #tpu.memory_space<vmem>>) attributes {dimension_semantics = [#tpu.dimension_semantics<parallel>], iteration_bounds = array<i64: 1>, scalar_prefetch = 0 : i64, scratch_operands = 0 : i64, tpu.core_type = #tpu.core_type<tc>, window_params = [{transform_indices = @transform_0, window_bounds = array<i64: 128, 3>}, {pipeline_mode = #tpu.pipeline_mode<synchronous>, transform_indices = @transform_1, window_bounds = array<i64: 3, 64>}, {pipeline_mode = #tpu.pipeline_mode<synchronous>, transform_indices = @transform_2, window_bounds = array<i64: 1, 64>}, {transform_indices = @transform_3, window_bounds = array<i64: 128, 64>}]} {
    %c0 = arith.constant 0 : index
    %c0_0 = arith.constant 0 : index
    %0 = vector.load %arg1[%c0, %c0_0] : memref<128x3xf32, #tpu.memory_space<vmem>>, vector<128x3xf32>
    %c0_1 = arith.constant 0 : index
    %c0_2 = arith.constant 0 : index
    %1 = vector.load %arg2[%c0_1, %c0_2] : memref<3x64xf32, #tpu.memory_space<vmem>>, vector<3x64xf32>
    %c0_3 = arith.constant 0 : index
    %c0_4 = arith.constant 0 : index
    %2 = vector.load %arg3[%c0_3, %c0_4] : memref<1x64xf32, #tpu.memory_space<vmem>>, vector<1x64xf32>
    %3 = vector.extract_strided_slice %0 {offsets = [0, 0], sizes = [128, 1], strides = [1, 1]} : vector<128x3xf32> to vector<128x1xf32>
    %4 = vector.extract_strided_slice %1 {offsets = [0, 0], sizes = [1, 64], strides = [1, 1]} : vector<3x64xf32> to vector<1x64xf32>
    %5 = vector.broadcast %3 : vector<128x1xf32> to vector<128x64xf32>
    %6 = vector.broadcast %4 : vector<1x64xf32> to vector<128x64xf32>
    %7 = arith.mulf %5, %6 : vector<128x64xf32>
    %8 = vector.broadcast %2 : vector<1x64xf32> to vector<128x64xf32>
    %9 = arith.addf %8, %7 : vector<128x64xf32>
    %10 = vector.extract_strided_slice %0 {offsets = [0, 1], sizes = [128, 1], strides = [1, 1]} : vector<128x3xf32> to vector<128x1xf32>
    %11 = vector.extract_strided_slice %1 {offsets = [1, 0], sizes = [1, 64], strides = [1, 1]} : vector<3x64xf32> to vector<1x64xf32>
    %12 = vector.broadcast %10 : vector<128x1xf32> to vector<128x64xf32>
    %13 = vector.broadcast %11 : vector<1x64xf32> to vector<128x64xf32>
    %14 = arith.mulf %12, %13 : vector<128x64xf32>
    %15 = arith.addf %9, %14 : vector<128x64xf32>
    %16 = vector.extract_strided_slice %0 {offsets = [0, 2], sizes = [128, 1], strides = [1, 1]} : vector<128x3xf32> to vector<128x1xf32>
    %17 = vector.extract_strided_slice %1 {offsets = [2, 0], sizes = [1, 64], strides = [1, 1]} : vector<3x64xf32> to vector<1x64xf32>
    %18 = vector.broadcast %16 : vector<128x1xf32> to vector<128x64xf32>
    %19 = vector.broadcast %17 : vector<1x64xf32> to vector<128x64xf32>
    %20 = arith.mulf %18, %19 : vector<128x64xf32>
    %21 = arith.addf %15, %20 : vector<128x64xf32>
    %22 = arith.truncf %21 : vector<128x64xf32> to vector<128x64xbf16>
    %c0_5 = arith.constant 0 : index
    %c0_6 = arith.constant 0 : index
    %23 = vector.load %arg4[%c0_5, %c0_6] : memref<128x64xbf16, #tpu.memory_space<vmem>>, vector<128x64xbf16>
    tpu.vector_store %arg4[%c0_5, %c0_6], %22 {strides = array<i32>} : memref<128x64xbf16, #tpu.memory_space<vmem>>, vector<128x64xbf16>,
    return
  }
  func.func @transform_0(%arg0: i32) -> (i32, i32) {
    %c0_i32 = arith.constant 0 : i32
    %c0_i32_0 = arith.constant 0 : i32
    return %arg0, %c0_i32 : i32, i32
  }
  func.func @transform_1(%arg0: i32) -> (i32, i32) {
    %c0_i32 = arith.constant 0 : i32
    %c0_i32_0 = arith.constant 0 : i32
    %c0_i32_1 = arith.constant 0 : i32
    return %c0_i32, %c0_i32_0 : i32, i32
  }
  func.func @transform_2(%arg0: i32) -> (i32, i32) {
    %c0_i32 = arith.constant 0 : i32
    %c0_i32_0 = arith.constant 0 : i32
    %c0_i32_1 = arith.constant 0 : i32
    return %c0_i32, %c0_i32_0 : i32, i32
  }
  func.func @transform_3(%arg0: i32) -> (i32, i32) {
    %c0_i32 = arith.constant 0 : i32
    %c0_i32_0 = arith.constant 0 : i32
    return %arg0, %c0_i32 : i32, i32
  }
}

module attributes {stable_mosaic.version = 11 : i64} {
  func.func @_upsample2x_add_kernel(%arg0: i32, %arg1: memref<8x1x4x64xbf16, #tpu.memory_space<vmem>>, %arg2: memref<8x2x4x128xbf16, #tpu.memory_space<vmem>>, %arg3: memref<8x2x4x128xbf16, #tpu.memory_space<vmem>>) attributes {dimension_semantics = [#tpu.dimension_semantics<parallel>], iteration_bounds = array<i64: 1>, scalar_prefetch = 0 : i64, scratch_operands = 0 : i64, tpu.core_type = #tpu.core_type<tc>, window_params = [{transform_indices = @transform_0, window_bounds = array<i64: 8, 1, 4, 64>}, {transform_indices = @transform_1, window_bounds = array<i64: 8, 2, 4, 128>}, {transform_indices = @transform_2, window_bounds = array<i64: 8, 2, 4, 128>}]} {
    %c0 = arith.constant 0 : index
    %c0_0 = arith.constant 0 : index
    %c0_1 = arith.constant 0 : index
    %c0_2 = arith.constant 0 : index
    %0 = vector.load %arg1[%c0, %c0_0, %c0_1, %c0_2] : memref<8x1x4x64xbf16, #tpu.memory_space<vmem>>, vector<8x1x4x64xbf16>
    %1 = tpu.concatenate %0, %0 in 3 : vector<8x1x4x64xbf16>, vector<8x1x4x64xbf16> -> vector<8x1x4x128xbf16>
    %c0_3 = arith.constant 0 : index
    %c0_4 = arith.constant 0 : index
    %c0_5 = arith.constant 0 : index
    %c0_6 = arith.constant 0 : index
    %2 = vector.load %arg2[%c0_3, %c0_4, %c0_5, %c0_6] : memref<8x2x4x128xbf16, #tpu.memory_space<vmem>>, vector<8x2x4x128xbf16>
    %3 = vector.broadcast %1 : vector<8x1x4x128xbf16> to vector<8x2x4x128xbf16>
    %4 = arith.addf %2, %3 : vector<8x2x4x128xbf16>
    %c0_7 = arith.constant 0 : index
    %c0_8 = arith.constant 0 : index
    %c0_9 = arith.constant 0 : index
    %c0_10 = arith.constant 0 : index
    %5 = vector.load %arg3[%c0_7, %c0_8, %c0_9, %c0_10] : memref<8x2x4x128xbf16, #tpu.memory_space<vmem>>, vector<8x2x4x128xbf16>
    tpu.vector_store %arg3[%c0_7, %c0_8, %c0_9, %c0_10], %4 {strides = array<i32>} : memref<8x2x4x128xbf16, #tpu.memory_space<vmem>>, vector<8x2x4x128xbf16>,
    return
  }
  func.func @transform_0(%arg0: i32) -> (i32, i32, i32, i32) {
    %c0_i32 = arith.constant 0 : i32
    %c0_i32_0 = arith.constant 0 : i32
    %c0_i32_1 = arith.constant 0 : i32
    %c0_i32_2 = arith.constant 0 : i32
    return %arg0, %c0_i32, %c0_i32_0, %c0_i32_1 : i32, i32, i32, i32
  }
  func.func @transform_1(%arg0: i32) -> (i32, i32, i32, i32) {
    %c0_i32 = arith.constant 0 : i32
    %c0_i32_0 = arith.constant 0 : i32
    %c0_i32_1 = arith.constant 0 : i32
    %c0_i32_2 = arith.constant 0 : i32
    return %arg0, %c0_i32, %c0_i32_0, %c0_i32_1 : i32, i32, i32, i32
  }
  func.func @transform_2(%arg0: i32) -> (i32, i32, i32, i32) {
    %c0_i32 = arith.constant 0 : i32
    %c0_i32_0 = arith.constant 0 : i32
    %c0_i32_1 = arith.constant 0 : i32
    %c0_i32_2 = arith.constant 0 : i32
    return %arg0, %c0_i32, %c0_i32_0, %c0_i32_1 : i32, i32, i32, i32
  }
}

module attributes {stable_mosaic.version = 11 : i64} {
  func.func @_conv3x3_kernel(%arg0: i32, %arg1: memref<1x100x64xbf16, #tpu.memory_space<vmem>>, %arg2: memref<9x64x64xbf16, #tpu.memory_space<vmem>>, %arg3: memref<1x64xf32, #tpu.memory_space<vmem>>, %arg4: memref<1x78x64xf32, #tpu.memory_space<vmem>>) attributes {dimension_semantics = [#tpu.dimension_semantics<parallel>], iteration_bounds = array<i64: 2>, scalar_prefetch = 0 : i64, scratch_operands = 0 : i64, tpu.core_type = #tpu.core_type<tc>, window_params = [{transform_indices = @transform_0, window_bounds = array<i64: 1, 100, 64>}, {pipeline_mode = #tpu.pipeline_mode<synchronous>, transform_indices = @transform_1, window_bounds = array<i64: 9, 64, 64>}, {pipeline_mode = #tpu.pipeline_mode<synchronous>, transform_indices = @transform_2, window_bounds = array<i64: 1, 64>}, {transform_indices = @transform_3, window_bounds = array<i64: 1, 78, 64>}]} {
    %c0 = arith.constant 0 : index
    %c0_0 = arith.constant 0 : index
    %c0_1 = arith.constant 0 : index
    %0 = vector.load %arg1[%c0, %c0_0, %c0_1] : memref<1x100x64xbf16, #tpu.memory_space<vmem>>, vector<1x78x64xbf16>
    %1 = vector.shape_cast %0 : vector<1x78x64xbf16> to vector<78x64xbf16>
    %c0_2 = arith.constant 0 : index
    %c0_3 = arith.constant 0 : index
    %c0_4 = arith.constant 0 : index
    %2 = vector.load %arg2[%c0_2, %c0_3, %c0_4] : memref<9x64x64xbf16, #tpu.memory_space<vmem>>, vector<1x64x64xbf16>
    %3 = vector.shape_cast %2 : vector<1x64x64xbf16> to vector<64x64xbf16>
    %cst = arith.constant dense<0.000000e+00> : vector<78x64xf32>
    %4 = tpu.matmul %1, %3, %cst {dimension_numbers = #tpu.dot_dimension_numbers<[1], [0], [0], [1], [0, 0, 1, 1], [], []>} : vector<78x64xbf16>, vector<64x64xbf16>, vector<78x64xf32> -> vector<78x64xf32>
    %c0_5 = arith.constant 0 : index
    %c1 = arith.constant 1 : index
    %c0_6 = arith.constant 0 : index
    %5 = vector.load %arg1[%c0_5, %c1, %c0_6] : memref<1x100x64xbf16, #tpu.memory_space<vmem>>, vector<1x78x64xbf16>
    %6 = vector.shape_cast %5 : vector<1x78x64xbf16> to vector<78x64xbf16>
    %c1_7 = arith.constant 1 : index
    %c0_8 = arith.constant 0 : index
    %c0_9 = arith.constant 0 : index
    %7 = vector.load %arg2[%c1_7, %c0_8, %c0_9] : memref<9x64x64xbf16, #tpu.memory_space<vmem>>, vector<1x64x64xbf16>
    %8 = vector.shape_cast %7 : vector<1x64x64xbf16> to vector<64x64xbf16>
    %cst_10 = arith.constant dense<0.000000e+00> : vector<78x64xf32>
    %9 = tpu.matmul %6, %8, %cst_10 {dimension_numbers = #tpu.dot_dimension_numbers<[1], [0], [0], [1], [0, 0, 1, 1], [], []>} : vector<78x64xbf16>, vector<64x64xbf16>, vector<78x64xf32> -> vector<78x64xf32>
    %10 = arith.addf %4, %9 : vector<78x64xf32>
    %c0_11 = arith.constant 0 : index
    %c2 = arith.constant 2 : index
    %c0_12 = arith.constant 0 : index
    %11 = vector.load %arg1[%c0_11, %c2, %c0_12] : memref<1x100x64xbf16, #tpu.memory_space<vmem>>, vector<1x78x64xbf16>
    %12 = vector.shape_cast %11 : vector<1x78x64xbf16> to vector<78x64xbf16>
    %c2_13 = arith.constant 2 : index
    %c0_14 = arith.constant 0 : index
    %c0_15 = arith.constant 0 : index
    %13 = vector.load %arg2[%c2_13, %c0_14, %c0_15] : memref<9x64x64xbf16, #tpu.memory_space<vmem>>, vector<1x64x64xbf16>
    %14 = vector.shape_cast %13 : vector<1x64x64xbf16> to vector<64x64xbf16>
    %cst_16 = arith.constant dense<0.000000e+00> : vector<78x64xf32>
    %15 = tpu.matmul %12, %14, %cst_16 {dimension_numbers = #tpu.dot_dimension_numbers<[1], [0], [0], [1], [0, 0, 1, 1], [], []>} : vector<78x64xbf16>, vector<64x64xbf16>, vector<78x64xf32> -> vector<78x64xf32>
    %16 = arith.addf %10, %15 : vector<78x64xf32>
    %c0_17 = arith.constant 0 : index
    %c10 = arith.constant 10 : index
    %c0_18 = arith.constant 0 : index
    %17 = vector.load %arg1[%c0_17, %c10, %c0_18] : memref<1x100x64xbf16, #tpu.memory_space<vmem>>, vector<1x78x64xbf16>
    %18 = vector.shape_cast %17 : vector<1x78x64xbf16> to vector<78x64xbf16>
    %c3 = arith.constant 3 : index
    %c0_19 = arith.constant 0 : index
    %c0_20 = arith.constant 0 : index
    %19 = vector.load %arg2[%c3, %c0_19, %c0_20] : memref<9x64x64xbf16, #tpu.memory_space<vmem>>, vector<1x64x64xbf16>
    %20 = vector.shape_cast %19 : vector<1x64x64xbf16> to vector<64x64xbf16>
    %cst_21 = arith.constant dense<0.000000e+00> : vector<78x64xf32>
    %21 = tpu.matmul %18, %20, %cst_21 {dimension_numbers = #tpu.dot_dimension_numbers<[1], [0], [0], [1], [0, 0, 1, 1], [], []>} : vector<78x64xbf16>, vector<64x64xbf16>, vector<78x64xf32> -> vector<78x64xf32>
    %22 = arith.addf %16, %21 : vector<78x64xf32>
    %c0_22 = arith.constant 0 : index
    %c11 = arith.constant 11 : index
    %c0_23 = arith.constant 0 : index
    %23 = vector.load %arg1[%c0_22, %c11, %c0_23] : memref<1x100x64xbf16, #tpu.memory_space<vmem>>, vector<1x78x64xbf16>
    %24 = vector.shape_cast %23 : vector<1x78x64xbf16> to vector<78x64xbf16>
    %c4 = arith.constant 4 : index
    %c0_24 = arith.constant 0 : index
    %c0_25 = arith.constant 0 : index
    %25 = vector.load %arg2[%c4, %c0_24, %c0_25] : memref<9x64x64xbf16, #tpu.memory_space<vmem>>, vector<1x64x64xbf16>
    %26 = vector.shape_cast %25 : vector<1x64x64xbf16> to vector<64x64xbf16>
    %cst_26 = arith.constant dense<0.000000e+00> : vector<78x64xf32>
    %27 = tpu.matmul %24, %26, %cst_26 {dimension_numbers = #tpu.dot_dimension_numbers<[1], [0], [0], [1], [0, 0, 1, 1], [], []>} : vector<78x64xbf16>, vector<64x64xbf16>, vector<78x64xf32> -> vector<78x64xf32>
    %28 = arith.addf %22, %27 : vector<78x64xf32>
    %c0_27 = arith.constant 0 : index
    %c12 = arith.constant 12 : index
    %c0_28 = arith.constant 0 : index
    %29 = vector.load %arg1[%c0_27, %c12, %c0_28] : memref<1x100x64xbf16, #tpu.memory_space<vmem>>, vector<1x78x64xbf16>
    %30 = vector.shape_cast %29 : vector<1x78x64xbf16> to vector<78x64xbf16>
    %c5 = arith.constant 5 : index
    %c0_29 = arith.constant 0 : index
    %c0_30 = arith.constant 0 : index
    %31 = vector.load %arg2[%c5, %c0_29, %c0_30] : memref<9x64x64xbf16, #tpu.memory_space<vmem>>, vector<1x64x64xbf16>
    %32 = vector.shape_cast %31 : vector<1x64x64xbf16> to vector<64x64xbf16>
    %cst_31 = arith.constant dense<0.000000e+00> : vector<78x64xf32>
    %33 = tpu.matmul %30, %32, %cst_31 {dimension_numbers = #tpu.dot_dimension_numbers<[1], [0], [0], [1], [0, 0, 1, 1], [], []>} : vector<78x64xbf16>, vector<64x64xbf16>, vector<78x64xf32> -> vector<78x64xf32>
    %34 = arith.addf %28, %33 : vector<78x64xf32>
    %c0_32 = arith.constant 0 : index
    %c20 = arith.constant 20 : index
    %c0_33 = arith.constant 0 : index
    %35 = vector.load %arg1[%c0_32, %c20, %c0_33] : memref<1x100x64xbf16, #tpu.memory_space<vmem>>, vector<1x78x64xbf16>
    %36 = vector.shape_cast %35 : vector<1x78x64xbf16> to vector<78x64xbf16>
    %c6 = arith.constant 6 : index
    %c0_34 = arith.constant 0 : index
    %c0_35 = arith.constant 0 : index
    %37 = vector.load %arg2[%c6, %c0_34, %c0_35] : memref<9x64x64xbf16, #tpu.memory_space<vmem>>, vector<1x64x64xbf16>
    %38 = vector.shape_cast %37 : vector<1x64x64xbf16> to vector<64x64xbf16>
    %cst_36 = arith.constant dense<0.000000e+00> : vector<78x64xf32>
    %39 = tpu.matmul %36, %38, %cst_36 {dimension_numbers = #tpu.dot_dimension_numbers<[1], [0], [0], [1], [0, 0, 1, 1], [], []>} : vector<78x64xbf16>, vector<64x64xbf16>, vector<78x64xf32> -> vector<78x64xf32>
    %40 = arith.addf %34, %39 : vector<78x64xf32>
    %c0_37 = arith.constant 0 : index
    %c21 = arith.constant 21 : index
    %c0_38 = arith.constant 0 : index
    %41 = vector.load %arg1[%c0_37, %c21, %c0_38] : memref<1x100x64xbf16, #tpu.memory_space<vmem>>, vector<1x78x64xbf16>
    %42 = vector.shape_cast %41 : vector<1x78x64xbf16> to vector<78x64xbf16>
    %c7 = arith.constant 7 : index
    %c0_39 = arith.constant 0 : index
    %c0_40 = arith.constant 0 : index
    %43 = vector.load %arg2[%c7, %c0_39, %c0_40] : memref<9x64x64xbf16, #tpu.memory_space<vmem>>, vector<1x64x64xbf16>
    %44 = vector.shape_cast %43 : vector<1x64x64xbf16> to vector<64x64xbf16>
    %cst_41 = arith.constant dense<0.000000e+00> : vector<78x64xf32>
    %45 = tpu.matmul %42, %44, %cst_41 {dimension_numbers = #tpu.dot_dimension_numbers<[1], [0], [0], [1], [0, 0, 1, 1], [], []>} : vector<78x64xbf16>, vector<64x64xbf16>, vector<78x64xf32> -> vector<78x64xf32>
    %46 = arith.addf %40, %45 : vector<78x64xf32>
    %c0_42 = arith.constant 0 : index
    %c22 = arith.constant 22 : index
    %c0_43 = arith.constant 0 : index
    %47 = vector.load %arg1[%c0_42, %c22, %c0_43] : memref<1x100x64xbf16, #tpu.memory_space<vmem>>, vector<1x78x64xbf16>
    %48 = vector.shape_cast %47 : vector<1x78x64xbf16> to vector<78x64xbf16>
    %c8 = arith.constant 8 : index
    %c0_44 = arith.constant 0 : index
    %c0_45 = arith.constant 0 : index
    %49 = vector.load %arg2[%c8, %c0_44, %c0_45] : memref<9x64x64xbf16, #tpu.memory_space<vmem>>, vector<1x64x64xbf16>
    %50 = vector.shape_cast %49 : vector<1x64x64xbf16> to vector<64x64xbf16>
    %cst_46 = arith.constant dense<0.000000e+00> : vector<78x64xf32>
    %51 = tpu.matmul %48, %50, %cst_46 {dimension_numbers = #tpu.dot_dimension_numbers<[1], [0], [0], [1], [0, 0, 1, 1], [], []>} : vector<78x64xbf16>, vector<64x64xbf16>, vector<78x64xf32> -> vector<78x64xf32>
    %52 = arith.addf %46, %51 : vector<78x64xf32>
    %c0_47 = arith.constant 0 : index
    %c0_48 = arith.constant 0 : index
    %53 = vector.load %arg3[%c0_47, %c0_48] : memref<1x64xf32, #tpu.memory_space<vmem>>, vector<1x64xf32>
    %54 = vector.broadcast %53 : vector<1x64xf32> to vector<78x64xf32>
    %55 = arith.addf %52, %54 : vector<78x64xf32>
    %c0_49 = arith.constant 0 : index
    %c0_50 = arith.constant 0 : index
    %c0_51 = arith.constant 0 : index
    %56 = vector.load %arg4[%c0_49, %c0_50, %c0_51] : memref<1x78x64xf32, #tpu.memory_space<vmem>>, vector<1x78x64xf32>
    %57 = vector.shape_cast %56 : vector<1x78x64xf32> to vector<78x64xf32>
    %58 = vector.shape_cast %55 : vector<78x64xf32> to vector<1x78x64xf32>
    tpu.vector_store %arg4[%c0_49, %c0_50, %c0_51], %58 {strides = array<i32>} : memref<1x78x64xf32, #tpu.memory_space<vmem>>, vector<1x78x64xf32>,
    return
  }
  func.func @transform_0(%arg0: i32) -> (i32, i32, i32) {
    %c0_i32 = arith.constant 0 : i32
    %c0_i32_0 = arith.constant 0 : i32
    %c0_i32_1 = arith.constant 0 : i32
    return %arg0, %c0_i32, %c0_i32_0 : i32, i32, i32
  }
  func.func @transform_1(%arg0: i32) -> (i32, i32, i32) {
    %c0_i32 = arith.constant 0 : i32
    %c0_i32_0 = arith.constant 0 : i32
    %c0_i32_1 = arith.constant 0 : i32
    %c0_i32_2 = arith.constant 0 : i32
    return %c0_i32, %c0_i32_0, %c0_i32_1 : i32, i32, i32
  }
  func.func @transform_2(%arg0: i32) -> (i32, i32) {
    %c0_i32 = arith.constant 0 : i32
    %c0_i32_0 = arith.constant 0 : i32
    %c0_i32_1 = arith.constant 0 : i32
    return %c0_i32, %c0_i32_0 : i32, i32
  }
  func.func @transform_3(%arg0: i32) -> (i32, i32, i32) {
    %c0_i32 = arith.constant 0 : i32
    %c0_i32_0 = arith.constant 0 : i32
    %c0_i32_1 = arith.constant 0 : i32
    return %arg0, %c0_i32, %c0_i32_0 : i32, i32, i32
  }
}

module attributes {stable_mosaic.version = 11 : i64} {
  func.func @_conv3x3_kernel(%arg0: i32, %arg1: memref<1x36x64xbf16, #tpu.memory_space<vmem>>, %arg2: memref<9x64x64xbf16, #tpu.memory_space<vmem>>, %arg3: memref<1x64xf32, #tpu.memory_space<vmem>>, %arg4: memref<1x22x64xf32, #tpu.memory_space<vmem>>) attributes {dimension_semantics = [#tpu.dimension_semantics<parallel>], iteration_bounds = array<i64: 2>, scalar_prefetch = 0 : i64, scratch_operands = 0 : i64, tpu.core_type = #tpu.core_type<tc>, window_params = [{transform_indices = @transform_0, window_bounds = array<i64: 1, 36, 64>}, {pipeline_mode = #tpu.pipeline_mode<synchronous>, transform_indices = @transform_1, window_bounds = array<i64: 9, 64, 64>}, {pipeline_mode = #tpu.pipeline_mode<synchronous>, transform_indices = @transform_2, window_bounds = array<i64: 1, 64>}, {transform_indices = @transform_3, window_bounds = array<i64: 1, 22, 64>}]} {
    %c0 = arith.constant 0 : index
    %c0_0 = arith.constant 0 : index
    %c0_1 = arith.constant 0 : index
    %0 = vector.load %arg1[%c0, %c0_0, %c0_1] : memref<1x36x64xbf16, #tpu.memory_space<vmem>>, vector<1x22x64xbf16>
    %1 = vector.shape_cast %0 : vector<1x22x64xbf16> to vector<22x64xbf16>
    %c0_2 = arith.constant 0 : index
    %c0_3 = arith.constant 0 : index
    %c0_4 = arith.constant 0 : index
    %2 = vector.load %arg2[%c0_2, %c0_3, %c0_4] : memref<9x64x64xbf16, #tpu.memory_space<vmem>>, vector<1x64x64xbf16>
    %3 = vector.shape_cast %2 : vector<1x64x64xbf16> to vector<64x64xbf16>
    %cst = arith.constant dense<0.000000e+00> : vector<22x64xf32>
    %4 = tpu.matmul %1, %3, %cst {dimension_numbers = #tpu.dot_dimension_numbers<[1], [0], [0], [1], [0, 0, 1, 1], [], []>} : vector<22x64xbf16>, vector<64x64xbf16>, vector<22x64xf32> -> vector<22x64xf32>
    %c0_5 = arith.constant 0 : index
    %c1 = arith.constant 1 : index
    %c0_6 = arith.constant 0 : index
    %5 = vector.load %arg1[%c0_5, %c1, %c0_6] : memref<1x36x64xbf16, #tpu.memory_space<vmem>>, vector<1x22x64xbf16>
    %6 = vector.shape_cast %5 : vector<1x22x64xbf16> to vector<22x64xbf16>
    %c1_7 = arith.constant 1 : index
    %c0_8 = arith.constant 0 : index
    %c0_9 = arith.constant 0 : index
    %7 = vector.load %arg2[%c1_7, %c0_8, %c0_9] : memref<9x64x64xbf16, #tpu.memory_space<vmem>>, vector<1x64x64xbf16>
    %8 = vector.shape_cast %7 : vector<1x64x64xbf16> to vector<64x64xbf16>
    %cst_10 = arith.constant dense<0.000000e+00> : vector<22x64xf32>
    %9 = tpu.matmul %6, %8, %cst_10 {dimension_numbers = #tpu.dot_dimension_numbers<[1], [0], [0], [1], [0, 0, 1, 1], [], []>} : vector<22x64xbf16>, vector<64x64xbf16>, vector<22x64xf32> -> vector<22x64xf32>
    %10 = arith.addf %4, %9 : vector<22x64xf32>
    %c0_11 = arith.constant 0 : index
    %c2 = arith.constant 2 : index
    %c0_12 = arith.constant 0 : index
    %11 = vector.load %arg1[%c0_11, %c2, %c0_12] : memref<1x36x64xbf16, #tpu.memory_space<vmem>>, vector<1x22x64xbf16>
    %12 = vector.shape_cast %11 : vector<1x22x64xbf16> to vector<22x64xbf16>
    %c2_13 = arith.constant 2 : index
    %c0_14 = arith.constant 0 : index
    %c0_15 = arith.constant 0 : index
    %13 = vector.load %arg2[%c2_13, %c0_14, %c0_15] : memref<9x64x64xbf16, #tpu.memory_space<vmem>>, vector<1x64x64xbf16>
    %14 = vector.shape_cast %13 : vector<1x64x64xbf16> to vector<64x64xbf16>
    %cst_16 = arith.constant dense<0.000000e+00> : vector<22x64xf32>
    %15 = tpu.matmul %12, %14, %cst_16 {dimension_numbers = #tpu.dot_dimension_numbers<[1], [0], [0], [1], [0, 0, 1, 1], [], []>} : vector<22x64xbf16>, vector<64x64xbf16>, vector<22x64xf32> -> vector<22x64xf32>
    %16 = arith.addf %10, %15 : vector<22x64xf32>
    %c0_17 = arith.constant 0 : index
    %c6 = arith.constant 6 : index
    %c0_18 = arith.constant 0 : index
    %17 = vector.load %arg1[%c0_17, %c6, %c0_18] : memref<1x36x64xbf16, #tpu.memory_space<vmem>>, vector<1x22x64xbf16>
    %18 = vector.shape_cast %17 : vector<1x22x64xbf16> to vector<22x64xbf16>
    %c3 = arith.constant 3 : index
    %c0_19 = arith.constant 0 : index
    %c0_20 = arith.constant 0 : index
    %19 = vector.load %arg2[%c3, %c0_19, %c0_20] : memref<9x64x64xbf16, #tpu.memory_space<vmem>>, vector<1x64x64xbf16>
    %20 = vector.shape_cast %19 : vector<1x64x64xbf16> to vector<64x64xbf16>
    %cst_21 = arith.constant dense<0.000000e+00> : vector<22x64xf32>
    %21 = tpu.matmul %18, %20, %cst_21 {dimension_numbers = #tpu.dot_dimension_numbers<[1], [0], [0], [1], [0, 0, 1, 1], [], []>} : vector<22x64xbf16>, vector<64x64xbf16>, vector<22x64xf32> -> vector<22x64xf32>
    %22 = arith.addf %16, %21 : vector<22x64xf32>
    %c0_22 = arith.constant 0 : index
    %c7 = arith.constant 7 : index
    %c0_23 = arith.constant 0 : index
    %23 = vector.load %arg1[%c0_22, %c7, %c0_23] : memref<1x36x64xbf16, #tpu.memory_space<vmem>>, vector<1x22x64xbf16>
    %24 = vector.shape_cast %23 : vector<1x22x64xbf16> to vector<22x64xbf16>
    %c4 = arith.constant 4 : index
    %c0_24 = arith.constant 0 : index
    %c0_25 = arith.constant 0 : index
    %25 = vector.load %arg2[%c4, %c0_24, %c0_25] : memref<9x64x64xbf16, #tpu.memory_space<vmem>>, vector<1x64x64xbf16>
    %26 = vector.shape_cast %25 : vector<1x64x64xbf16> to vector<64x64xbf16>
    %cst_26 = arith.constant dense<0.000000e+00> : vector<22x64xf32>
    %27 = tpu.matmul %24, %26, %cst_26 {dimension_numbers = #tpu.dot_dimension_numbers<[1], [0], [0], [1], [0, 0, 1, 1], [], []>} : vector<22x64xbf16>, vector<64x64xbf16>, vector<22x64xf32> -> vector<22x64xf32>
    %28 = arith.addf %22, %27 : vector<22x64xf32>
    %c0_27 = arith.constant 0 : index
    %c8 = arith.constant 8 : index
    %c0_28 = arith.constant 0 : index
    %29 = vector.load %arg1[%c0_27, %c8, %c0_28] : memref<1x36x64xbf16, #tpu.memory_space<vmem>>, vector<1x22x64xbf16>
    %30 = vector.shape_cast %29 : vector<1x22x64xbf16> to vector<22x64xbf16>
    %c5 = arith.constant 5 : index
    %c0_29 = arith.constant 0 : index
    %c0_30 = arith.constant 0 : index
    %31 = vector.load %arg2[%c5, %c0_29, %c0_30] : memref<9x64x64xbf16, #tpu.memory_space<vmem>>, vector<1x64x64xbf16>
    %32 = vector.shape_cast %31 : vector<1x64x64xbf16> to vector<64x64xbf16>
    %cst_31 = arith.constant dense<0.000000e+00> : vector<22x64xf32>
    %33 = tpu.matmul %30, %32, %cst_31 {dimension_numbers = #tpu.dot_dimension_numbers<[1], [0], [0], [1], [0, 0, 1, 1], [], []>} : vector<22x64xbf16>, vector<64x64xbf16>, vector<22x64xf32> -> vector<22x64xf32>
    %34 = arith.addf %28, %33 : vector<22x64xf32>
    %c0_32 = arith.constant 0 : index
    %c12 = arith.constant 12 : index
    %c0_33 = arith.constant 0 : index
    %35 = vector.load %arg1[%c0_32, %c12, %c0_33] : memref<1x36x64xbf16, #tpu.memory_space<vmem>>, vector<1x22x64xbf16>
    %36 = vector.shape_cast %35 : vector<1x22x64xbf16> to vector<22x64xbf16>
    %c6_34 = arith.constant 6 : index
    %c0_35 = arith.constant 0 : index
    %c0_36 = arith.constant 0 : index
    %37 = vector.load %arg2[%c6_34, %c0_35, %c0_36] : memref<9x64x64xbf16, #tpu.memory_space<vmem>>, vector<1x64x64xbf16>
    %38 = vector.shape_cast %37 : vector<1x64x64xbf16> to vector<64x64xbf16>
    %cst_37 = arith.constant dense<0.000000e+00> : vector<22x64xf32>
    %39 = tpu.matmul %36, %38, %cst_37 {dimension_numbers = #tpu.dot_dimension_numbers<[1], [0], [0], [1], [0, 0, 1, 1], [], []>} : vector<22x64xbf16>, vector<64x64xbf16>, vector<22x64xf32> -> vector<22x64xf32>
    %40 = arith.addf %34, %39 : vector<22x64xf32>
    %c0_38 = arith.constant 0 : index
    %c13 = arith.constant 13 : index
    %c0_39 = arith.constant 0 : index
    %41 = vector.load %arg1[%c0_38, %c13, %c0_39] : memref<1x36x64xbf16, #tpu.memory_space<vmem>>, vector<1x22x64xbf16>
    %42 = vector.shape_cast %41 : vector<1x22x64xbf16> to vector<22x64xbf16>
    %c7_40 = arith.constant 7 : index
    %c0_41 = arith.constant 0 : index
    %c0_42 = arith.constant 0 : index
    %43 = vector.load %arg2[%c7_40, %c0_41, %c0_42] : memref<9x64x64xbf16, #tpu.memory_space<vmem>>, vector<1x64x64xbf16>
    %44 = vector.shape_cast %43 : vector<1x64x64xbf16> to vector<64x64xbf16>
    %cst_43 = arith.constant dense<0.000000e+00> : vector<22x64xf32>
    %45 = tpu.matmul %42, %44, %cst_43 {dimension_numbers = #tpu.dot_dimension_numbers<[1], [0], [0], [1], [0, 0, 1, 1], [], []>} : vector<22x64xbf16>, vector<64x64xbf16>, vector<22x64xf32> -> vector<22x64xf32>
    %46 = arith.addf %40, %45 : vector<22x64xf32>
    %c0_44 = arith.constant 0 : index
    %c14 = arith.constant 14 : index
    %c0_45 = arith.constant 0 : index
    %47 = vector.load %arg1[%c0_44, %c14, %c0_45] : memref<1x36x64xbf16, #tpu.memory_space<vmem>>, vector<1x22x64xbf16>
    %48 = vector.shape_cast %47 : vector<1x22x64xbf16> to vector<22x64xbf16>
    %c8_46 = arith.constant 8 : index
    %c0_47 = arith.constant 0 : index
    %c0_48 = arith.constant 0 : index
    %49 = vector.load %arg2[%c8_46, %c0_47, %c0_48] : memref<9x64x64xbf16, #tpu.memory_space<vmem>>, vector<1x64x64xbf16>
    %50 = vector.shape_cast %49 : vector<1x64x64xbf16> to vector<64x64xbf16>
    %cst_49 = arith.constant dense<0.000000e+00> : vector<22x64xf32>
    %51 = tpu.matmul %48, %50, %cst_49 {dimension_numbers = #tpu.dot_dimension_numbers<[1], [0], [0], [1], [0, 0, 1, 1], [], []>} : vector<22x64xbf16>, vector<64x64xbf16>, vector<22x64xf32> -> vector<22x64xf32>
    %52 = arith.addf %46, %51 : vector<22x64xf32>
    %c0_50 = arith.constant 0 : index
    %c0_51 = arith.constant 0 : index
    %53 = vector.load %arg3[%c0_50, %c0_51] : memref<1x64xf32, #tpu.memory_space<vmem>>, vector<1x64xf32>
    %54 = vector.broadcast %53 : vector<1x64xf32> to vector<22x64xf32>
    %55 = arith.addf %52, %54 : vector<22x64xf32>
    %c0_52 = arith.constant 0 : index
    %c0_53 = arith.constant 0 : index
    %c0_54 = arith.constant 0 : index
    %56 = vector.load %arg4[%c0_52, %c0_53, %c0_54] : memref<1x22x64xf32, #tpu.memory_space<vmem>>, vector<1x22x64xf32>
    %57 = vector.shape_cast %56 : vector<1x22x64xf32> to vector<22x64xf32>
    %58 = vector.shape_cast %55 : vector<22x64xf32> to vector<1x22x64xf32>
    tpu.vector_store %arg4[%c0_52, %c0_53, %c0_54], %58 {strides = array<i32>} : memref<1x22x64xf32, #tpu.memory_space<vmem>>, vector<1x22x64xf32>,
    return
  }
  func.func @transform_0(%arg0: i32) -> (i32, i32, i32) {
    %c0_i32 = arith.constant 0 : i32
    %c0_i32_0 = arith.constant 0 : i32
    %c0_i32_1 = arith.constant 0 : i32
    return %arg0, %c0_i32, %c0_i32_0 : i32, i32, i32
  }
  func.func @transform_1(%arg0: i32) -> (i32, i32, i32) {
    %c0_i32 = arith.constant 0 : i32
    %c0_i32_0 = arith.constant 0 : i32
    %c0_i32_1 = arith.constant 0 : i32
    %c0_i32_2 = arith.constant 0 : i32
    return %c0_i32, %c0_i32_0, %c0_i32_1 : i32, i32, i32
  }
  func.func @transform_2(%arg0: i32) -> (i32, i32) {
    %c0_i32 = arith.constant 0 : i32
    %c0_i32_0 = arith.constant 0 : i32
    %c0_i32_1 = arith.constant 0 : i32
    return %c0_i32, %c0_i32_0 : i32, i32
  }
  func.func @transform_3(%arg0: i32) -> (i32, i32, i32) {
    %c0_i32 = arith.constant 0 : i32
    %c0_i32_0 = arith.constant 0 : i32
    %c0_i32_1 = arith.constant 0 : i32
    return %arg0, %c0_i32, %c0_i32_0 : i32, i32, i32
  }
}

module attributes {stable_mosaic.version = 11 : i64} {
  func.func @_conv3x3_kernel(%arg0: i32, %arg1: memref<1x16x64xbf16, #tpu.memory_space<vmem>>, %arg2: memref<9x64x64xbf16, #tpu.memory_space<vmem>>, %arg3: memref<1x64xf32, #tpu.memory_space<vmem>>, %arg4: memref<1x6x64xf32, #tpu.memory_space<vmem>>) attributes {dimension_semantics = [#tpu.dimension_semantics<parallel>], iteration_bounds = array<i64: 2>, scalar_prefetch = 0 : i64, scratch_operands = 0 : i64, tpu.core_type = #tpu.core_type<tc>, window_params = [{transform_indices = @transform_0, window_bounds = array<i64: 1, 16, 64>}, {pipeline_mode = #tpu.pipeline_mode<synchronous>, transform_indices = @transform_1, window_bounds = array<i64: 9, 64, 64>}, {pipeline_mode = #tpu.pipeline_mode<synchronous>, transform_indices = @transform_2, window_bounds = array<i64: 1, 64>}, {transform_indices = @transform_3, window_bounds = array<i64: 1, 6, 64>}]} {
    %c0 = arith.constant 0 : index
    %c0_0 = arith.constant 0 : index
    %c0_1 = arith.constant 0 : index
    %0 = vector.load %arg1[%c0, %c0_0, %c0_1] : memref<1x16x64xbf16, #tpu.memory_space<vmem>>, vector<1x6x64xbf16>
    %1 = vector.shape_cast %0 : vector<1x6x64xbf16> to vector<6x64xbf16>
    %c0_2 = arith.constant 0 : index
    %c0_3 = arith.constant 0 : index
    %c0_4 = arith.constant 0 : index
    %2 = vector.load %arg2[%c0_2, %c0_3, %c0_4] : memref<9x64x64xbf16, #tpu.memory_space<vmem>>, vector<1x64x64xbf16>
    %3 = vector.shape_cast %2 : vector<1x64x64xbf16> to vector<64x64xbf16>
    %cst = arith.constant dense<0.000000e+00> : vector<6x64xf32>
    %4 = tpu.matmul %1, %3, %cst {dimension_numbers = #tpu.dot_dimension_numbers<[1], [0], [0], [1], [0, 0, 1, 1], [], []>} : vector<6x64xbf16>, vector<64x64xbf16>, vector<6x64xf32> -> vector<6x64xf32>
    %c0_5 = arith.constant 0 : index
    %c1 = arith.constant 1 : index
    %c0_6 = arith.constant 0 : index
    %5 = vector.load %arg1[%c0_5, %c1, %c0_6] : memref<1x16x64xbf16, #tpu.memory_space<vmem>>, vector<1x6x64xbf16>
    %6 = vector.shape_cast %5 : vector<1x6x64xbf16> to vector<6x64xbf16>
    %c1_7 = arith.constant 1 : index
    %c0_8 = arith.constant 0 : index
    %c0_9 = arith.constant 0 : index
    %7 = vector.load %arg2[%c1_7, %c0_8, %c0_9] : memref<9x64x64xbf16, #tpu.memory_space<vmem>>, vector<1x64x64xbf16>
    %8 = vector.shape_cast %7 : vector<1x64x64xbf16> to vector<64x64xbf16>
    %cst_10 = arith.constant dense<0.000000e+00> : vector<6x64xf32>
    %9 = tpu.matmul %6, %8, %cst_10 {dimension_numbers = #tpu.dot_dimension_numbers<[1], [0], [0], [1], [0, 0, 1, 1], [], []>} : vector<6x64xbf16>, vector<64x64xbf16>, vector<6x64xf32> -> vector<6x64xf32>
    %10 = arith.addf %4, %9 : vector<6x64xf32>
    %c0_11 = arith.constant 0 : index
    %c2 = arith.constant 2 : index
    %c0_12 = arith.constant 0 : index
    %11 = vector.load %arg1[%c0_11, %c2, %c0_12] : memref<1x16x64xbf16, #tpu.memory_space<vmem>>, vector<1x6x64xbf16>
    %12 = vector.shape_cast %11 : vector<1x6x64xbf16> to vector<6x64xbf16>
    %c2_13 = arith.constant 2 : index
    %c0_14 = arith.constant 0 : index
    %c0_15 = arith.constant 0 : index
    %13 = vector.load %arg2[%c2_13, %c0_14, %c0_15] : memref<9x64x64xbf16, #tpu.memory_space<vmem>>, vector<1x64x64xbf16>
    %14 = vector.shape_cast %13 : vector<1x64x64xbf16> to vector<64x64xbf16>
    %cst_16 = arith.constant dense<0.000000e+00> : vector<6x64xf32>
    %15 = tpu.matmul %12, %14, %cst_16 {dimension_numbers = #tpu.dot_dimension_numbers<[1], [0], [0], [1], [0, 0, 1, 1], [], []>} : vector<6x64xbf16>, vector<64x64xbf16>, vector<6x64xf32> -> vector<6x64xf32>
    %16 = arith.addf %10, %15 : vector<6x64xf32>
    %c0_17 = arith.constant 0 : index
    %c4 = arith.constant 4 : index
    %c0_18 = arith.constant 0 : index
    %17 = vector.load %arg1[%c0_17, %c4, %c0_18] : memref<1x16x64xbf16, #tpu.memory_space<vmem>>, vector<1x6x64xbf16>
    %18 = vector.shape_cast %17 : vector<1x6x64xbf16> to vector<6x64xbf16>
    %c3 = arith.constant 3 : index
    %c0_19 = arith.constant 0 : index
    %c0_20 = arith.constant 0 : index
    %19 = vector.load %arg2[%c3, %c0_19, %c0_20] : memref<9x64x64xbf16, #tpu.memory_space<vmem>>, vector<1x64x64xbf16>
    %20 = vector.shape_cast %19 : vector<1x64x64xbf16> to vector<64x64xbf16>
    %cst_21 = arith.constant dense<0.000000e+00> : vector<6x64xf32>
    %21 = tpu.matmul %18, %20, %cst_21 {dimension_numbers = #tpu.dot_dimension_numbers<[1], [0], [0], [1], [0, 0, 1, 1], [], []>} : vector<6x64xbf16>, vector<64x64xbf16>, vector<6x64xf32> -> vector<6x64xf32>
    %22 = arith.addf %16, %21 : vector<6x64xf32>
    %c0_22 = arith.constant 0 : index
    %c5 = arith.constant 5 : index
    %c0_23 = arith.constant 0 : index
    %23 = vector.load %arg1[%c0_22, %c5, %c0_23] : memref<1x16x64xbf16, #tpu.memory_space<vmem>>, vector<1x6x64xbf16>
    %24 = vector.shape_cast %23 : vector<1x6x64xbf16> to vector<6x64xbf16>
    %c4_24 = arith.constant 4 : index
    %c0_25 = arith.constant 0 : index
    %c0_26 = arith.constant 0 : index
    %25 = vector.load %arg2[%c4_24, %c0_25, %c0_26] : memref<9x64x64xbf16, #tpu.memory_space<vmem>>, vector<1x64x64xbf16>
    %26 = vector.shape_cast %25 : vector<1x64x64xbf16> to vector<64x64xbf16>
    %cst_27 = arith.constant dense<0.000000e+00> : vector<6x64xf32>
    %27 = tpu.matmul %24, %26, %cst_27 {dimension_numbers = #tpu.dot_dimension_numbers<[1], [0], [0], [1], [0, 0, 1, 1], [], []>} : vector<6x64xbf16>, vector<64x64xbf16>, vector<6x64xf32> -> vector<6x64xf32>
    %28 = arith.addf %22, %27 : vector<6x64xf32>
    %c0_28 = arith.constant 0 : index
    %c6 = arith.constant 6 : index
    %c0_29 = arith.constant 0 : index
    %29 = vector.load %arg1[%c0_28, %c6, %c0_29] : memref<1x16x64xbf16, #tpu.memory_space<vmem>>, vector<1x6x64xbf16>
    %30 = vector.shape_cast %29 : vector<1x6x64xbf16> to vector<6x64xbf16>
    %c5_30 = arith.constant 5 : index
    %c0_31 = arith.constant 0 : index
    %c0_32 = arith.constant 0 : index
    %31 = vector.load %arg2[%c5_30, %c0_31, %c0_32] : memref<9x64x64xbf16, #tpu.memory_space<vmem>>, vector<1x64x64xbf16>
    %32 = vector.shape_cast %31 : vector<1x64x64xbf16> to vector<64x64xbf16>
    %cst_33 = arith.constant dense<0.000000e+00> : vector<6x64xf32>
    %33 = tpu.matmul %30, %32, %cst_33 {dimension_numbers = #tpu.dot_dimension_numbers<[1], [0], [0], [1], [0, 0, 1, 1], [], []>} : vector<6x64xbf16>, vector<64x64xbf16>, vector<6x64xf32> -> vector<6x64xf32>
    %34 = arith.addf %28, %33 : vector<6x64xf32>
    %c0_34 = arith.constant 0 : index
    %c8 = arith.constant 8 : index
    %c0_35 = arith.constant 0 : index
    %35 = vector.load %arg1[%c0_34, %c8, %c0_35] : memref<1x16x64xbf16, #tpu.memory_space<vmem>>, vector<1x6x64xbf16>
    %36 = vector.shape_cast %35 : vector<1x6x64xbf16> to vector<6x64xbf16>
    %c6_36 = arith.constant 6 : index
    %c0_37 = arith.constant 0 : index
    %c0_38 = arith.constant 0 : index
    %37 = vector.load %arg2[%c6_36, %c0_37, %c0_38] : memref<9x64x64xbf16, #tpu.memory_space<vmem>>, vector<1x64x64xbf16>
    %38 = vector.shape_cast %37 : vector<1x64x64xbf16> to vector<64x64xbf16>
    %cst_39 = arith.constant dense<0.000000e+00> : vector<6x64xf32>
    %39 = tpu.matmul %36, %38, %cst_39 {dimension_numbers = #tpu.dot_dimension_numbers<[1], [0], [0], [1], [0, 0, 1, 1], [], []>} : vector<6x64xbf16>, vector<64x64xbf16>, vector<6x64xf32> -> vector<6x64xf32>
    %40 = arith.addf %34, %39 : vector<6x64xf32>
    %c0_40 = arith.constant 0 : index
    %c9 = arith.constant 9 : index
    %c0_41 = arith.constant 0 : index
    %41 = vector.load %arg1[%c0_40, %c9, %c0_41] : memref<1x16x64xbf16, #tpu.memory_space<vmem>>, vector<1x6x64xbf16>
    %42 = vector.shape_cast %41 : vector<1x6x64xbf16> to vector<6x64xbf16>
    %c7 = arith.constant 7 : index
    %c0_42 = arith.constant 0 : index
    %c0_43 = arith.constant 0 : index
    %43 = vector.load %arg2[%c7, %c0_42, %c0_43] : memref<9x64x64xbf16, #tpu.memory_space<vmem>>, vector<1x64x64xbf16>
    %44 = vector.shape_cast %43 : vector<1x64x64xbf16> to vector<64x64xbf16>
    %cst_44 = arith.constant dense<0.000000e+00> : vector<6x64xf32>
    %45 = tpu.matmul %42, %44, %cst_44 {dimension_numbers = #tpu.dot_dimension_numbers<[1], [0], [0], [1], [0, 0, 1, 1], [], []>} : vector<6x64xbf16>, vector<64x64xbf16>, vector<6x64xf32> -> vector<6x64xf32>
    %46 = arith.addf %40, %45 : vector<6x64xf32>
    %c0_45 = arith.constant 0 : index
    %c10 = arith.constant 10 : index
    %c0_46 = arith.constant 0 : index
    %47 = vector.load %arg1[%c0_45, %c10, %c0_46] : memref<1x16x64xbf16, #tpu.memory_space<vmem>>, vector<1x6x64xbf16>
    %48 = vector.shape_cast %47 : vector<1x6x64xbf16> to vector<6x64xbf16>
    %c8_47 = arith.constant 8 : index
    %c0_48 = arith.constant 0 : index
    %c0_49 = arith.constant 0 : index
    %49 = vector.load %arg2[%c8_47, %c0_48, %c0_49] : memref<9x64x64xbf16, #tpu.memory_space<vmem>>, vector<1x64x64xbf16>
    %50 = vector.shape_cast %49 : vector<1x64x64xbf16> to vector<64x64xbf16>
    %cst_50 = arith.constant dense<0.000000e+00> : vector<6x64xf32>
    %51 = tpu.matmul %48, %50, %cst_50 {dimension_numbers = #tpu.dot_dimension_numbers<[1], [0], [0], [1], [0, 0, 1, 1], [], []>} : vector<6x64xbf16>, vector<64x64xbf16>, vector<6x64xf32> -> vector<6x64xf32>
    %52 = arith.addf %46, %51 : vector<6x64xf32>
    %c0_51 = arith.constant 0 : index
    %c0_52 = arith.constant 0 : index
    %53 = vector.load %arg3[%c0_51, %c0_52] : memref<1x64xf32, #tpu.memory_space<vmem>>, vector<1x64xf32>
    %54 = vector.broadcast %53 : vector<1x64xf32> to vector<6x64xf32>
    %55 = arith.addf %52, %54 : vector<6x64xf32>
    %c0_53 = arith.constant 0 : index
    %c0_54 = arith.constant 0 : index
    %c0_55 = arith.constant 0 : index
    %56 = vector.load %arg4[%c0_53, %c0_54, %c0_55] : memref<1x6x64xf32, #tpu.memory_space<vmem>>, vector<1x6x64xf32>
    %57 = vector.shape_cast %56 : vector<1x6x64xf32> to vector<6x64xf32>
    %58 = vector.shape_cast %55 : vector<6x64xf32> to vector<1x6x64xf32>
    tpu.vector_store %arg4[%c0_53, %c0_54, %c0_55], %58 {strides = array<i32>} : memref<1x6x64xf32, #tpu.memory_space<vmem>>, vector<1x6x64xf32>,
    return
  }
  func.func @transform_0(%arg0: i32) -> (i32, i32, i32) {
    %c0_i32 = arith.constant 0 : i32
    %c0_i32_0 = arith.constant 0 : i32
    %c0_i32_1 = arith.constant 0 : i32
    return %arg0, %c0_i32, %c0_i32_0 : i32, i32, i32
  }
  func.func @transform_1(%arg0: i32) -> (i32, i32, i32) {
    %c0_i32 = arith.constant 0 : i32
    %c0_i32_0 = arith.constant 0 : i32
    %c0_i32_1 = arith.constant 0 : i32
    %c0_i32_2 = arith.constant 0 : i32
    return %c0_i32, %c0_i32_0, %c0_i32_1 : i32, i32, i32
  }
  func.func @transform_2(%arg0: i32) -> (i32, i32) {
    %c0_i32 = arith.constant 0 : i32
    %c0_i32_0 = arith.constant 0 : i32
    %c0_i32_1 = arith.constant 0 : i32
    return %c0_i32, %c0_i32_0 : i32, i32
  }
  func.func @transform_3(%arg0: i32) -> (i32, i32, i32) {
    %c0_i32 = arith.constant 0 : i32
    %c0_i32_0 = arith.constant 0 : i32
    %c0_i32_1 = arith.constant 0 : i32
    return %arg0, %c0_i32, %c0_i32_0 : i32, i32, i32
  }
}

</mosaic_0001>

<llo_original>
// kernel: detector_backbone_with_fpn_forward.8
$region0: #{detector_backbone_with_fpn_forward.8}
  #allocation0 [shape = 'u32[]', space=smem, size = 0x4, offset = 0x4, fixed_abs, tag = 'smem constant byte address 0x4 - core index']
  #allocation1 [shape = 'u32[144,128]{1,0:T(1,128)}', space=vmem, size = 0x12000, scoped, tag = 'internal scratch']
  %s0 = inlined_call_operand.vmem [shape: f32[8,3], index: 0, kind: input, shape index: {}]
  %s1 = inlined_call_operand.vmem [shape: f32[3,64], index: 1, kind: input, shape index: {}]
  %s2 = inlined_call_operand.vmem [shape: f32[1,64], index: 2, kind: input, shape index: {}]
  %s3 = inlined_call_operand.vmem [shape: bf16[8,64], index: 3, kind: output, shape index: {}]
  %s4 = sld [smem:[#allocation0]]
  $region22: #{detector_backbone_with_fpn_forward.8} parent=0
    _
  %s6 = ssub.s32 1, %s4
  %s7 = scalar_select 0, %s6, %s4
  // Predicated region
  $region2: #{detector_backbone_with_fpn_forward.8} parent=0 // pred_check
    _
  $region3: #{detector_backbone_with_fpn_forward.8} parent=0 // pred_check_branch
    %9 = sbr.rel (0) target = $region5
  $region4: #{detector_backbone_with_fpn_forward.8} parent=0 // pred_region
    _
  $region5: #{detector_backbone_with_fpn_forward.8} parent=0 // pred_fallthru
    _
  // Predicated region
  $region6: #{detector_backbone_with_fpn_forward.8} parent=0 // pred_check
    _
  $region7: #{detector_backbone_with_fpn_forward.8} parent=0 // pred_check_branch
    %11 = sbr.rel (0) target = $region9
  $region8: #{detector_backbone_with_fpn_forward.8} parent=0 // pred_region
    _
  $region9: #{detector_backbone_with_fpn_forward.8} parent=0 // pred_fallthru
    _
  // Predicated region
  $region10: #{detector_backbone_with_fpn_forward.8} parent=0 // pred_check
    _
  $region11: #{detector_backbone_with_fpn_forward.8} parent=0 // pred_check_branch
    %13 = sbr.rel (0) target = $region13
  $region12: #{detector_backbone_with_fpn_forward.8} parent=0 // pred_region
    _
  $region13: #{detector_backbone_with_fpn_forward.8} parent=0 // pred_fallthru
    _
  %v14 = vld [vmem:[%s0] sm:$0xff]
  %v15 = vld [vmem:[%s1] sm:$0x7]
  %v16 = vld [vmem:[%s2] sm:$0x1]
  %18 = vset.pattern.permute.xlu0 0
  %19 = vperm.xlu0 %18, %v14
  %v20 = vpop.permute.xlu0 %19
  %v22 = vlaneseq
  %v23 = vshrl.u32 %v22, 7
  %v24 = vsub.s32 0, %v23
  %v25 = vrot.slane %v15, %v24
  %v26 = vmul.f32 %v20, %v25
  %v28 = vlaneseq
  %v29 = vshrl.u32 %v28, 7
  %v30 = vsub.s32 0, %v29
  %v31 = vrot.slane %v16, %v30
  %v33 = vadd.f32 %v31, %v26
  %34 = vset.pattern.permute.xlu0 1
  %35 = vperm.xlu0 %34, %v14
  %v36 = vpop.permute.xlu0 %35
  %v38 = vlaneseq
  %v39 = vshrl.u32 %v38, 7
  %v40 = vsub.s32 1, %v39
  %v41 = vrot.slane %v15, %v40
  %v42 = vmul.f32 %v36, %v41
  %v43 = vadd.f32 %v33, %v42
  %44 = vset.pattern.permute.xlu0 2
  %45 = vperm.xlu0 %44, %v14
  %v46 = vpop.permute.xlu0 %45
  %v48 = vlaneseq
  %v49 = vshrl.u32 %v48, 7
  %v50 = vsub.s32 2, %v49
  %v51 = vrot.slane %v15, %v50
  %v52 = vmul.f32 %v46, %v51
  %v53 = vadd.f32 %v43, %v52
  %v54 = vpack.c.bf16 %v53, %v53
  %vm55 = vcmask 519168
  %56 = vst.msk [vmem:[%s3] sm:$0xf] %vm55, %v54
  // Predicated region
  $region14: #{detector_backbone_with_fpn_forward.8} parent=0 // pred_check
    _
  $region15: #{detector_backbone_with_fpn_forward.8} parent=0 // pred_check_branch
    %58 = sbr.rel (0) target = $region17
  $region16: #{detector_backbone_with_fpn_forward.8} parent=0 // pred_region
    _
  $region17: #{detector_backbone_with_fpn_forward.8} parent=0 // pred_fallthru
    _
  // Predicated region
  $region18: #{detector_backbone_with_fpn_forward.8} parent=0 // pred_check
    _
  $region19: #{detector_backbone_with_fpn_forward.8} parent=0 // pred_check_branch
    %60 = sbr.rel (0) target = $region21
  $region20: #{detector_backbone_with_fpn_forward.8} parent=0 // pred_region
    _
  $region21: #{detector_backbone_with_fpn_forward.8} parent=0 // pred_fallthru
    _

// kernel: detector_backbone_with_fpn_forward.9
$region0: #{detector_backbone_with_fpn_forward.9}
  #allocation0 [shape = 'u32[]', space=smem, size = 0x4, offset = 0x4, fixed_abs, tag = 'smem constant byte address 0x4 - core index']
  #allocation1 [shape = 'u32[144,128]{1,0:T(1,128)}', space=vmem, size = 0x12000, scoped, tag = 'internal scratch']
  %s0 = inlined_call_operand.vmem [shape: f32[32,3], index: 0, kind: input, shape index: {}]
  %s1 = inlined_call_operand.vmem [shape: f32[3,64], index: 1, kind: input, shape index: {}]
  %s2 = inlined_call_operand.vmem [shape: f32[1,64], index: 2, kind: input, shape index: {}]
  %s3 = inlined_call_operand.vmem [shape: bf16[32,64], index: 3, kind: output, shape index: {}]
  %s4 = sld [smem:[#allocation0]]
  $region22: #{detector_backbone_with_fpn_forward.9} parent=0
    _
  %s6 = ssub.s32 1, %s4
  %s7 = scalar_select 0, %s6, %s4
  // Predicated region
  $region2: #{detector_backbone_with_fpn_forward.9} parent=0 // pred_check
    _
  $region3: #{detector_backbone_with_fpn_forward.9} parent=0 // pred_check_branch
    %9 = sbr.rel (0) target = $region5
  $region4: #{detector_backbone_with_fpn_forward.9} parent=0 // pred_region
    _
  $region5: #{detector_backbone_with_fpn_forward.9} parent=0 // pred_fallthru
    _
  // Predicated region
  $region6: #{detector_backbone_with_fpn_forward.9} parent=0 // pred_check
    _
  $region7: #{detector_backbone_with_fpn_forward.9} parent=0 // pred_check_branch
    %11 = sbr.rel (0) target = $region9
  $region8: #{detector_backbone_with_fpn_forward.9} parent=0 // pred_region
    _
  $region9: #{detector_backbone_with_fpn_forward.9} parent=0 // pred_fallthru
    _
  // Predicated region
  $region10: #{detector_backbone_with_fpn_forward.9} parent=0 // pred_check
    _
  $region11: #{detector_backbone_with_fpn_forward.9} parent=0 // pred_check_branch
    %13 = sbr.rel (0) target = $region13
  $region12: #{detector_backbone_with_fpn_forward.9} parent=0 // pred_region
    _
  $region13: #{detector_backbone_with_fpn_forward.9} parent=0 // pred_fallthru
    _
  %v14 = vld [vmem:[%s0] sm:$0xff]
  %v15 = vld [vmem:[%s0 + $0x8] sm:$0xff]
  %v16 = vld [vmem:[%s0 + $0x10] sm:$0xff]
  %v17 = vld [vmem:[%s0 + $0x18] sm:$0xff]
  %v18 = vld [vmem:[%s1] sm:$0x7]
  %v19 = vld [vmem:[%s2] sm:$0x1]
  %21 = vset.pattern.permute.xlu0 0
  %22 = vperm.xlu0 %21, %v14
  %v23 = vpop.permute.xlu0 %22
  %26 = vset.pattern.permute.xlu0 0
  %27 = vperm.xlu0 %26, %v15
  %v28 = vpop.permute.xlu0 %27
  %31 = vset.pattern.permute.xlu0 0
  %32 = vperm.xlu0 %31, %v16
  %v33 = vpop.permute.xlu0 %32
  %36 = vset.pattern.permute.xlu0 0
  %37 = vperm.xlu0 %36, %v17
  %v38 = vpop.permute.xlu0 %37
  %v40 = vlaneseq
  %v41 = vshrl.u32 %v40, 7
  %v42 = vsub.s32 0, %v41
  %v43 = vrot.slane %v18, %v42
  %v44 = vmul.f32 %v23, %v43
  %v45 = vmul.f32 %v28, %v43
  %v46 = vmul.f32 %v33, %v43
  %v47 = vmul.f32 %v38, %v43
  %v49 = vlaneseq
  %v50 = vshrl.u32 %v49, 7
  %v51 = vsub.s32 0, %v50
  %v52 = vrot.slane %v19, %v51
  %v54 = vadd.f32 %v52, %v44
  %v55 = vadd.f32 %v52, %v45
  %v56 = vadd.f32 %v52, %v46
  %v57 = vadd.f32 %v52, %v47
  %58 = vset.pattern.permute.xlu0 1
  %59 = vperm.xlu0 %58, %v14
  %v60 = vpop.permute.xlu0 %59
  %62 = vset.pattern.permute.xlu0 1
  %63 = vperm.xlu0 %62, %v15
  %v64 = vpop.permute.xlu0 %63
  %66 = vset.pattern.permute.xlu0 1
  %67 = vperm.xlu0 %66, %v16
  %v68 = vpop.permute.xlu0 %67
  %70 = vset.pattern.permute.xlu0 1
  %71 = vperm.xlu0 %70, %v17
  %v72 = vpop.permute.xlu0 %71
  %v74 = vlaneseq
  %v75 = vshrl.u32 %v74, 7
  %v76 = vsub.s32 1, %v75
  %v77 = vrot.slane %v18, %v76
  %v78 = vmul.f32 %v60, %v77
  %v79 = vmul.f32 %v64, %v77
  %v80 = vmul.f32 %v68, %v77
  %v81 = vmul.f32 %v72, %v77
  %v82 = vadd.f32 %v54, %v78
  %v83 = vadd.f32 %v55, %v79
  %v84 = vadd.f32 %v56, %v80
  %v85 = vadd.f32 %v57, %v81
  %86 = vset.pattern.permute.xlu0 2
  %87 = vperm.xlu0 %86, %v14
  %v88 = vpop.permute.xlu0 %87
  %90 = vset.pattern.permute.xlu0 2
  %91 = vperm.xlu0 %90, %v15
  %v92 = vpop.permute.xlu0 %91
  %94 = vset.pattern.permute.xlu0 2
  %95 = vperm.xlu0 %94, %v16
  %v96 = vpop.permute.xlu0 %95
  %98 = vset.pattern.permute.xlu0 2
  %99 = vperm.xlu0 %98, %v17
  %v100 = vpop.permute.xlu0 %99
  %v102 = vlaneseq
  %v103 = vshrl.u32 %v102, 7
  %v104 = vsub.s32 2, %v103
  %v105 = vrot.slane %v18, %v104
  %v106 = vmul.f32 %v88, %v105
  %v107 = vmul.f32 %v92, %v105
  %v108 = vmul.f32 %v96, %v105
  %v109 = vmul.f32 %v100, %v105
  %v110 = vadd.f32 %v82, %v106
  %v111 = vadd.f32 %v83, %v107
  %v112 = vadd.f32 %v84, %v108
  %v113 = vadd.f32 %v85, %v109
  %v114 = vpack.c.bf16 %v111, %v110
  %v115 = vpack.c.bf16 %v113, %v112
  %v118 = vunpack.c.l.b16 %v114
  %v119 = vunpack.c.h.b16 %v114
  %v120 = vunpack.c.l.b16 %v115
  %v121 = vunpack.c.h.b16 %v115
  %v122 = vpack.c.b16 %v118, %v118
  %v123 = vpack.c.b16 %v119, %v119
  %v124 = vpack.c.b16 %v120, %v120
  %v125 = vpack.c.b16 %v121, %v121
  %vm130 = vcmask 519168
  %131 = vst.msk [vmem:[%s3] sm:$0xf] %vm130, %v122
  %132 = vst.msk [vmem:[%s3 + $0x4] sm:$0xf] %vm130, %v123
  %133 = vst.msk [vmem:[%s3 + $0x8] sm:$0xf] %vm130, %v124
  %134 = vst.msk [vmem:[%s3 + $0xc] sm:$0xf] %vm130, %v125
  // Predicated region
  $region14: #{detector_backbone_with_fpn_forward.9} parent=0 // pred_check
    _
  $region15: #{detector_backbone_with_fpn_forward.9} parent=0 // pred_check_branch
    %136 = sbr.rel (0) target = $region17
  $region16: #{detector_backbone_with_fpn_forward.9} parent=0 // pred_region
    _
  $region17: #{detector_backbone_with_fpn_forward.9} parent=0 // pred_fallthru
    _
  // Predicated region
  $region18: #{detector_backbone_with_fpn_forward.9} parent=0 // pred_check
    _
  $region19: #{detector_backbone_with_fpn_forward.9} parent=0 // pred_check_branch
    %138 = sbr.rel (0) target = $region21
  $region20: #{detector_backbone_with_fpn_forward.9} parent=0 // pred_region
    _
  $region21: #{detector_backbone_with_fpn_forward.9} parent=0 // pred_fallthru
    _

// kernel: detector_backbone_with_fpn_forward.12
$region0: #{detector_backbone_with_fpn_forward.12}
  #allocation0 [shape = 'u32[]', space=smem, size = 0x4, offset = 0x4, fixed_abs, tag = 'smem constant byte address 0x4 - core index']
  #allocation1 [shape = 'u32[144,128]{1,0:T(1,128)}', space=vmem, size = 0x12000, scoped, tag = 'internal scratch']
  %s0 = inlined_call_operand.vmem [shape: bf16[4,1,2,64], index: 0, kind: input, shape index: {}]
  %s1 = inlined_call_operand.vmem [shape: bf16[4,2,2,128], index: 1, kind: input, shape index: {}]
  %s2 = inlined_call_operand.vmem [shape: bf16[4,2,2,128], index: 2, kind: output, shape index: {}]
  %s3 = sld [smem:[#allocation0]]
  $region18: #{detector_backbone_with_fpn_forward.12} parent=0
    _
  %s5 = ssub.s32 1, %s3
  %s6 = scalar_select 0, %s5, %s3
  // Predicated region
  $region2: #{detector_backbone_with_fpn_forward.12} parent=0 // pred_check
    _
  $region3: #{detector_backbone_with_fpn_forward.12} parent=0 // pred_check_branch
    %8 = sbr.rel (0) target = $region5
  $region4: #{detector_backbone_with_fpn_forward.12} parent=0 // pred_region
    _
  $region5: #{detector_backbone_with_fpn_forward.12} parent=0 // pred_fallthru
    _
  // Predicated region
  $region6: #{detector_backbone_with_fpn_forward.12} parent=0 // pred_check
    _
  $region7: #{detector_backbone_with_fpn_forward.12} parent=0 // pred_check_branch
    %10 = sbr.rel (0) target = $region9
  $region8: #{detector_backbone_with_fpn_forward.12} parent=0 // pred_region
    _
  $region9: #{detector_backbone_with_fpn_forward.12} parent=0 // pred_fallthru
    _
  %v11 = vld [vmem:[%s0] sm:$0x1]
  %v12 = vld [vmem:[%s0 + $0x1] sm:$0x1]
  %v13 = vld [vmem:[%s0 + $0x2] sm:$0x1]
  %v14 = vld [vmem:[%s0 + $0x3] sm:$0x1]
  %v20 = vunpack.c.l.s4 1966171168
  %v21 = vunpack.c.0.s8 %v20
  %v22 = vlaneseq
  %v23 = vshrl.u32 %v22, 7
  %v24 = vsub.s32 %v21, %v23
  %v25 = vrot.slane %v11, %v24
  %v27 = vunpack.c.l.s4 1966171168
  %v28 = vunpack.c.0.s8 %v27
  %v29 = vlaneseq
  %v30 = vshrl.u32 %v29, 7
  %v31 = vsub.s32 %v28, %v30
  %v32 = vrot.slane %v25, %v31
  %v34 = vunpack.c.l.s4 1966171168
  %v35 = vunpack.c.0.s8 %v34
  %v36 = vlaneseq
  %v37 = vshrl.u32 %v36, 7
  %v38 = vsub.s32 %v35, %v37
  %v39 = vrot.slane %v12, %v38
  %v41 = vunpack.c.l.s4 1966171168
  %v42 = vunpack.c.0.s8 %v41
  %v43 = vlaneseq
  %v44 = vshrl.u32 %v43, 7
  %v45 = vsub.s32 %v42, %v44
  %v46 = vrot.slane %v39, %v45
  %v48 = vunpack.c.l.s4 1966171168
  %v49 = vunpack.c.0.s8 %v48
  %v50 = vlaneseq
  %v51 = vshrl.u32 %v50, 7
  %v52 = vsub.s32 %v49, %v51
  %v53 = vrot.slane %v13, %v52
  %v55 = vunpack.c.l.s4 1966171168
  %v56 = vunpack.c.0.s8 %v55
  %v57 = vlaneseq
  %v58 = vshrl.u32 %v57, 7
  %v59 = vsub.s32 %v56, %v58
  %v60 = vrot.slane %v53, %v59
  %v62 = vunpack.c.l.s4 1966171168
  %v63 = vunpack.c.0.s8 %v62
  %v64 = vlaneseq
  %v65 = vshrl.u32 %v64, 7
  %v66 = vsub.s32 %v63, %v65
  %v67 = vrot.slane %v14, %v66
  %v69 = vunpack.c.l.s4 1966171168
  %v70 = vunpack.c.0.s8 %v69
  %v71 = vlaneseq
  %v72 = vshrl.u32 %v71, 7
  %v73 = vsub.s32 %v70, %v72
  %v74 = vrot.slane %v67, %v73
  %75 = vrot.lane.b32.xlu0 %v32, 64
  %v76 = vpop.permute.xlu0 %75
  %77 = vrot.lane.b32.xlu0 %v46, 64
  %v78 = vpop.permute.xlu0 %77
  %79 = vrot.lane.b32.xlu0 %v60, 64
  %v80 = vpop.permute.xlu0 %79
  %81 = vrot.lane.b32.xlu0 %v74, 64
  %v82 = vpop.permute.xlu0 %81
  %vm83 = vcmask 523264
  %v86 = vsel %vm83, %v11, %v76
  %v90 = vsel %vm83, %v12, %v78
  %v94 = vsel %vm83, %v13, %v80
  %v98 = vsel %vm83, %v14, %v82
  %v100 = vld [vmem:[%s1] sm:$0x1]
  %v101 = vld [vmem:[%s1 + $0x1] sm:$0x1]
  %v102 = vld [vmem:[%s1 + $0x2] sm:$0x1]
  %v103 = vld [vmem:[%s1 + $0x3] sm:$0x1]
  %v104 = vld [vmem:[%s1 + $0x4] sm:$0x1]
  %v105 = vld [vmem:[%s1 + $0x5] sm:$0x1]
  %v106 = vld [vmem:[%s1 + $0x6] sm:$0x1]
  %v107 = vld [vmem:[%s1 + $0x7] sm:$0x1]
  %v108 = vadd.bf16 %v100, %v86
  %v109 = vadd.bf16 %v101, %v86
  %v110 = vadd.bf16 %v102, %v90
  %v111 = vadd.bf16 %v103, %v90
  %v112 = vadd.bf16 %v104, %v94
  %v113 = vadd.bf16 %v105, %v94
  %v114 = vadd.bf16 %v106, %v98
  %v115 = vadd.bf16 %v107, %v98
  %116 = vst [vmem:[%s2] sm:$0x1] %v108
  %117 = vst [vmem:[%s2 + $0x1] sm:$0x1] %v109
  %118 = vst [vmem:[%s2 + $0x2] sm:$0x1] %v110
  %119 = vst [vmem:[%s2 + $0x3] sm:$0x1] %v111
  %120 = vst [vmem:[%s2 + $0x4] sm:$0x1] %v112
  %121 = vst [vmem:[%s2 + $0x5] sm:$0x1] %v113
  %122 = vst [vmem:[%s2 + $0x6] sm:$0x1] %v114
  %123 = vst [vmem:[%s2 + $0x7] sm:$0x1] %v115
  // Predicated region
  $region10: #{detector_backbone_with_fpn_forward.12} parent=0 // pred_check
    _
  $region11: #{detector_backbone_with_fpn_forward.12} parent=0 // pred_check_branch
    %125 = sbr.rel (0) target = $region13
  $region12: #{detector_backbone_with_fpn_forward.12} parent=0 // pred_region
    _
  $region13: #{detector_backbone_with_fpn_forward.12} parent=0 // pred_fallthru
    _
  // Predicated region
  $region14: #{detector_backbone_with_fpn_forward.12} parent=0 // pred_check
    _
  $region15: #{detector_backbone_with_fpn_forward.12} parent=0 // pred_check_branch
    %127 = sbr.rel (0) target = $region17
  $region16: #{detector_backbone_with_fpn_forward.12} parent=0 // pred_region
    _
  $region17: #{detector_backbone_with_fpn_forward.12} parent=0 // pred_fallthru
    _

// kernel: detector_backbone_with_fpn_forward.14
$region0: #{detector_backbone_with_fpn_forward.14}
  #allocation0 [shape = 'u32[]', space=smem, size = 0x4, offset = 0x4, fixed_abs, tag = 'smem constant byte address 0x4 - core index']
  #allocation1 [shape = 'u32[144,128]{1,0:T(1,128)}', space=vmem, size = 0x12000, scoped, tag = 'internal scratch']
  %s0 = inlined_call_operand.vmem [shape: bf16[8,1,4,64], index: 0, kind: input, shape index: {}]
  %s1 = inlined_call_operand.vmem [shape: bf16[8,2,4,128], index: 1, kind: input, shape index: {}]
  %s2 = inlined_call_operand.vmem [shape: bf16[8,2,4,128], index: 2, kind: output, shape index: {}]
  %s3 = sld [smem:[#allocation0]]
  $region18: #{detector_backbone_with_fpn_forward.14} parent=0
    _
  %s5 = ssub.s32 1, %s3
  %s6 = scalar_select 0, %s5, %s3
  // Predicated region
  $region2: #{detector_backbone_with_fpn_forward.14} parent=0 // pred_check
    _
  $region3: #{detector_backbone_with_fpn_forward.14} parent=0 // pred_check_branch
    %8 = sbr.rel (0) target = $region5
  $region4: #{detector_backbone_with_fpn_forward.14} parent=0 // pred_region
    _
  $region5: #{detector_backbone_with_fpn_forward.14} parent=0 // pred_fallthru
    _
  // Predicated region
  $region6: #{detector_backbone_with_fpn_forward.14} parent=0 // pred_check
    _
  $region7: #{detector_backbone_with_fpn_forward.14} parent=0 // pred_check_branch
    %10 = sbr.rel (0) target = $region9
  $region8: #{detector_backbone_with_fpn_forward.14} parent=0 // pred_region
    _
  $region9: #{detector_backbone_with_fpn_forward.14} parent=0 // pred_fallthru
    _
  %v11 = vld [vmem:[%s0] sm:$0x3]
  %v12 = vld [vmem:[%s0 + $0x2] sm:$0x3]
  %v13 = vld [vmem:[%s0 + $0x4] sm:$0x3]
  %v14 = vld [vmem:[%s0 + $0x6] sm:$0x3]
  %v15 = vld [vmem:[%s0 + $0x8] sm:$0x3]
  %v16 = vld [vmem:[%s0 + $0xa] sm:$0x3]
  %v17 = vld [vmem:[%s0 + $0xc] sm:$0x3]
  %v18 = vld [vmem:[%s0 + $0xe] sm:$0x3]
  %v28 = vunpack.c.l.s4 1983009808
  %v29 = vunpack.c.0.s8 %v28
  %v30 = vlaneseq
  %v31 = vshrl.u32 %v30, 7
  %v32 = vsub.s32 %v29, %v31
  %v33 = vrot.slane %v11, %v32
  %v35 = vunpack.c.l.s4 1983009808
  %v36 = vunpack.c.0.s8 %v35
  %v37 = vlaneseq
  %v38 = vshrl.u32 %v37, 7
  %v39 = vsub.s32 %v36, %v38
  %v40 = vrot.slane %v12, %v39
  %v42 = vunpack.c.l.s4 1983009808
  %v43 = vunpack.c.0.s8 %v42
  %v44 = vlaneseq
  %v45 = vshrl.u32 %v44, 7
  %v46 = vsub.s32 %v43, %v45
  %v47 = vrot.slane %v13, %v46
  %v49 = vunpack.c.l.s4 1983009808
  %v50 = vunpack.c.0.s8 %v49
  %v51 = vlaneseq
  %v52 = vshrl.u32 %v51, 7
  %v53 = vsub.s32 %v50, %v52
  %v54 = vrot.slane %v14, %v53
  %v56 = vunpack.c.l.s4 1983009808
  %v57 = vunpack.c.0.s8 %v56
  %v58 = vlaneseq
  %v59 = vshrl.u32 %v58, 7
  %v60 = vsub.s32 %v57, %v59
  %v61 = vrot.slane %v15, %v60
  %v63 = vunpack.c.l.s4 1983009808
  %v64 = vunpack.c.0.s8 %v63
  %v65 = vlaneseq
  %v66 = vshrl.u32 %v65, 7
  %v67 = vsub.s32 %v64, %v66
  %v68 = vrot.slane %v16, %v67
  %v70 = vunpack.c.l.s4 1983009808
  %v71 = vunpack.c.0.s8 %v70
  %v72 = vlaneseq
  %v73 = vshrl.u32 %v72, 7
  %v74 = vsub.s32 %v71, %v73
  %v75 = vrot.slane %v17, %v74
  %v77 = vunpack.c.l.s4 1983009808
  %v78 = vunpack.c.0.s8 %v77
  %v79 = vlaneseq
  %v80 = vshrl.u32 %v79, 7
  %v81 = vsub.s32 %v78, %v80
  %v82 = vrot.slane %v18, %v81
  %83 = vrot.lane.b32.xlu0 %v33, 64
  %v84 = vpop.permute.xlu0 %83
  %85 = vrot.lane.b32.xlu0 %v40, 64
  %v86 = vpop.permute.xlu0 %85
  %87 = vrot.lane.b32.xlu0 %v47, 64
  %v88 = vpop.permute.xlu0 %87
  %89 = vrot.lane.b32.xlu0 %v54, 64
  %v90 = vpop.permute.xlu0 %89
  %91 = vrot.lane.b32.xlu0 %v61, 64
  %v92 = vpop.permute.xlu0 %91
  %93 = vrot.lane.b32.xlu0 %v68, 64
  %v94 = vpop.permute.xlu0 %93
  %95 = vrot.lane.b32.xlu0 %v75, 64
  %v96 = vpop.permute.xlu0 %95
  %97 = vrot.lane.b32.xlu0 %v82, 64
  %v98 = vpop.permute.xlu0 %97
  %vm99 = vcmask 523264
  %v102 = vsel %vm99, %v11, %v84
  %v106 = vsel %vm99, %v12, %v86
  %v110 = vsel %vm99, %v13, %v88
  %v114 = vsel %vm99, %v14, %v90
  %v118 = vsel %vm99, %v15, %v92
  %v122 = vsel %vm99, %v16, %v94
  %v126 = vsel %vm99, %v17, %v96
  %v130 = vsel %vm99, %v18, %v98
  %v132 = vld [vmem:[%s1] sm:$0x3]
  %v133 = vld [vmem:[%s1 + $0x2] sm:$0x3]
  %v134 = vld [vmem:[%s1 + $0x4] sm:$0x3]
  %v135 = vld [vmem:[%s1 + $0x6] sm:$0x3]
  %v136 = vld [vmem:[%s1 + $0x8] sm:$0x3]
  %v137 = vld [vmem:[%s1 + $0xa] sm:$0x3]
  %v138 = vld [vmem:[%s1 + $0xc] sm:$0x3]
  %v139 = vld [vmem:[%s1 + $0xe] sm:$0x3]
  %v140 = vld [vmem:[%s1 + $0x10] sm:$0x3]
  %v141 = vld [vmem:[%s1 + $0x12] sm:$0x3]
  %v142 = vld [vmem:[%s1 + $0x14] sm:$0x3]
  %v143 = vld [vmem:[%s1 + $0x16] sm:$0x3]
  %v144 = vld [vmem:[%s1 + $0x18] sm:$0x3]
  %v145 = vld [vmem:[%s1 + $0x1a] sm:$0x3]
  %v146 = vld [vmem:[%s1 + $0x1c] sm:$0x3]
  %v147 = vld [vmem:[%s1 + $0x1e] sm:$0x3]
  %v148 = vadd.bf16 %v132, %v102
  %v149 = vadd.bf16 %v133, %v102
  %v150 = vadd.bf16 %v134, %v106
  %v151 = vadd.bf16 %v135, %v106
  %v152 = vadd.bf16 %v136, %v110
  %v153 = vadd.bf16 %v137, %v110
  %v154 = vadd.bf16 %v138, %v114
  %v155 = vadd.bf16 %v139, %v114
  %v156 = vadd.bf16 %v140, %v118
  %v157 = vadd.bf16 %v141, %v118
  %v158 = vadd.bf16 %v142, %v122
  %v159 = vadd.bf16 %v143, %v122
  %v160 = vadd.bf16 %v144, %v126
  %v161 = vadd.bf16 %v145, %v126
  %v162 = vadd.bf16 %v146, %v130
  %v163 = vadd.bf16 %v147, %v130
  %164 = vst [vmem:[%s2] sm:$0x3] %v148
  %165 = vst [vmem:[%s2 + $0x2] sm:$0x3] %v149
  %166 = vst [vmem:[%s2 + $0x4] sm:$0x3] %v150
  %167 = vst [vmem:[%s2 + $0x6] sm:$0x3] %v151
  %168 = vst [vmem:[%s2 + $0x8] sm:$0x3] %v152
  %169 = vst [vmem:[%s2 + $0xa] sm:$0x3] %v153
  %170 = vst [vmem:[%s2 + $0xc] sm:$0x3] %v154
  %171 = vst [vmem:[%s2 + $0xe] sm:$0x3] %v155
  %172 = vst [vmem:[%s2 + $0x10] sm:$0x3] %v156
  %173 = vst [vmem:[%s2 + $0x12] sm:$0x3] %v157
  %174 = vst [vmem:[%s2 + $0x14] sm:$0x3] %v158
  %175 = vst [vmem:[%s2 + $0x16] sm:$0x3] %v159
  %176 = vst [vmem:[%s2 + $0x18] sm:$0x3] %v160
  %177 = vst [vmem:[%s2 + $0x1a] sm:$0x3] %v161
  %178 = vst [vmem:[%s2 + $0x1c] sm:$0x3] %v162
  %179 = vst [vmem:[%s2 + $0x1e] sm:$0x3] %v163
  // Predicated region
  $region10: #{detector_backbone_with_fpn_forward.14} parent=0 // pred_check
    _
  $region11: #{detector_backbone_with_fpn_forward.14} parent=0 // pred_check_branch
    %181 = sbr.rel (0) target = $region13
  $region12: #{detector_backbone_with_fpn_forward.14} parent=0 // pred_region
    _
  $region13: #{detector_backbone_with_fpn_forward.14} parent=0 // pred_fallthru
    _
  // Predicated region
  $region14: #{detector_backbone_with_fpn_forward.14} parent=0 // pred_check
    _
  $region15: #{detector_backbone_with_fpn_forward.14} parent=0 // pred_check_branch
    %183 = sbr.rel (0) target = $region17
  $region16: #{detector_backbone_with_fpn_forward.14} parent=0 // pred_region
    _
  $region17: #{detector_backbone_with_fpn_forward.14} parent=0 // pred_fallthru
    _

// kernel: detector_backbone_with_fpn_forward.10
$region0: #{detector_backbone_with_fpn_forward.10}
  #allocation0 [shape = 'u32[]', space=smem, size = 0x4, offset = 0x4, fixed_abs, tag = 'smem constant byte address 0x4 - core index']
  #allocation1 [shape = 'u32[144,128]{1,0:T(1,128)}', space=vmem, size = 0x12000, scoped, tag = 'internal scratch']
  %s0 = inlined_call_operand.vmem [shape: f32[128,3], index: 0, kind: input, shape index: {}]
  %s1 = inlined_call_operand.vmem [shape: f32[3,64], index: 1, kind: input, shape index: {}]
  %s2 = inlined_call_operand.vmem [shape: f32[1,64], index: 2, kind: input, shape index: {}]
  %s3 = inlined_call_operand.vmem [shape: bf16[128,64], index: 3, kind: output, shape index: {}]
  %s4 = sld [smem:[#allocation0]]
  $region22: #{detector_backbone_with_fpn_forward.10} parent=0
    _
  %s6 = ssub.s32 1, %s4
  %s7 = scalar_select 0, %s6, %s4
  // Predicated region
  $region2: #{detector_backbone_with_fpn_forward.10} parent=0 // pred_check
    _
  $region3: #{detector_backbone_with_fpn_forward.10} parent=0 // pred_check_branch
    %9 = sbr.rel (0) target = $region5
  $region4: #{detector_backbone_with_fpn_forward.10} parent=0 // pred_region
    _
  $region5: #{detector_backbone_with_fpn_forward.10} parent=0 // pred_fallthru
    _
  // Predicated region
  $region6: #{detector_backbone_with_fpn_forward.10} parent=0 // pred_check
    _
  $region7: #{detector_backbone_with_fpn_forward.10} parent=0 // pred_check_branch
    %11 = sbr.rel (0) target = $region9
  $region8: #{detector_backbone_with_fpn_forward.10} parent=0 // pred_region
    _
  $region9: #{detector_backbone_with_fpn_forward.10} parent=0 // pred_fallthru
    _
  // Predicated region
  $region10: #{detector_backbone_with_fpn_forward.10} parent=0 // pred_check
    _
  $region11: #{detector_backbone_with_fpn_forward.10} parent=0 // pred_check_branch
    %13 = sbr.rel (0) target = $region13
  $region12: #{detector_backbone_with_fpn_forward.10} parent=0 // pred_region
    _
  $region13: #{detector_backbone_with_fpn_forward.10} parent=0 // pred_fallthru
    _
  %v14 = vld [vmem:[%s0] sm:$0xff]
  %v15 = vld [vmem:[%s0 + $0x8] sm:$0xff]
  %v16 = vld [vmem:[%s0 + $0x10] sm:$0xff]
  %v17 = vld [vmem:[%s0 + $0x18] sm:$0xff]
  %v18 = vld [vmem:[%s0 + $0x20] sm:$0xff]
  %v19 = vld [vmem:[%s0 + $0x28] sm:$0xff]
  %v20 = vld [vmem:[%s0 + $0x30] sm:$0xff]
  %v21 = vld [vmem:[%s0 + $0x38] sm:$0xff]
  %v22 = vld [vmem:[%s0 + $0x40] sm:$0xff]
  %v23 = vld [vmem:[%s0 + $0x48] sm:$0xff]
  %v24 = vld [vmem:[%s0 + $0x50] sm:$0xff]
  %v25 = vld [vmem:[%s0 + $0x58] sm:$0xff]
  %v26 = vld [vmem:[%s0 + $0x60] sm:$0xff]
  %v27 = vld [vmem:[%s0 + $0x68] sm:$0xff]
  %v28 = vld [vmem:[%s0 + $0x70] sm:$0xff]
  %v29 = vld [vmem:[%s0 + $0x78] sm:$0xff]
  %v30 = vld [vmem:[%s1] sm:$0x7]
  %v31 = vld [vmem:[%s2] sm:$0x1]
  %33 = vset.pattern.permute.xlu0 0
  %34 = vperm.xlu0 %33, %v14
  %v35 = vpop.permute.xlu0 %34
  %38 = vset.pattern.permute.xlu0 0
  %39 = vperm.xlu0 %38, %v15
  %v40 = vpop.permute.xlu0 %39
  %43 = vset.pattern.permute.xlu0 0
  %44 = vperm.xlu0 %43, %v16
  %v45 = vpop.permute.xlu0 %44
  %48 = vset.pattern.permute.xlu0 0
  %49 = vperm.xlu0 %48, %v17
  %v50 = vpop.permute.xlu0 %49
  %53 = vset.pattern.permute.xlu0 0
  %54 = vperm.xlu0 %53, %v18
  %v55 = vpop.permute.xlu0 %54
  %58 = vset.pattern.permute.xlu0 0
  %59 = vperm.xlu0 %58, %v19
  %v60 = vpop.permute.xlu0 %59
  %63 = vset.pattern.permute.xlu0 0
  %64 = vperm.xlu0 %63, %v20
  %v65 = vpop.permute.xlu0 %64
  %68 = vset.pattern.permute.xlu0 0
  %69 = vperm.xlu0 %68, %v21
  %v70 = vpop.permute.xlu0 %69
  %73 = vset.pattern.permute.xlu0 0
  %74 = vperm.xlu0 %73, %v22
  %v75 = vpop.permute.xlu0 %74
  %78 = vset.pattern.permute.xlu0 0
  %79 = vperm.xlu0 %78, %v23
  %v80 = vpop.permute.xlu0 %79
  %83 = vset.pattern.permute.xlu0 0
  %84 = vperm.xlu0 %83, %v24
  %v85 = vpop.permute.xlu0 %84
  %88 = vset.pattern.permute.xlu0 0
  %89 = vperm.xlu0 %88, %v25
  %v90 = vpop.permute.xlu0 %89
  %93 = vset.pattern.permute.xlu0 0
  %94 = vperm.xlu0 %93, %v26
  %v95 = vpop.permute.xlu0 %94
  %98 = vset.pattern.permute.xlu0 0
  %99 = vperm.xlu0 %98, %v27
  %v100 = vpop.permute.xlu0 %99
  %103 = vset.pattern.permute.xlu0 0
  %104 = vperm.xlu0 %103, %v28
  %v105 = vpop.permute.xlu0 %104
  %108 = vset.pattern.permute.xlu0 0
  %109 = vperm.xlu0 %108, %v29
  %v110 = vpop.permute.xlu0 %109
  %v112 = vlaneseq
  %v113 = vshrl.u32 %v112, 7
  %v114 = vsub.s32 0, %v113
  %v115 = vrot.slane %v30, %v114
  %v116 = vmul.f32 %v35, %v115
  %v117 = vmul.f32 %v40, %v115
  %v118 = vmul.f32 %v45, %v115
  %v119 = vmul.f32 %v50, %v115
  %v120 = vmul.f32 %v55, %v115
  %v121 = vmul.f32 %v60, %v115
  %v122 = vmul.f32 %v65, %v115
  %v123 = vmul.f32 %v70, %v115
  %v124 = vmul.f32 %v75, %v115
  %v125 = vmul.f32 %v80, %v115
  %v126 = vmul.f32 %v85, %v115
  %v127 = vmul.f32 %v90, %v115
  %v128 = vmul.f32 %v95, %v115
  %v129 = vmul.f32 %v100, %v115
  %v130 = vmul.f32 %v105, %v115
  %v131 = vmul.f32 %v110, %v115
  %v133 = vlaneseq
  %v134 = vshrl.u32 %v133, 7
  %v135 = vsub.s32 0, %v134
  %v136 = vrot.slane %v31, %v135
  %v138 = vadd.f32 %v136, %v116
  %v139 = vadd.f32 %v136, %v117
  %v140 = vadd.f32 %v136, %v118
  %v141 = vadd.f32 %v136, %v119
  %v142 = vadd.f32 %v136, %v120
  %v143 = vadd.f32 %v136, %v121
  %v144 = vadd.f32 %v136, %v122
  %v145 = vadd.f32 %v136, %v123
  %v146 = vadd.f32 %v136, %v124
  %v147 = vadd.f32 %v136, %v125
  %v148 = vadd.f32 %v136, %v126
  %v149 = vadd.f32 %v136, %v127
  %v150 = vadd.f32 %v136, %v128
  %v151 = vadd.f32 %v136, %v129
  %v152 = vadd.f32 %v136, %v130
  %v153 = vadd.f32 %v136, %v131
  %154 = vset.pattern.permute.xlu0 1
  %155 = vperm.xlu0 %154, %v14
  %v156 = vpop.permute.xlu0 %155
  %158 = vset.pattern.permute.xlu0 1
  %159 = vperm.xlu0 %158, %v15
  %v160 = vpop.permute.xlu0 %159
  %162 = vset.pattern.permute.xlu0 1
  %163 = vperm.xlu0 %162, %v16
  %v164 = vpop.permute.xlu0 %163
  %166 = vset.pattern.permute.xlu0 1
  %167 = vperm.xlu0 %166, %v17
  %v168 = vpop.permute.xlu0 %167
  %170 = vset.pattern.permute.xlu0 1
  %171 = vperm.xlu0 %170, %v18
  %v172 = vpop.permute.xlu0 %171
  %174 = vset.pattern.permute.xlu0 1
  %175 = vperm.xlu0 %174, %v19
  %v176 = vpop.permute.xlu0 %175
  %178 = vset.pattern.permute.xlu0 1
  %179 = vperm.xlu0 %178, %v20
  %v180 = vpop.permute.xlu0 %179
  %182 = vset.pattern.permute.xlu0 1
  %183 = vperm.xlu0 %182, %v21
  %v184 = vpop.permute.xlu0 %183
  %186 = vset.pattern.permute.xlu0 1
  %187 = vperm.xlu0 %186, %v22
  %v188 = vpop.permute.xlu0 %187
  %190 = vset.pattern.permute.xlu0 1
  %191 = vperm.xlu0 %190, %v23
  %v192 = vpop.permute.xlu0 %191
  %194 = vset.pattern.permute.xlu0 1
  %195 = vperm.xlu0 %194, %v24
  %v196 = vpop.permute.xlu0 %195
  %198 = vset.pattern.permute.xlu0 1
  %199 = vperm.xlu0 %198, %v25
  %v200 = vpop.permute.xlu0 %199
  %202 = vset.pattern.permute.xlu0 1
  %203 = vperm.xlu0 %202, %v26
  %v204 = vpop.permute.xlu0 %203
  %206 = vset.pattern.permute.xlu0 1
  %207 = vperm.xlu0 %206, %v27
  %v208 = vpop.permute.xlu0 %207
  %210 = vset.pattern.permute.xlu0 1
  %211 = vperm.xlu0 %210, %v28
  %v212 = vpop.permute.xlu0 %211
  %214 = vset.pattern.permute.xlu0 1
  %215 = vperm.xlu0 %214, %v29
  %v216 = vpop.permute.xlu0 %215
  %v218 = vlaneseq
  %v219 = vshrl.u32 %v218, 7
  %v220 = vsub.s32 1, %v219
  %v221 = vrot.slane %v30, %v220
  %v222 = vmul.f32 %v156, %v221
  %v223 = vmul.f32 %v160, %v221
  %v224 = vmul.f32 %v164, %v221
  %v225 = vmul.f32 %v168, %v221
  %v226 = vmul.f32 %v172, %v221
  %v227 = vmul.f32 %v176, %v221
  %v228 = vmul.f32 %v180, %v221
  %v229 = vmul.f32 %v184, %v221
  %v230 = vmul.f32 %v188, %v221
  %v231 = vmul.f32 %v192, %v221
  %v232 = vmul.f32 %v196, %v221
  %v233 = vmul.f32 %v200, %v221
  %v234 = vmul.f32 %v204, %v221
  %v235 = vmul.f32 %v208, %v221
  %v236 = vmul.f32 %v212, %v221
  %v237 = vmul.f32 %v216, %v221
  %v238 = vadd.f32 %v138, %v222
  %v239 = vadd.f32 %v139, %v223
  %v240 = vadd.f32 %v140, %v224
  %v241 = vadd.f32 %v141, %v225
  %v242 = vadd.f32 %v142, %v226
  %v243 = vadd.f32 %v143, %v227
  %v244 = vadd.f32 %v144, %v228
  %v245 = vadd.f32 %v145, %v229
  %v246 = vadd.f32 %v146, %v230
  %v247 = vadd.f32 %v147, %v231
  %v248 = vadd.f32 %v148, %v232
  %v249 = vadd.f32 %v149, %v233
  %v250 = vadd.f32 %v150, %v234
  %v251 = vadd.f32 %v151, %v235
  %v252 = vadd.f32 %v152, %v236
  %v253 = vadd.f32 %v153, %v237
  %254 = vset.pattern.permute.xlu0 2
  %255 = vperm.xlu0 %254, %v14
  %v256 = vpop.permute.xlu0 %255
  %258 = vset.pattern.permute.xlu0 2
  %259 = vperm.xlu0 %258, %v15
  %v260 = vpop.permute.xlu0 %259
  %262 = vset.pattern.permute.xlu0 2
  %263 = vperm.xlu0 %262, %v16
  %v264 = vpop.permute.xlu0 %263
  %266 = vset.pattern.permute.xlu0 2
  %267 = vperm.xlu0 %266, %v17
  %v268 = vpop.permute.xlu0 %267
  %270 = vset.pattern.permute.xlu0 2
  %271 = vperm.xlu0 %270, %v18
  %v272 = vpop.permute.xlu0 %271
  %274 = vset.pattern.permute.xlu0 2
  %275 = vperm.xlu0 %274, %v19
  %v276 = vpop.permute.xlu0 %275
  %278 = vset.pattern.permute.xlu0 2
  %279 = vperm.xlu0 %278, %v20
  %v280 = vpop.permute.xlu0 %279
  %282 = vset.pattern.permute.xlu0 2
  %283 = vperm.xlu0 %282, %v21
  %v284 = vpop.permute.xlu0 %283
  %286 = vset.pattern.permute.xlu0 2
  %287 = vperm.xlu0 %286, %v22
  %v288 = vpop.permute.xlu0 %287
  %290 = vset.pattern.permute.xlu0 2
  %291 = vperm.xlu0 %290, %v23
  %v292 = vpop.permute.xlu0 %291
  %294 = vset.pattern.permute.xlu0 2
  %295 = vperm.xlu0 %294, %v24
  %v296 = vpop.permute.xlu0 %295
  %298 = vset.pattern.permute.xlu0 2
  %299 = vperm.xlu0 %298, %v25
  %v300 = vpop.permute.xlu0 %299
  %302 = vset.pattern.permute.xlu0 2
  %303 = vperm.xlu0 %302, %v26
  %v304 = vpop.permute.xlu0 %303
  %306 = vset.pattern.permute.xlu0 2
  %307 = vperm.xlu0 %306, %v27
  %v308 = vpop.permute.xlu0 %307
  %310 = vset.pattern.permute.xlu0 2
  %311 = vperm.xlu0 %310, %v28
  %v312 = vpop.permute.xlu0 %311
  %314 = vset.pattern.permute.xlu0 2
  %315 = vperm.xlu0 %314, %v29
  %v316 = vpop.permute.xlu0 %315
  %v318 = vlaneseq
  %v319 = vshrl.u32 %v318, 7
  %v320 = vsub.s32 2, %v319
  %v321 = vrot.slane %v30, %v320
  %v322 = vmul.f32 %v256, %v321
  %v323 = vmul.f32 %v260, %v321
  %v324 = vmul.f32 %v264, %v321
  %v325 = vmul.f32 %v268, %v321
  %v326 = vmul.f32 %v272, %v321
  %v327 = vmul.f32 %v276, %v321
  %v328 = vmul.f32 %v280, %v321
  %v329 = vmul.f32 %v284, %v321
  %v330 = vmul.f32 %v288, %v321
  %v331 = vmul.f32 %v292, %v321
  %v332 = vmul.f32 %v296, %v321
  %v333 = vmul.f32 %v300, %v321
  %v334 = vmul.f32 %v304, %v321
  %v335 = vmul.f32 %v308, %v321
  %v336 = vmul.f32 %v312, %v321
  %v337 = vmul.f32 %v316, %v321
  %v338 = vadd.f32 %v238, %v322
  %v339 = vadd.f32 %v239, %v323
  %v340 = vadd.f32 %v240, %v324
  %v341 = vadd.f32 %v241, %v325
  %v342 = vadd.f32 %v242, %v326
  %v343 = vadd.f32 %v243, %v327
  %v344 = vadd.f32 %v244, %v328
  %v345 = vadd.f32 %v245, %v329
  %v346 = vadd.f32 %v246, %v330
  %v347 = vadd.f32 %v247, %v331
  %v348 = vadd.f32 %v248, %v332
  %v349 = vadd.f32 %v249, %v333
  %v350 = vadd.f32 %v250, %v334
  %v351 = vadd.f32 %v251, %v335
  %v352 = vadd.f32 %v252, %v336
  %v353 = vadd.f32 %v253, %v337
  %v354 = vpack.c.bf16 %v339, %v338
  %v355 = vpack.c.bf16 %v341, %v340
  %v356 = vpack.c.bf16 %v343, %v342
  %v357 = vpack.c.bf16 %v345, %v344
  %v358 = vpack.c.bf16 %v347, %v346
  %v359 = vpack.c.bf16 %v349, %v348
  %v360 = vpack.c.bf16 %v351, %v350
  %v361 = vpack.c.bf16 %v353, %v352
  %v370 = vunpack.c.l.b16 %v354
  %v371 = vunpack.c.h.b16 %v354
  %v372 = vunpack.c.l.b16 %v355
  %v373 = vunpack.c.h.b16 %v355
  %v374 = vunpack.c.l.b16 %v356
  %v375 = vunpack.c.h.b16 %v356
  %v376 = vunpack.c.l.b16 %v357
  %v377 = vunpack.c.h.b16 %v357
  %v378 = vunpack.c.l.b16 %v358
  %v379 = vunpack.c.h.b16 %v358
  %v380 = vunpack.c.l.b16 %v359
  %v381 = vunpack.c.h.b16 %v359
  %v382 = vunpack.c.l.b16 %v360
  %v383 = vunpack.c.h.b16 %v360
  %v384 = vunpack.c.l.b16 %v361
  %v385 = vunpack.c.h.b16 %v361
  %v386 = vpack.c.b16 %v370, %v370
  %v387 = vpack.c.b16 %v371, %v371
  %v388 = vpack.c.b16 %v372, %v372
  %v389 = vpack.c.b16 %v373, %v373
  %v390 = vpack.c.b16 %v374, %v374
  %v391 = vpack.c.b16 %v375, %v375
  %v392 = vpack.c.b16 %v376, %v376
  %v393 = vpack.c.b16 %v377, %v377
  %v394 = vpack.c.b16 %v378, %v378
  %v395 = vpack.c.b16 %v379, %v379
  %v396 = vpack.c.b16 %v380, %v380
  %v397 = vpack.c.b16 %v381, %v381
  %v398 = vpack.c.b16 %v382, %v382
  %v399 = vpack.c.b16 %v383, %v383
  %v400 = vpack.c.b16 %v384, %v384
  %v401 = vpack.c.b16 %v385, %v385
  %vm418 = vcmask 519168
  %419 = vst.msk [vmem:[%s3] sm:$0xf] %vm418, %v386
  %420 = vst.msk [vmem:[%s3 + $0x4] sm:$0xf] %vm418, %v387
  %421 = vst.msk [vmem:[%s3 + $0x8] sm:$0xf] %vm418, %v388
  %422 = vst.msk [vmem:[%s3 + $0xc] sm:$0xf] %vm418, %v389
  %423 = vst.msk [vmem:[%s3 + $0x10] sm:$0xf] %vm418, %v390
  %424 = vst.msk [vmem:[%s3 + $0x14] sm:$0xf] %vm418, %v391
  %425 = vst.msk [vmem:[%s3 + $0x18] sm:$0xf] %vm418, %v392
  %426 = vst.msk [vmem:[%s3 + $0x1c] sm:$0xf] %vm418, %v393
  %427 = vst.msk [vmem:[%s3 + $0x20] sm:$0xf] %vm418, %v394
  %428 = vst.msk [vmem:[%s3 + $0x24] sm:$0xf] %vm418, %v395
  %429 = vst.msk [vmem:[%s3 + $0x28] sm:$0xf] %vm418, %v396
  %430 = vst.msk [vmem:[%s3 + $0x2c] sm:$0xf] %vm418, %v397
  %431 = vst.msk [vmem:[%s3 + $0x30] sm:$0xf] %vm418, %v398
  %432 = vst.msk [vmem:[%s3 + $0x34] sm:$0xf] %vm418, %v399
  %433 = vst.msk [vmem:[%s3 + $0x38] sm:$0xf] %vm418, %v400
  %434 = vst.msk [vmem:[%s3 + $0x3c] sm:$0xf] %vm418, %v401
  // Predicated region
  $region14: #{detector_backbone_with_fpn_forward.10} parent=0 // pred_check
    _
  $region15: #{detector_backbone_with_fpn_forward.10} parent=0 // pred_check_branch
    %436 = sbr.rel (0) target = $region17
  $region16: #{detector_backbone_with_fpn_forward.10} parent=0 // pred_region
    _
  $region17: #{detector_backbone_with_fpn_forward.10} parent=0 // pred_fallthru
    _
  // Predicated region
  $region18: #{detector_backbone_with_fpn_forward.10} parent=0 // pred_check
    _
  $region19: #{detector_backbone_with_fpn_forward.10} parent=0 // pred_check_branch
    %438 = sbr.rel (0) target = $region21
  $region20: #{detector_backbone_with_fpn_forward.10} parent=0 // pred_region
    _
  $region21: #{detector_backbone_with_fpn_forward.10} parent=0 // pred_fallthru
    _

// kernel: detector_backbone_with_fpn_forward.13
$region0: #{detector_backbone_with_fpn_forward.13}
  #allocation0 [shape = 'u32[]', space=smem, size = 0x4, offset = 0x4, fixed_abs, tag = 'smem constant byte address 0x4 - core index']
  #allocation1 [shape = 'u32[144,128]{1,0:T(1,128)}', space=vmem, size = 0x12000, scoped, tag = 'internal scratch']
  %s0 = inlined_call_operand.vmem [shape: bf16[2,36,64], index: 0, kind: input, shape index: {}]
  %s1 = inlined_call_operand.vmem [shape: bf16[9,64,64], index: 1, kind: input, shape index: {}]
  %s2 = inlined_call_operand.vmem [shape: f32[1,64], index: 2, kind: input, shape index: {}]
  %s3 = inlined_call_operand.vmem [shape: f32[2,22,64], index: 3, kind: output, shape index: {}]
  %s4 = sld [smem:[#allocation0]]
  $region45: #{detector_backbone_with_fpn_forward.13} parent=0
    _
  %s6 = ssub.s32 1, %s4
  %s7 = scalar_select 0, %s6, %s4
  loop: start=0, step=1, limit=4
  $region2: #{detector_backbone_with_fpn_forward.13} parent=0 // loop_pre_header
    _
  $region3: #{detector_backbone_with_fpn_forward.13} parent=0 // loop_header
    %s9 = sphi 0, %s13
    %p10 = scmp.ge.s32.totalorder %s9, 4
    %s19 = sphi 0, %s21
    %s22 = sphi 0, %s19
    %s23 = sphi 0, %s22
    %s39 = sphi 0, %s23
    %s43 = sphi 0, %s43
    %s45 = sphi 0, %s43
    %s46 = sphi 0, %s45
    %s60 = sphi 0, %s46
    %s64 = sphi 0, %s64
    %s66 = sphi 0, %s64
    %s67 = sphi 0, %s66
    %s81 = sphi 0, %s67
    %s87 = sphi 0, %s89
    %s90 = sphi 0, %s87
    %s91 = sphi 0, %s90
    %s107 = sphi 0, %s91
  $region4: #{detector_backbone_with_fpn_forward.13} parent=0 // loop_header_branch
    %12 = sbr.rel (%p10) target = $region8
  $region5: #{detector_backbone_with_fpn_forward.13} parent=0 // loop_body
    %s14 = ssub.s32 %s9, 1
    %s15 = ssub.s32 %s9, 2
    %s16 = sadd.s32 %s9, 1
    %s17 = ssub.s32 %s9, %s16
    %p18 = scmp.eq.s32.totalorder %s17, 0
    %s20 = sadd.s32 %s19, 1
    %s21 = scalar_select %p18, %s19, %s20
    %p24 = pneg %p18
    %p25 = scmp.eq.s32.totalorder %s9, 1
    %p26 = por %p24, %p25
    %p27 = scmp.ne.s32.totalorder %s19, %s22
    %p28 = scmp.eq.s32.totalorder %s9, 0
    %p29 = por %p27, %p28
    %p30 = scmp.ne.s32.totalorder %s19, %s22
    %p31 = scmp.eq.s32.totalorder %s14, 1
    %p32 = por %p30, %p31
    %p33 = scmp.ne.s32.totalorder %s22, %s23
    %p34 = scmp.eq.s32.totalorder %s14, 0
    %p35 = por %p33, %p34
    %p36 = scmp.ne.s32.totalorder %s22, %s23
    %p37 = scmp.eq.s32.totalorder %s15, 1
    %p38 = por %p36, %p37
    %p40 = scmp.ne.s32.totalorder %s23, %s39
    %p41 = scmp.eq.s32.totalorder %s15, 0
    %p42 = por %p40, %p41
    %s44 = sadd.s32 %s43, 1
    %p47 = scmp.eq.s32.totalorder %s9, 1
    %p48 = scmp.ne.s32.totalorder %s43, %s45
    %p49 = scmp.eq.s32.totalorder %s9, 0
    %p50 = por %p48, %p49
    %p51 = scmp.ne.s32.totalorder %s43, %s45
    %p52 = scmp.eq.s32.totalorder %s14, 1
    %p53 = por %p51, %p52
    %p54 = scmp.ne.s32.totalorder %s45, %s46
    %p55 = scmp.eq.s32.totalorder %s14, 0
    %p56 = por %p54, %p55
    %p57 = scmp.ne.s32.totalorder %s45, %s46
    %p58 = scmp.eq.s32.totalorder %s15, 1
    %p59 = por %p57, %p58
    %p61 = scmp.ne.s32.totalorder %s46, %s60
    %p62 = scmp.eq.s32.totalorder %s15, 0
    %p63 = por %p61, %p62
    %s65 = sadd.s32 %s64, 1
    %p68 = scmp.eq.s32.totalorder %s9, 1
    %p69 = scmp.ne.s32.totalorder %s64, %s66
    %p70 = scmp.eq.s32.totalorder %s9, 0
    %p71 = por %p69, %p70
    %p72 = scmp.ne.s32.totalorder %s64, %s66
    %p73 = scmp.eq.s32.totalorder %s14, 1
    %p74 = por %p72, %p73
    %p75 = scmp.ne.s32.totalorder %s66, %s67
    %p76 = scmp.eq.s32.totalorder %s14, 0
    %p77 = por %p75, %p76
    %p78 = scmp.ne.s32.totalorder %s66, %s67
    %p79 = scmp.eq.s32.totalorder %s15, 1
    %p80 = por %p78, %p79
    %p82 = scmp.ne.s32.totalorder %s67, %s81
    %p83 = scmp.eq.s32.totalorder %s15, 0
    %p84 = por %p82, %p83
    %s85 = ssub.s32 %s9, %s16
    %p86 = scmp.eq.s32.totalorder %s85, 0
    %s88 = sadd.s32 %s87, 1
    %s89 = scalar_select %p86, %s87, %s88
    %p92 = pneg %p86
    %p93 = scmp.eq.s32.totalorder %s9, 1
    %p94 = por %p92, %p93
    %p95 = scmp.ne.s32.totalorder %s87, %s90
    %p96 = scmp.eq.s32.totalorder %s9, 0
    %p97 = por %p95, %p96
    %p98 = scmp.ne.s32.totalorder %s87, %s90
    %p99 = scmp.eq.s32.totalorder %s14, 1
    %p100 = por %p98, %p99
    %p101 = scmp.ne.s32.totalorder %s90, %s91
    %p102 = scmp.eq.s32.totalorder %s14, 0
    %p103 = por %p101, %p102
    %p104 = scmp.ne.s32.totalorder %s90, %s91
    %p105 = scmp.eq.s32.totalorder %s15, 1
    %p106 = por %p104, %p105
    %p108 = scmp.ne.s32.totalorder %s91, %s107
    %p109 = scmp.eq.s32.totalorder %s15, 0
    %p110 = por %p108, %p109
    %p111 = scmp.le.s32.totalorder 1, %s9
    %p112 = scmp.lt.s32.totalorder %s9, 3
    %p113 = pnand %p111, %p112
    %p114 = pneg %p113
    // Predicated region
    $region9: #{detector_backbone_with_fpn_forward.13} parent=5 // pred_check
      _
    $region10: #{detector_backbone_with_fpn_forward.13} parent=5 // pred_check_branch
      %116 = sbr.rel (%p113) target = $region12
    $region11: #{detector_backbone_with_fpn_forward.13} parent=5 // pred_region
      %s117 = ssub.s32 %s9, 1
      // Predicated region
      $region13: #{detector_backbone_with_fpn_forward.13} parent=11 // pred_check
        %p118 = pneg %p56
      $region14: #{detector_backbone_with_fpn_forward.13} parent=11 // pred_check_branch
        %120 = sbr.rel (%p118) target = $region16
      $region15: #{detector_backbone_with_fpn_forward.13} parent=11 // pred_region
        _
      $region16: #{detector_backbone_with_fpn_forward.13} parent=11 // pred_fallthru
        _
      // Predicated region
      $region17: #{detector_backbone_with_fpn_forward.13} parent=11 // pred_check
        %p121 = pneg %p77
      $region18: #{detector_backbone_with_fpn_forward.13} parent=11 // pred_check_branch
        %123 = sbr.rel (%p121) target = $region20
      $region19: #{detector_backbone_with_fpn_forward.13} parent=11 // pred_region
        _
      $region20: #{detector_backbone_with_fpn_forward.13} parent=11 // pred_fallthru
        _
    $region12: #{detector_backbone_with_fpn_forward.13} parent=5 // pred_fallthru
      _
    %p124 = scmp.lt.s32.totalorder %s9, 2
    // Predicated region
    $region21: #{detector_backbone_with_fpn_forward.13} parent=5 // pred_check
      %p125 = pneg %p124
    $region22: #{detector_backbone_with_fpn_forward.13} parent=5 // pred_check_branch
      %127 = sbr.rel (%p125) target = $region24
    $region23: #{detector_backbone_with_fpn_forward.13} parent=5 // pred_region
      // Predicated region
      $region25: #{detector_backbone_with_fpn_forward.13} parent=23 // pred_check
        %p128 = pneg %p29
      $region26: #{detector_backbone_with_fpn_forward.13} parent=23 // pred_check_branch
        %130 = sbr.rel (%p128) target = $region28
      $region27: #{detector_backbone_with_fpn_forward.13} parent=23 // pred_region
        %p131 = scmp.lt.s32.totalorder %s9, 1
        %s132 = scalar_select %p131, %s9, 1
        %s133 = smul.addr %s132, 5
        %s134 = smul.addr %s133, 4
        %s135 = scalar_lea.vmem %s0, %s134
      $region28: #{detector_backbone_with_fpn_forward.13} parent=23 // pred_fallthru
        _
    $region24: #{detector_backbone_with_fpn_forward.13} parent=5 // pred_fallthru
      _
    %p136 = scmp.le.s32.totalorder 1, %s9
    %p137 = scmp.lt.s32.totalorder %s9, 3
    %p138 = pnand %p136, %p137
    %p139 = pneg %p138
    // Predicated region
    $region29: #{detector_backbone_with_fpn_forward.13} parent=5 // pred_check
      _
    $region30: #{detector_backbone_with_fpn_forward.13} parent=5 // pred_check_branch
      %141 = sbr.rel (%p138) target = $region32
    $region31: #{detector_backbone_with_fpn_forward.13} parent=5 // pred_region
      %s142 = ssub.s32 %s9, 1
      %p143 = scmp.lt.s32.totalorder %s14, 1
      %s144 = scalar_select %p143, %s14, 1
      %s145 = smul.addr %s144, 5
      %s146 = smul.addr %s145, 4
      %s147 = scalar_lea.vmem %s0, %s146
      %p148 = pneg %p35
      %p149 = pneg %p32
      %p150 = pneg %p56
      %p151 = pneg %p53
      %p152 = pneg %p77
      %p153 = pneg %p74
      %p154 = pneg %p103
      %p155 = pneg %p100
      %p156 = scmp.lt.s32.totalorder %s14, 1
      %s157 = scalar_select %p156, %s14, 1
      %s158 = smul.addr %s157, 3
      %s159 = smul.addr %s158, 8
      %s160 = scalar_lea.vmem %s3, %s159
      %p161 = scmp.lt.s32.totalorder %s14, 1
      %s162 = scalar_select %p161, %s14, 1
      %s163 = smul.addr %s162, 5
      %s164 = smul.addr %s163, 4
      %s165 = scalar_lea.vmem %s0, %s164
      %p166 = scmp.lt.s32.totalorder %s14, 1
      %s167 = scalar_select %p166, %s14, 1
      %s168 = smul.addr %s167, 3
      %s169 = smul.addr %s168, 8
      %s170 = scalar_lea.vmem %s3, %s169
      %v172 = vld [vmem:[%s165] sm:$0xf]
      %v173 = vld [vmem:[%s165 + $0x4] sm:$0xf]
      %v174 = vld [vmem:[%s165 + $0x8] sm:$0x7]
      %v175 = vld [vmem:[%s1] sm:$0xf]
      %v176 = vld [vmem:[%s1 + $0x4] sm:$0xf]
      %v177 = vld [vmem:[%s1 + $0x8] sm:$0xf]
      %v178 = vld [vmem:[%s1 + $0xc] sm:$0xf]
      %v179 = vld [vmem:[%s1 + $0x10] sm:$0xf]
      %v180 = vld [vmem:[%s1 + $0x14] sm:$0xf]
      %v181 = vld [vmem:[%s1 + $0x18] sm:$0xf]
      %v182 = vld [vmem:[%s1 + $0x1c] sm:$0xf]
      %v183 = vld [vmem:[%s165 + $0x8] sm:$0xf]
      %s184 = scalar_lea.vmem %s1, 32
      %v185 = vld [vmem:[%s184] sm:$0xf]
      %v186 = vld [vmem:[%s184 + $0x4] sm:$0xf]
      %v187 = vld [vmem:[%s184 + $0x8] sm:$0xf]
      %v188 = vld [vmem:[%s184 + $0xc] sm:$0xf]
      %v189 = vld [vmem:[%s184 + $0x10] sm:$0xf]
      %v190 = vld [vmem:[%s184 + $0x14] sm:$0xf]
      %v191 = vld [vmem:[%s184 + $0x18] sm:$0xf]
      %v192 = vld [vmem:[%s184 + $0x1c] sm:$0xf]
      %v196 = vunpack.c.l.b16 %v172
      %v197 = vunpack.c.l.b16 %v173
      %v198 = vunpack.c.l.b16 %v183
      %v199 = vpack.c.b16 %v197, %v196
      %v200 = vpack.c.b16 %v198, %v198
      %vm201 = vsmask.f32 7424
      %v203 = vshrl.u32 %v199, 16
      %v205 = vshll.u32 %v199, 16
      %v207 = vrot.slane %v205, 1
      %v208 = vor.u32 %v203, %v207
      %v210 = vshll.u32 %v200, 16
      %v212 = vrot.slane %v210, 1
      %v213 = vsel %vm201, %v208, %v212
      %v214 = vshrl.u32 %v200, 16
      %v216 = vor.u32 %v214, %v212
      %v225 = vunpack.c.l.b16 %v185
      %v226 = vunpack.c.l.b16 %v186
      %v227 = vunpack.c.l.b16 %v187
      %v228 = vunpack.c.l.b16 %v188
      %v229 = vunpack.c.l.b16 %v189
      %v230 = vunpack.c.l.b16 %v190
      %v231 = vunpack.c.l.b16 %v191
      %v232 = vunpack.c.l.b16 %v192
      %v233 = vpack.c.b16 %v226, %v225
      %v234 = vpack.c.b16 %v228, %v227
      %v235 = vpack.c.b16 %v230, %v229
      %v236 = vpack.c.b16 %v232, %v231
      %vm241 = vcmask 523264
      %v243 = vsel %vm241, %v213, 0
      %v246 = vsel %vm241, %v216, 0
      %248 = vmatprep.subr.bf16.mxu0 0
      %249 = vmatpush1.bf16.msra.mxu0 0
      %250 = vmatprep.subr.bf16.mxu0 0
      %251 = vmatpush1.bf16.msra.mxu0 0
      %252 = vmatprep.subr.bf16.mxu0 0
      %253 = vmatpush1.bf16.msra.mxu0 0
      %254 = vmatprep.subr.bf16.mxu0 0
      %255 = vmatpush1.bf16.msra.mxu0 0
      %256 = vmatprep.subr.bf16.mxu0 0
      %257 = vmatpush1.bf16.msra.mxu0 %v236
      %258 = vmatprep.subr.bf16.mxu0 0
      %259 = vmatpush1.bf16.msra.mxu0 %v235
      %260 = vmatprep.subr.bf16.mxu0 0
      %261 = vmatpush1.bf16.msra.mxu0 %v234
      %262 = vmatprep.subr.bf16.mxu0 0
      %263 = vmatpush1.bf16.msra.mxu0 %v233
      %264 = vmatprep.subr.bf16.mxu0 0
      %265 = vmatpush2.bf16.msra.mxu0 0
      %266 = vmatprep.subr.bf16.mxu0 0
      %267 = vmatpush2.bf16.msra.mxu0 0
      %268 = vmatprep.subr.bf16.mxu0 0
      %269 = vmatpush2.bf16.msra.mxu0 0
      %270 = vmatprep.subr.bf16.mxu0 0
      %271 = vmatpush2.bf16.msra.mxu0 0
      %272 = vmatprep.subr.bf16.mxu0 0
      %273 = vmatpush2.bf16.msra.mxu0 0
      %274 = vmatprep.subr.bf16.mxu0 0
      %275 = vmatpush2.bf16.msra.mxu0 0
      %276 = vmatprep.subr.bf16.mxu0 0
      %277 = vmatpush2.bf16.msra.mxu0 0
      %278 = vmatprep.subr.bf16.mxu0 0
      %279 = vmatpush2.bf16.msra.mxu0 0
      %280 = vmatprep.mubr.bf16.mxu0 0
      %281 = vmatmul.mubr.bf16.gmra.mxu0 %v243
      %v282 = vpop.f32.mrf.mxu0
      %v283 = vadd.f32 0.0, %v282
      %v284 = vpop.f32.mrf.mxu0
      %v285 = vpop.f32.mrf.mxu0
      %v286 = vadd.f32 0.0, %v285
      %v287 = vpop.f32.mrf.mxu0
      %288 = vmatprep.mubr.bf16.mxu0 0
      %289 = vmatmul.mubr.bf16.gmra.mxu0 %v246
      %v290 = vpop.f32.mrf.mxu0
      %v291 = vadd.f32 0.0, %v290
      %v292 = vpop.f32.mrf.mxu0
      %v293 = vpop.f32.mrf.mxu0
      %v294 = vpop.f32.mrf.mxu0
      %295 = vdwg.mxu0
      %v297 = vunpack.c.l.b16 %v174
      %v298 = vpack.c.b16 %v297, %v297
      %v307 = vunpack.c.l.b16 %v175
      %v308 = vunpack.c.l.b16 %v176
      %v309 = vunpack.c.l.b16 %v177
      %v310 = vunpack.c.l.b16 %v178
      %v311 = vunpack.c.l.b16 %v179
      %v312 = vunpack.c.l.b16 %v180
      %v313 = vunpack.c.l.b16 %v181
      %v314 = vunpack.c.l.b16 %v182
      %v315 = vpack.c.b16 %v308, %v307
      %v316 = vpack.c.b16 %v310, %v309
      %v317 = vpack.c.b16 %v312, %v311
      %v318 = vpack.c.b16 %v314, %v313
      %v323 = vsel %vm241, %v199, 0
      %v326 = vsel %vm241, %v298, 0
      %328 = vmatprep.subr.bf16.mxu0 0
      %329 = vmatpush1.bf16.msra.mxu0 0
      %330 = vmatprep.subr.bf16.mxu0 0
      %331 = vmatpush1.bf16.msra.mxu0 0
      %332 = vmatprep.subr.bf16.mxu0 0
      %333 = vmatpush1.bf16.msra.mxu0 0
      %334 = vmatprep.subr.bf16.mxu0 0
      %335 = vmatpush1.bf16.msra.mxu0 0
      %336 = vmatprep.subr.bf16.mxu0 0
      %337 = vmatpush1.bf16.msra.mxu0 %v318
      %338 = vmatprep.subr.bf16.mxu0 0
      %339 = vmatpush1.bf16.msra.mxu0 %v317
      %340 = vmatprep.subr.bf16.mxu0 0
      %341 = vmatpush1.bf16.msra.mxu0 %v316
      %342 = vmatprep.subr.bf16.mxu0 0
      %343 = vmatpush1.bf16.msra.mxu0 %v315
      %344 = vmatprep.subr.bf16.mxu0 0
      %345 = vmatpush2.bf16.msra.mxu0 0
      %346 = vmatprep.subr.bf16.mxu0 0
      %347 = vmatpush2.bf16.msra.mxu0 0
      %348 = vmatprep.subr.bf16.mxu0 0
      %349 = vmatpush2.bf16.msra.mxu0 0
      %350 = vmatprep.subr.bf16.mxu0 0
      %351 = vmatpush2.bf16.msra.mxu0 0
      %352 = vmatprep.subr.bf16.mxu0 0
      %353 = vmatpush2.bf16.msra.mxu0 0
      %354 = vmatprep.subr.bf16.mxu0 0
      %355 = vmatpush2.bf16.msra.mxu0 0
      %356 = vmatprep.subr.bf16.mxu0 0
      %357 = vmatpush2.bf16.msra.mxu0 0
      %358 = vmatprep.subr.bf16.mxu0 0
      %359 = vmatpush2.bf16.msra.mxu0 0
      %360 = vmatprep.mubr.bf16.mxu0 0
      %361 = vmatmul.mubr.bf16.gmra.mxu0 %v323
      %v362 = vpop.f32.mrf.mxu0
      %v363 = vadd.f32 %v283, %v362
      %v364 = vpop.f32.mrf.mxu0
      %v365 = vpop.f32.mrf.mxu0
      %v366 = vadd.f32 %v286, %v365
      %v367 = vpop.f32.mrf.mxu0
      %368 = vmatprep.mubr.bf16.mxu0 0
      %369 = vmatmul.mubr.bf16.gmra.mxu0 %v326
      %v370 = vpop.f32.mrf.mxu0
      %v371 = vadd.f32 %v291, %v370
      %v372 = vpop.f32.mrf.mxu0
      %v373 = vpop.f32.mrf.mxu0
      %v374 = vpop.f32.mrf.mxu0
      %375 = vdwg.mxu0
      %v376 = vld [vmem:[%s165] sm:$0xe]
      %s377 = scalar_lea.vmem %s1, 64
      %v378 = vld [vmem:[%s377] sm:$0xf]
      %v379 = vld [vmem:[%s377 + $0x4] sm:$0xf]
      %v380 = vld [vmem:[%s377 + $0x8] sm:$0xf]
      %v381 = vld [vmem:[%s377 + $0xc] sm:$0xf]
      %v382 = vld [vmem:[%s377 + $0x10] sm:$0xf]
      %v383 = vld [vmem:[%s377 + $0x14] sm:$0xf]
      %v384 = vld [vmem:[%s377 + $0x18] sm:$0xf]
      %v385 = vld [vmem:[%s377 + $0x1c] sm:$0xf]
      %v387 = vunpack.c.l.b16 %v376
      %v388 = vpack.c.b16 %v197, %v387
      %vm389 = vcmask 1046528
      %v390 = vrot.slane %v388, 1
      %v391 = vrot.slane %v200, 1
      %v392 = vsel %vm389, %v390, %v391
      %v401 = vunpack.c.l.b16 %v378
      %v402 = vunpack.c.l.b16 %v379
      %v403 = vunpack.c.l.b16 %v380
      %v404 = vunpack.c.l.b16 %v381
      %v405 = vunpack.c.l.b16 %v382
      %v406 = vunpack.c.l.b16 %v383
      %v407 = vunpack.c.l.b16 %v384
      %v408 = vunpack.c.l.b16 %v385
      %v409 = vpack.c.b16 %v402, %v401
      %v410 = vpack.c.b16 %v404, %v403
      %v411 = vpack.c.b16 %v406, %v405
      %v412 = vpack.c.b16 %v408, %v407
      %v418 = vsel %vm241, %v392, 0
      %v421 = vsel %vm241, %v391, 0
      %423 = vmatprep.subr.bf16.mxu0 0
      %424 = vmatpush1.bf16.msra.mxu0 0
      %425 = vmatprep.subr.bf16.mxu0 0
      %426 = vmatpush1.bf16.msra.mxu0 0
      %427 = vmatprep.subr.bf16.mxu0 0
      %428 = vmatpush1.bf16.msra.mxu0 0
      %429 = vmatprep.subr.bf16.mxu0 0
      %430 = vmatpush1.bf16.msra.mxu0 0
      %431 = vmatprep.subr.bf16.mxu0 0
      %432 = vmatpush1.bf16.msra.mxu0 %v412
      %433 = vmatprep.subr.bf16.mxu0 0
      %434 = vmatpush1.bf16.msra.mxu0 %v411
      %435 = vmatprep.subr.bf16.mxu0 0
      %436 = vmatpush1.bf16.msra.mxu0 %v410
      %437 = vmatprep.subr.bf16.mxu0 0
      %438 = vmatpush1.bf16.msra.mxu0 %v409
      %439 = vmatprep.subr.bf16.mxu0 0
      %440 = vmatpush2.bf16.msra.mxu0 0
      %441 = vmatprep.subr.bf16.mxu0 0
      %442 = vmatpush2.bf16.msra.mxu0 0
      %443 = vmatprep.subr.bf16.mxu0 0
      %444 = vmatpush2.bf16.msra.mxu0 0
      %445 = vmatprep.subr.bf16.mxu0 0
      %446 = vmatpush2.bf16.msra.mxu0 0
      %447 = vmatprep.subr.bf16.mxu0 0
      %448 = vmatpush2.bf16.msra.mxu0 0
      %449 = vmatprep.subr.bf16.mxu0 0
      %450 = vmatpush2.bf16.msra.mxu0 0
      %451 = vmatprep.subr.bf16.mxu0 0
      %452 = vmatpush2.bf16.msra.mxu0 0
      %453 = vmatprep.subr.bf16.mxu0 0
      %454 = vmatpush2.bf16.msra.mxu0 0
      %455 = vmatprep.mubr.bf16.mxu0 0
      %456 = vmatmul.mubr.bf16.gmra.mxu0 %v418
      %v457 = vpop.f32.mrf.mxu0
      %v458 = vadd.f32 0.0, %v457
      %v459 = vpop.f32.mrf.mxu0
      %v460 = vpop.f32.mrf.mxu0
      %v461 = vadd.f32 0.0, %v460
      %v462 = vpop.f32.mrf.mxu0
      %463 = vmatprep.mubr.bf16.mxu0 0
      %464 = vmatmul.mubr.bf16.gmra.mxu0 %v421
      %v465 = vpop.f32.mrf.mxu0
      %v466 = vadd.f32 0.0, %v465
      %v467 = vpop.f32.mrf.mxu0
      %v468 = vpop.f32.mrf.mxu0
      %v469 = vpop.f32.mrf.mxu0
      %470 = vdwg.mxu0
      %v471 = vadd.f32 %v363, %v458
      %v472 = vadd.f32 %v366, %v461
      %v473 = vadd.f32 %v371, %v466
      %v474 = vld [vmem:[%s165] sm:$0x8]
      %v475 = vld [vmem:[%s165 + $0x4] sm:$0xf]
      %v476 = vld [vmem:[%s165 + $0x8] sm:$0xf]
      %v477 = vld [vmem:[%s165 + $0xc] sm:$0x3]
      %s478 = scalar_lea.vmem %s1, 96
      %v479 = vld [vmem:[%s478] sm:$0xf]
      %v480 = vld [vmem:[%s478 + $0x4] sm:$0xf]
      %v481 = vld [vmem:[%s478 + $0x8] sm:$0xf]
      %v482 = vld [vmem:[%s478 + $0xc] sm:$0xf]
      %v483 = vld [vmem:[%s478 + $0x10] sm:$0xf]
      %v484 = vld [vmem:[%s478 + $0x14] sm:$0xf]
      %v485 = vld [vmem:[%s478 + $0x18] sm:$0xf]
      %v486 = vld [vmem:[%s478 + $0x1c] sm:$0xf]
      %v491 = vunpack.c.l.b16 %v474
      %v492 = vunpack.c.l.b16 %v475
      %v493 = vunpack.c.l.b16 %v476
      %v494 = vunpack.c.l.b16 %v477
      %v495 = vpack.c.b16 %v492, %v491
      %v496 = vpack.c.b16 %v494, %v493
      %vm497 = vcmask 1044480
      %v498 = vrot.slane %v495, 3
      %v499 = vrot.slane %v496, 3
      %v500 = vsel %vm497, %v498, %v499
      %v509 = vunpack.c.l.b16 %v479
      %v510 = vunpack.c.l.b16 %v480
      %v511 = vunpack.c.l.b16 %v481
      %v512 = vunpack.c.l.b16 %v482
      %v513 = vunpack.c.l.b16 %v483
      %v514 = vunpack.c.l.b16 %v484
      %v515 = vunpack.c.l.b16 %v485
      %v516 = vunpack.c.l.b16 %v486
      %v517 = vpack.c.b16 %v510, %v509
      %v518 = vpack.c.b16 %v512, %v511
      %v519 = vpack.c.b16 %v514, %v513
      %v520 = vpack.c.b16 %v516, %v515
      %v526 = vsel %vm241, %v500, 0
      %v529 = vsel %vm241, %v499, 0
      %531 = vmatprep.subr.bf16.mxu0 0
      %532 = vmatpush1.bf16.msra.mxu0 0
      %533 = vmatprep.subr.bf16.mxu0 0
      %534 = vmatpush1.bf16.msra.mxu0 0
      %535 = vmatprep.subr.bf16.mxu0 0
      %536 = vmatpush1.bf16.msra.mxu0 0
      %537 = vmatprep.subr.bf16.mxu0 0
      %538 = vmatpush1.bf16.msra.mxu0 0
      %539 = vmatprep.subr.bf16.mxu0 0
      %540 = vmatpush1.bf16.msra.mxu0 %v520
      %541 = vmatprep.subr.bf16.mxu0 0
      %542 = vmatpush1.bf16.msra.mxu0 %v519
      %543 = vmatprep.subr.bf16.mxu0 0
      %544 = vmatpush1.bf16.msra.mxu0 %v518
      %545 = vmatprep.subr.bf16.mxu0 0
      %546 = vmatpush1.bf16.msra.mxu0 %v517
      %547 = vmatprep.subr.bf16.mxu0 0
      %548 = vmatpush2.bf16.msra.mxu0 0
      %549 = vmatprep.subr.bf16.mxu0 0
      %550 = vmatpush2.bf16.msra.mxu0 0
      %551 = vmatprep.subr.bf16.mxu0 0
      %552 = vmatpush2.bf16.msra.mxu0 0
      %553 = vmatprep.subr.bf16.mxu0 0
      %554 = vmatpush2.bf16.msra.mxu0 0
      %555 = vmatprep.subr.bf16.mxu0 0
      %556 = vmatpush2.bf16.msra.mxu0 0
      %557 = vmatprep.subr.bf16.mxu0 0
      %558 = vmatpush2.bf16.msra.mxu0 0
      %559 = vmatprep.subr.bf16.mxu0 0
      %560 = vmatpush2.bf16.msra.mxu0 0
      %561 = vmatprep.subr.bf16.mxu0 0
      %562 = vmatpush2.bf16.msra.mxu0 0
      %563 = vmatprep.mubr.bf16.mxu0 0
      %564 = vmatmul.mubr.bf16.gmra.mxu0 %v526
      %v565 = vpop.f32.mrf.mxu0
      %v566 = vadd.f32 0.0, %v565
      %v567 = vpop.f32.mrf.mxu0
      %v568 = vpop.f32.mrf.mxu0
      %v569 = vadd.f32 0.0, %v568
      %v570 = vpop.f32.mrf.mxu0
      %571 = vmatprep.mubr.bf16.mxu0 0
      %572 = vmatmul.mubr.bf16.gmra.mxu0 %v529
      %v573 = vpop.f32.mrf.mxu0
      %v574 = vadd.f32 0.0, %v573
      %v575 = vpop.f32.mrf.mxu0
      %v576 = vpop.f32.mrf.mxu0
      %v577 = vpop.f32.mrf.mxu0
      %578 = vdwg.mxu0
      %v579 = vadd.f32 %v471, %v566
      %v580 = vadd.f32 %v472, %v569
      %v581 = vadd.f32 %v473, %v574
      %v582 = vld [vmem:[%s165 + $0xc] sm:$0x7]
      %s583 = scalar_lea.vmem %s1, 128
      %v584 = vld [vmem:[%s583] sm:$0xf]
      %v585 = vld [vmem:[%s583 + $0x4] sm:$0xf]
      %v586 = vld [vmem:[%s583 + $0x8] sm:$0xf]
      %v587 = vld [vmem:[%s583 + $0xc] sm:$0xf]
      %v588 = vld [vmem:[%s583 + $0x10] sm:$0xf]
      %v589 = vld [vmem:[%s583 + $0x14] sm:$0xf]
      %v590 = vld [vmem:[%s583 + $0x18] sm:$0xf]
      %v591 = vld [vmem:[%s583 + $0x1c] sm:$0xf]
      %v593 = vunpack.c.l.b16 %v582
      %v594 = vpack.c.b16 %v593, %v493
      %vm595 = vsmask.f32 4352
      %v597 = vshrl.u32 %v495, 16
      %v599 = vrot.slane %v597, 3
      %v600 = vshll.u32 %v495, 16
      %v602 = vrot.slane %v600, 4
      %v603 = vor.u32 %v599, %v602
      %v605 = vshrl.u32 %v594, 16
      %v607 = vrot.slane %v605, 3
      %v608 = vshll.u32 %v594, 16
      %v610 = vrot.slane %v608, 4
      %v611 = vor.u32 %v607, %v610
      %v612 = vsel %vm595, %v603, %v611
      %v621 = vunpack.c.l.b16 %v584
      %v622 = vunpack.c.l.b16 %v585
      %v623 = vunpack.c.l.b16 %v586
      %v624 = vunpack.c.l.b16 %v587
      %v625 = vunpack.c.l.b16 %v588
      %v626 = vunpack.c.l.b16 %v589
      %v627 = vunpack.c.l.b16 %v590
      %v628 = vunpack.c.l.b16 %v591
      %v629 = vpack.c.b16 %v622, %v621
      %v630 = vpack.c.b16 %v624, %v623
      %v631 = vpack.c.b16 %v626, %v625
      %v632 = vpack.c.b16 %v628, %v627
      %v638 = vsel %vm241, %v612, 0
      %v641 = vsel %vm241, %v611, 0
      %643 = vmatprep.subr.bf16.mxu0 0
      %644 = vmatpush1.bf16.msra.mxu0 0
      %645 = vmatprep.subr.bf16.mxu0 0
      %646 = vmatpush1.bf16.msra.mxu0 0
      %647 = vmatprep.subr.bf16.mxu0 0
      %648 = vmatpush1.bf16.msra.mxu0 0
      %649 = vmatprep.subr.bf16.mxu0 0
      %650 = vmatpush1.bf16.msra.mxu0 0
      %651 = vmatprep.subr.bf16.mxu0 0
      %652 = vmatpush1.bf16.msra.mxu0 %v632
      %653 = vmatprep.subr.bf16.mxu0 0
      %654 = vmatpush1.bf16.msra.mxu0 %v631
      %655 = vmatprep.subr.bf16.mxu0 0
      %656 = vmatpush1.bf16.msra.mxu0 %v630
      %657 = vmatprep.subr.bf16.mxu0 0
      %658 = vmatpush1.bf16.msra.mxu0 %v629
      %659 = vmatprep.subr.bf16.mxu0 0
      %660 = vmatpush2.bf16.msra.mxu0 0
      %661 = vmatprep.subr.bf16.mxu0 0
      %662 = vmatpush2.bf16.msra.mxu0 0
      %663 = vmatprep.subr.bf16.mxu0 0
      %664 = vmatpush2.bf16.msra.mxu0 0
      %665 = vmatprep.subr.bf16.mxu0 0
      %666 = vmatpush2.bf16.msra.mxu0 0
      %667 = vmatprep.subr.bf16.mxu0 0
      %668 = vmatpush2.bf16.msra.mxu0 0
      %669 = vmatprep.subr.bf16.mxu0 0
      %670 = vmatpush2.bf16.msra.mxu0 0
      %671 = vmatprep.subr.bf16.mxu0 0
      %672 = vmatpush2.bf16.msra.mxu0 0
      %673 = vmatprep.subr.bf16.mxu0 0
      %674 = vmatpush2.bf16.msra.mxu0 0
      %675 = vmatprep.mubr.bf16.mxu0 0
      %676 = vmatmul.mubr.bf16.gmra.mxu0 %v638
      %v677 = vpop.f32.mrf.mxu0
      %v678 = vadd.f32 0.0, %v677
      %v679 = vpop.f32.mrf.mxu0
      %v680 = vpop.f32.mrf.mxu0
      %v681 = vadd.f32 0.0, %v680
      %v682 = vpop.f32.mrf.mxu0
      %683 = vmatprep.mubr.bf16.mxu0 0
      %684 = vmatmul.mubr.bf16.gmra.mxu0 %v641
      %v685 = vpop.f32.mrf.mxu0
      %v686 = vadd.f32 0.0, %v685
      %v687 = vpop.f32.mrf.mxu0
      %v688 = vpop.f32.mrf.mxu0
      %v689 = vpop.f32.mrf.mxu0
      %690 = vdwg.mxu0
      %v691 = vadd.f32 %v579, %v678
      %v692 = vadd.f32 %v580, %v681
      %v693 = vadd.f32 %v581, %v686
      %s694 = scalar_lea.vmem %s1, 160
      %v695 = vld [vmem:[%s694] sm:$0xf]
      %v696 = vld [vmem:[%s694 + $0x4] sm:$0xf]
      %v697 = vld [vmem:[%s694 + $0x8] sm:$0xf]
      %v698 = vld [vmem:[%s694 + $0xc] sm:$0xf]
      %v699 = vld [vmem:[%s694 + $0x10] sm:$0xf]
      %v700 = vld [vmem:[%s694 + $0x14] sm:$0xf]
      %v701 = vld [vmem:[%s694 + $0x18] sm:$0xf]
      %v702 = vld [vmem:[%s694 + $0x1c] sm:$0xf]
      %v703 = vpack.c.b16 %v493, %v492
      %v704 = vpack.c.b16 %v593, %v593
      %v713 = vunpack.c.l.b16 %v695
      %v714 = vunpack.c.l.b16 %v696
      %v715 = vunpack.c.l.b16 %v697
      %v716 = vunpack.c.l.b16 %v698
      %v717 = vunpack.c.l.b16 %v699
      %v718 = vunpack.c.l.b16 %v700
      %v719 = vunpack.c.l.b16 %v701
      %v720 = vunpack.c.l.b16 %v702
      %v721 = vpack.c.b16 %v714, %v713
      %v722 = vpack.c.b16 %v716, %v715
      %v723 = vpack.c.b16 %v718, %v717
      %v724 = vpack.c.b16 %v720, %v719
      %v730 = vsel %vm241, %v703, 0
      %v733 = vsel %vm241, %v704, 0
      %735 = vmatprep.subr.bf16.mxu0 0
      %736 = vmatpush1.bf16.msra.mxu0 0
      %737 = vmatprep.subr.bf16.mxu0 0
      %738 = vmatpush1.bf16.msra.mxu0 0
      %739 = vmatprep.subr.bf16.mxu0 0
      %740 = vmatpush1.bf16.msra.mxu0 0
      %741 = vmatprep.subr.bf16.mxu0 0
      %742 = vmatpush1.bf16.msra.mxu0 0
      %743 = vmatprep.subr.bf16.mxu0 0
      %744 = vmatpush1.bf16.msra.mxu0 %v724
      %745 = vmatprep.subr.bf16.mxu0 0
      %746 = vmatpush1.bf16.msra.mxu0 %v723
      %747 = vmatprep.subr.bf16.mxu0 0
      %748 = vmatpush1.bf16.msra.mxu0 %v722
      %749 = vmatprep.subr.bf16.mxu0 0
      %750 = vmatpush1.bf16.msra.mxu0 %v721
      %751 = vmatprep.subr.bf16.mxu0 0
      %752 = vmatpush2.bf16.msra.mxu0 0
      %753 = vmatprep.subr.bf16.mxu0 0
      %754 = vmatpush2.bf16.msra.mxu0 0
      %755 = vmatprep.subr.bf16.mxu0 0
      %756 = vmatpush2.bf16.msra.mxu0 0
      %757 = vmatprep.subr.bf16.mxu0 0
      %758 = vmatpush2.bf16.msra.mxu0 0
      %759 = vmatprep.subr.bf16.mxu0 0
      %760 = vmatpush2.bf16.msra.mxu0 0
      %761 = vmatprep.subr.bf16.mxu0 0
      %762 = vmatpush2.bf16.msra.mxu0 0
      %763 = vmatprep.subr.bf16.mxu0 0
      %764 = vmatpush2.bf16.msra.mxu0 0
      %765 = vmatprep.subr.bf16.mxu0 0
      %766 = vmatpush2.bf16.msra.mxu0 0
      %767 = vmatprep.mubr.bf16.mxu0 0
      %768 = vmatmul.mubr.bf16.gmra.mxu0 %v730
      %v769 = vpop.f32.mrf.mxu0
      %v770 = vadd.f32 0.0, %v769
      %v771 = vpop.f32.mrf.mxu0
      %v772 = vpop.f32.mrf.mxu0
      %v773 = vadd.f32 0.0, %v772
      %v774 = vpop.f32.mrf.mxu0
      %775 = vmatprep.mubr.bf16.mxu0 0
      %776 = vmatmul.mubr.bf16.gmra.mxu0 %v733
      %v777 = vpop.f32.mrf.mxu0
      %v778 = vadd.f32 0.0, %v777
      %v779 = vpop.f32.mrf.mxu0
      %v780 = vpop.f32.mrf.mxu0
      %v781 = vpop.f32.mrf.mxu0
      %782 = vdwg.mxu0
      %v783 = vadd.f32 %v691, %v770
      %v784 = vadd.f32 %v692, %v773
      %v785 = vadd.f32 %v693, %v778
      %v786 = vld [vmem:[%s165 + $0x4] sm:$0xc]
      %v787 = vld [vmem:[%s165 + $0x8] sm:$0xf]
      %v788 = vld [vmem:[%s165 + $0xc] sm:$0xf]
      %v789 = vld [vmem:[%s165 + $0x10] sm:$0x1]
      %s790 = scalar_lea.vmem %s1, 192
      %v791 = vld [vmem:[%s790] sm:$0xf]
      %v792 = vld [vmem:[%s790 + $0x4] sm:$0xf]
      %v793 = vld [vmem:[%s790 + $0x8] sm:$0xf]
      %v794 = vld [vmem:[%s790 + $0xc] sm:$0xf]
      %v795 = vld [vmem:[%s790 + $0x10] sm:$0xf]
      %v796 = vld [vmem:[%s790 + $0x14] sm:$0xf]
      %v797 = vld [vmem:[%s790 + $0x18] sm:$0xf]
      %v798 = vld [vmem:[%s790 + $0x1c] sm:$0xf]
      %v803 = vunpack.c.l.b16 %v786
      %v804 = vunpack.c.l.b16 %v787
      %v805 = vunpack.c.l.b16 %v788
      %v806 = vunpack.c.l.b16 %v789
      %v807 = vpack.c.b16 %v804, %v803
      %v808 = vpack.c.b16 %v806, %v805
      %vm809 = vcmask 1045504
      %v810 = vrot.slane %v807, 2
      %v811 = vrot.slane %v808, 2
      %v812 = vsel %vm809, %v810, %v811
      %v821 = vunpack.c.l.b16 %v791
      %v822 = vunpack.c.l.b16 %v792
      %v823 = vunpack.c.l.b16 %v793
      %v824 = vunpack.c.l.b16 %v794
      %v825 = vunpack.c.l.b16 %v795
      %v826 = vunpack.c.l.b16 %v796
      %v827 = vunpack.c.l.b16 %v797
      %v828 = vunpack.c.l.b16 %v798
      %v829 = vpack.c.b16 %v822, %v821
      %v830 = vpack.c.b16 %v824, %v823
      %v831 = vpack.c.b16 %v826, %v825
      %v832 = vpack.c.b16 %v828, %v827
      %v838 = vsel %vm241, %v812, 0
      %v841 = vsel %vm241, %v811, 0
      %843 = vmatprep.subr.bf16.mxu0 0
      %844 = vmatpush1.bf16.msra.mxu0 0
      %845 = vmatprep.subr.bf16.mxu0 0
      %846 = vmatpush1.bf16.msra.mxu0 0
      %847 = vmatprep.subr.bf16.mxu0 0
      %848 = vmatpush1.bf16.msra.mxu0 0
      %849 = vmatprep.subr.bf16.mxu0 0
      %850 = vmatpush1.bf16.msra.mxu0 0
      %851 = vmatprep.subr.bf16.mxu0 0
      %852 = vmatpush1.bf16.msra.mxu0 %v832
      %853 = vmatprep.subr.bf16.mxu0 0
      %854 = vmatpush1.bf16.msra.mxu0 %v831
      %855 = vmatprep.subr.bf16.mxu0 0
      %856 = vmatpush1.bf16.msra.mxu0 %v830
      %857 = vmatprep.subr.bf16.mxu0 0
      %858 = vmatpush1.bf16.msra.mxu0 %v829
      %859 = vmatprep.subr.bf16.mxu0 0
      %860 = vmatpush2.bf16.msra.mxu0 0
      %861 = vmatprep.subr.bf16.mxu0 0
      %862 = vmatpush2.bf16.msra.mxu0 0
      %863 = vmatprep.subr.bf16.mxu0 0
      %864 = vmatpush2.bf16.msra.mxu0 0
      %865 = vmatprep.subr.bf16.mxu0 0
      %866 = vmatpush2.bf16.msra.mxu0 0
      %867 = vmatprep.subr.bf16.mxu0 0
      %868 = vmatpush2.bf16.msra.mxu0 0
      %869 = vmatprep.subr.bf16.mxu0 0
      %870 = vmatpush2.bf16.msra.mxu0 0
      %871 = vmatprep.subr.bf16.mxu0 0
      %872 = vmatpush2.bf16.msra.mxu0 0
      %873 = vmatprep.subr.bf16.mxu0 0
      %874 = vmatpush2.bf16.msra.mxu0 0
      %875 = vmatprep.mubr.bf16.mxu0 0
      %876 = vmatmul.mubr.bf16.gmra.mxu0 %v838
      %v877 = vpop.f32.mrf.mxu0
      %v878 = vadd.f32 0.0, %v877
      %v879 = vpop.f32.mrf.mxu0
      %v880 = vpop.f32.mrf.mxu0
      %v881 = vadd.f32 0.0, %v880
      %v882 = vpop.f32.mrf.mxu0
      %883 = vmatprep.mubr.bf16.mxu0 0
      %884 = vmatmul.mubr.bf16.gmra.mxu0 %v841
      %v885 = vpop.f32.mrf.mxu0
      %v886 = vadd.f32 0.0, %v885
      %v887 = vpop.f32.mrf.mxu0
      %v888 = vpop.f32.mrf.mxu0
      %v889 = vpop.f32.mrf.mxu0
      %890 = vdwg.mxu0
      %v891 = vadd.f32 %v783, %v878
      %v892 = vadd.f32 %v784, %v881
      %v893 = vadd.f32 %v785, %v886
      %v894 = vld [vmem:[%s165 + $0x10] sm:$0x3]
      %s895 = scalar_lea.vmem %s1, 224
      %v896 = vld [vmem:[%s895] sm:$0xf]
      %v897 = vld [vmem:[%s895 + $0x4] sm:$0xf]
      %v898 = vld [vmem:[%s895 + $0x8] sm:$0xf]
      %v899 = vld [vmem:[%s895 + $0xc] sm:$0xf]
      %v900 = vld [vmem:[%s895 + $0x10] sm:$0xf]
      %v901 = vld [vmem:[%s895 + $0x14] sm:$0xf]
      %v902 = vld [vmem:[%s895 + $0x18] sm:$0xf]
      %v903 = vld [vmem:[%s895 + $0x1c] sm:$0xf]
      %v905 = vunpack.c.l.b16 %v894
      %v906 = vpack.c.b16 %v905, %v805
      %vm907 = vsmask.f32 5376
      %v909 = vshrl.u32 %v807, 16
      %v911 = vrot.slane %v909, 2
      %v912 = vshll.u32 %v807, 16
      %v914 = vrot.slane %v912, 3
      %v915 = vor.u32 %v911, %v914
      %v917 = vshrl.u32 %v906, 16
      %v919 = vrot.slane %v917, 2
      %v920 = vshll.u32 %v906, 16
      %v922 = vrot.slane %v920, 3
      %v923 = vor.u32 %v919, %v922
      %v924 = vsel %vm907, %v915, %v923
      %v933 = vunpack.c.l.b16 %v896
      %v934 = vunpack.c.l.b16 %v897
      %v935 = vunpack.c.l.b16 %v898
      %v936 = vunpack.c.l.b16 %v899
      %v937 = vunpack.c.l.b16 %v900
      %v938 = vunpack.c.l.b16 %v901
      %v939 = vunpack.c.l.b16 %v902
      %v940 = vunpack.c.l.b16 %v903
      %v941 = vpack.c.b16 %v934, %v933
      %v942 = vpack.c.b16 %v936, %v935
      %v943 = vpack.c.b16 %v938, %v937
      %v944 = vpack.c.b16 %v940, %v939
      %v950 = vsel %vm241, %v924, 0
      %v953 = vsel %vm241, %v923, 0
      %955 = vmatprep.subr.bf16.mxu0 0
      %956 = vmatpush1.bf16.msra.mxu0 0
      %957 = vmatprep.subr.bf16.mxu0 0
      %958 = vmatpush1.bf16.msra.mxu0 0
      %959 = vmatprep.subr.bf16.mxu0 0
      %960 = vmatpush1.bf16.msra.mxu0 0
      %961 = vmatprep.subr.bf16.mxu0 0
      %962 = vmatpush1.bf16.msra.mxu0 0
      %963 = vmatprep.subr.bf16.mxu0 0
      %964 = vmatpush1.bf16.msra.mxu0 %v944
      %965 = vmatprep.subr.bf16.mxu0 0
      %966 = vmatpush1.bf16.msra.mxu0 %v943
      %967 = vmatprep.subr.bf16.mxu0 0
      %968 = vmatpush1.bf16.msra.mxu0 %v942
      %969 = vmatprep.subr.bf16.mxu0 0
      %970 = vmatpush1.bf16.msra.mxu0 %v941
      %971 = vmatprep.subr.bf16.mxu0 0
      %972 = vmatpush2.bf16.msra.mxu0 0
      %973 = vmatprep.subr.bf16.mxu0 0
      %974 = vmatpush2.bf16.msra.mxu0 0
      %975 = vmatprep.subr.bf16.mxu0 0
      %976 = vmatpush2.bf16.msra.mxu0 0
      %977 = vmatprep.subr.bf16.mxu0 0
      %978 = vmatpush2.bf16.msra.mxu0 0
      %979 = vmatprep.subr.bf16.mxu0 0
      %980 = vmatpush2.bf16.msra.mxu0 0
      %981 = vmatprep.subr.bf16.mxu0 0
      %982 = vmatpush2.bf16.msra.mxu0 0
      %983 = vmatprep.subr.bf16.mxu0 0
      %984 = vmatpush2.bf16.msra.mxu0 0
      %985 = vmatprep.subr.bf16.mxu0 0
      %986 = vmatpush2.bf16.msra.mxu0 0
      %987 = vmatprep.mubr.bf16.mxu0 0
      %988 = vmatmul.mubr.bf16.gmra.mxu0 %v950
      %v989 = vpop.f32.mrf.mxu0
      %v990 = vadd.f32 0.0, %v989
      %v991 = vpop.f32.mrf.mxu0
      %v992 = vpop.f32.mrf.mxu0
      %v993 = vadd.f32 0.0, %v992
      %v994 = vpop.f32.mrf.mxu0
      %995 = vmatprep.mubr.bf16.mxu0 0
      %996 = vmatmul.mubr.bf16.gmra.mxu0 %v953
      %v997 = vpop.f32.mrf.mxu0
      %v998 = vadd.f32 0.0, %v997
      %v999 = vpop.f32.mrf.mxu0
      %v1000 = vpop.f32.mrf.mxu0
      %v1001 = vpop.f32.mrf.mxu0
      %1002 = vdwg.mxu0
      %v1003 = vadd.f32 %v891, %v990
      %v1004 = vadd.f32 %v892, %v993
      %v1005 = vadd.f32 %v893, %v998
      %v1006 = vld [vmem:[%s165 + $0x4] sm:$0x8]
      %s1007 = scalar_lea.vmem %s1, 256
      %v1008 = vld [vmem:[%s1007] sm:$0xf]
      %v1009 = vld [vmem:[%s1007 + $0x4] sm:$0xf]
      %v1010 = vld [vmem:[%s1007 + $0x8] sm:$0xf]
      %v1011 = vld [vmem:[%s1007 + $0xc] sm:$0xf]
      %v1012 = vld [vmem:[%s1007 + $0x10] sm:$0xf]
      %v1013 = vld [vmem:[%s1007 + $0x14] sm:$0xf]
      %v1014 = vld [vmem:[%s1007 + $0x18] sm:$0xf]
      %v1015 = vld [vmem:[%s1007 + $0x1c] sm:$0xf]
      %v1017 = vunpack.c.l.b16 %v1006
      %v1018 = vpack.c.b16 %v804, %v1017
      %v1019 = vrot.slane %v1018, 3
      %v1020 = vrot.slane %v906, 3
      %v1021 = vsel %vm497, %v1019, %v1020
      %v1030 = vunpack.c.l.b16 %v1008
      %v1031 = vunpack.c.l.b16 %v1009
      %v1032 = vunpack.c.l.b16 %v1010
      %v1033 = vunpack.c.l.b16 %v1011
      %v1034 = vunpack.c.l.b16 %v1012
      %v1035 = vunpack.c.l.b16 %v1013
      %v1036 = vunpack.c.l.b16 %v1014
      %v1037 = vunpack.c.l.b16 %v1015
      %v1038 = vpack.c.b16 %v1031, %v1030
      %v1039 = vpack.c.b16 %v1033, %v1032
      %v1040 = vpack.c.b16 %v1035, %v1034
      %v1041 = vpack.c.b16 %v1037, %v1036
      %v1047 = vsel %vm241, %v1021, 0
      %v1050 = vsel %vm241, %v1020, 0
      %1052 = vmatprep.subr.bf16.mxu0 0
      %1053 = vmatpush1.bf16.msra.mxu0 0
      %1054 = vmatprep.subr.bf16.mxu0 0
      %1055 = vmatpush1.bf16.msra.mxu0 0
      %1056 = vmatprep.subr.bf16.mxu0 0
      %1057 = vmatpush1.bf16.msra.mxu0 0
      %1058 = vmatprep.subr.bf16.mxu0 0
      %1059 = vmatpush1.bf16.msra.mxu0 0
      %1060 = vmatprep.subr.bf16.mxu0 0
      %1061 = vmatpush1.bf16.msra.mxu0 %v1041
      %1062 = vmatprep.subr.bf16.mxu0 0
      %1063 = vmatpush1.bf16.msra.mxu0 %v1040
      %1064 = vmatprep.subr.bf16.mxu0 0
      %1065 = vmatpush1.bf16.msra.mxu0 %v1039
      %1066 = vmatprep.subr.bf16.mxu0 0
      %1067 = vmatpush1.bf16.msra.mxu0 %v1038
      %1068 = vmatprep.subr.bf16.mxu0 0
      %1069 = vmatpush2.bf16.msra.mxu0 0
      %1070 = vmatprep.subr.bf16.mxu0 0
      %1071 = vmatpush2.bf16.msra.mxu0 0
      %1072 = vmatprep.subr.bf16.mxu0 0
      %1073 = vmatpush2.bf16.msra.mxu0 0
      %1074 = vmatprep.subr.bf16.mxu0 0
      %1075 = vmatpush2.bf16.msra.mxu0 0
      %1076 = vmatprep.subr.bf16.mxu0 0
      %1077 = vmatpush2.bf16.msra.mxu0 0
      %1078 = vmatprep.subr.bf16.mxu0 0
      %1079 = vmatpush2.bf16.msra.mxu0 0
      %1080 = vmatprep.subr.bf16.mxu0 0
      %1081 = vmatpush2.bf16.msra.mxu0 0
      %1082 = vmatprep.subr.bf16.mxu0 0
      %1083 = vmatpush2.bf16.msra.mxu0 0
      %1084 = vmatprep.mubr.bf16.mxu0 0
      %1085 = vmatmul.mubr.bf16.gmra.mxu0 %v1047
      %v1086 = vpop.f32.mrf.mxu0
      %v1087 = vadd.f32 0.0, %v1086
      %v1088 = vpop.f32.mrf.mxu0
      %v1089 = vpop.f32.mrf.mxu0
      %v1090 = vadd.f32 0.0, %v1089
      %v1091 = vpop.f32.mrf.mxu0
      %1092 = vmatprep.mubr.bf16.mxu0 0
      %1093 = vmatmul.mubr.bf16.gmra.mxu0 %v1050
      %v1094 = vpop.f32.mrf.mxu0
      %v1095 = vadd.f32 0.0, %v1094
      %v1096 = vpop.f32.mrf.mxu0
      %v1097 = vpop.f32.mrf.mxu0
      %v1098 = vpop.f32.mrf.mxu0
      %1099 = vdwg.mxu0
      %v1100 = vadd.f32 %v1003, %v1087
      %v1101 = vadd.f32 %v1004, %v1090
      %v1102 = vadd.f32 %v1005, %v1095
      %v1103 = vld [vmem:[%s2] sm:$0x1]
      %v1105 = vlaneseq
      %v1106 = vshrl.u32 %v1105, 7
      %v1107 = vsub.s32 0, %v1106
      %v1108 = vrot.slane %v1103, %v1107
      %v1110 = vadd.f32 %v1100, %v1108
      %v1111 = vadd.f32 %v1101, %v1108
      %v1112 = vadd.f32 %v1102, %v1108
      %1113 = vst.msk [vmem:[%s170] sm:$0xff] %vm241, %v1110
      %1114 = vst.msk [vmem:[%s170 + $0x8] sm:$0xff] %vm241, %v1111
      %vm1115 = vcmask 521216
      %1116 = vst.msk [vmem:[%s170 + $0x10] sm:$0x3f] %vm1115, %v1112
      %p1117 = scmp.lt.s32.totalorder %s14, 1
      %s1118 = scalar_select %p1117, %s14, 1
      %s1119 = smul.addr %s1118, 3
      %s1120 = smul.addr %s1119, 8
      %s1121 = scalar_lea.vmem %s3, %s1120
      // Predicated region
      $region33: #{detector_backbone_with_fpn_forward.13} parent=31 // pred_check
        %p1122 = pneg %p100
      $region34: #{detector_backbone_with_fpn_forward.13} parent=31 // pred_check_branch
        %1124 = sbr.rel (%p1122) target = $region36
      $region35: #{detector_backbone_with_fpn_forward.13} parent=31 // pred_region
        _
      $region36: #{detector_backbone_with_fpn_forward.13} parent=31 // pred_fallthru
        _
    $region32: #{detector_backbone_with_fpn_forward.13} parent=5 // pred_fallthru
      _
    %p1125 = scmp.le.s32.totalorder 2, %s9
    // Predicated region
    $region37: #{detector_backbone_with_fpn_forward.13} parent=5 // pred_check
      %p1126 = pneg %p1125
    $region38: #{detector_backbone_with_fpn_forward.13} parent=5 // pred_check_branch
      %1128 = sbr.rel (%p1126) target = $region40
    $region39: #{detector_backbone_with_fpn_forward.13} parent=5 // pred_region
      %s1129 = ssub.s32 %s9, 2
      // Predicated region
      $region41: #{detector_backbone_with_fpn_forward.13} parent=39 // pred_check
        %p1130 = pneg %p106
      $region42: #{detector_backbone_with_fpn_forward.13} parent=39 // pred_check_branch
        %1132 = sbr.rel (%p1130) target = $region44
      $region43: #{detector_backbone_with_fpn_forward.13} parent=39 // pred_region
        %p1133 = scmp.lt.s32.totalorder %s15, 1
        %s1134 = scalar_select %p1133, %s15, 1
        %s1135 = smul.addr %s1134, 3
        %s1136 = smul.addr %s1135, 8
        %s1137 = scalar_lea.vmem %s3, %s1136
      $region44: #{detector_backbone_with_fpn_forward.13} parent=39 // pred_fallthru
        _
    $region40: #{detector_backbone_with_fpn_forward.13} parent=5 // pred_fallthru
      _
  $region6: #{detector_backbone_with_fpn_forward.13} parent=0 // loop_footer
    %s13 = sadd.s32 1, %s9
  $region7: #{detector_backbone_with_fpn_forward.13} parent=0 // loop_footer_branch
    %8 = sbr.rel target = $region3
  $region8: #{detector_backbone_with_fpn_forward.13} parent=0 // loop_exit
    _

// kernel: detector_backbone_with_fpn_forward.11
$region0: #{detector_backbone_with_fpn_forward.11}
  #allocation0 [shape = 'u32[]', space=smem, size = 0x4, offset = 0x4, fixed_abs, tag = 'smem constant byte address 0x4 - core index']
  #allocation1 [shape = 'u32[144,128]{1,0:T(1,128)}', space=vmem, size = 0x12000, scoped, tag = 'internal scratch']
  %s0 = inlined_call_operand.vmem [shape: bf16[2,16,64], index: 0, kind: input, shape index: {}]
  %s1 = inlined_call_operand.vmem [shape: bf16[9,64,64], index: 1, kind: input, shape index: {}]
  %s2 = inlined_call_operand.vmem [shape: f32[1,64], index: 2, kind: input, shape index: {}]
  %s3 = inlined_call_operand.vmem [shape: f32[2,6,64], index: 3, kind: output, shape index: {}]
  %s4 = sld [smem:[#allocation0]]
  $region45: #{detector_backbone_with_fpn_forward.11} parent=0
    _
  %s6 = ssub.s32 1, %s4
  %s7 = scalar_select 0, %s6, %s4
  loop: start=0, step=1, limit=4
  $region2: #{detector_backbone_with_fpn_forward.11} parent=0 // loop_pre_header
    _
  $region3: #{detector_backbone_with_fpn_forward.11} parent=0 // loop_header
    %s9 = sphi 0, %s13
    %p10 = scmp.ge.s32.totalorder %s9, 4
    %s19 = sphi 0, %s21
    %s22 = sphi 0, %s19
    %s23 = sphi 0, %s22
    %s39 = sphi 0, %s23
    %s43 = sphi 0, %s43
    %s45 = sphi 0, %s43
    %s46 = sphi 0, %s45
    %s60 = sphi 0, %s46
    %s64 = sphi 0, %s64
    %s66 = sphi 0, %s64
    %s67 = sphi 0, %s66
    %s81 = sphi 0, %s67
    %s87 = sphi 0, %s89
    %s90 = sphi 0, %s87
    %s91 = sphi 0, %s90
    %s107 = sphi 0, %s91
  $region4: #{detector_backbone_with_fpn_forward.11} parent=0 // loop_header_branch
    %12 = sbr.rel (%p10) target = $region8
  $region5: #{detector_backbone_with_fpn_forward.11} parent=0 // loop_body
    %s14 = ssub.s32 %s9, 1
    %s15 = ssub.s32 %s9, 2
    %s16 = sadd.s32 %s9, 1
    %s17 = ssub.s32 %s9, %s16
    %p18 = scmp.eq.s32.totalorder %s17, 0
    %s20 = sadd.s32 %s19, 1
    %s21 = scalar_select %p18, %s19, %s20
    %p24 = pneg %p18
    %p25 = scmp.eq.s32.totalorder %s9, 1
    %p26 = por %p24, %p25
    %p27 = scmp.ne.s32.totalorder %s19, %s22
    %p28 = scmp.eq.s32.totalorder %s9, 0
    %p29 = por %p27, %p28
    %p30 = scmp.ne.s32.totalorder %s19, %s22
    %p31 = scmp.eq.s32.totalorder %s14, 1
    %p32 = por %p30, %p31
    %p33 = scmp.ne.s32.totalorder %s22, %s23
    %p34 = scmp.eq.s32.totalorder %s14, 0
    %p35 = por %p33, %p34
    %p36 = scmp.ne.s32.totalorder %s22, %s23
    %p37 = scmp.eq.s32.totalorder %s15, 1
    %p38 = por %p36, %p37
    %p40 = scmp.ne.s32.totalorder %s23, %s39
    %p41 = scmp.eq.s32.totalorder %s15, 0
    %p42 = por %p40, %p41
    %s44 = sadd.s32 %s43, 1
    %p47 = scmp.eq.s32.totalorder %s9, 1
    %p48 = scmp.ne.s32.totalorder %s43, %s45
    %p49 = scmp.eq.s32.totalorder %s9, 0
    %p50 = por %p48, %p49
    %p51 = scmp.ne.s32.totalorder %s43, %s45
    %p52 = scmp.eq.s32.totalorder %s14, 1
    %p53 = por %p51, %p52
    %p54 = scmp.ne.s32.totalorder %s45, %s46
    %p55 = scmp.eq.s32.totalorder %s14, 0
    %p56 = por %p54, %p55
    %p57 = scmp.ne.s32.totalorder %s45, %s46
    %p58 = scmp.eq.s32.totalorder %s15, 1
    %p59 = por %p57, %p58
    %p61 = scmp.ne.s32.totalorder %s46, %s60
    %p62 = scmp.eq.s32.totalorder %s15, 0
    %p63 = por %p61, %p62
    %s65 = sadd.s32 %s64, 1
    %p68 = scmp.eq.s32.totalorder %s9, 1
    %p69 = scmp.ne.s32.totalorder %s64, %s66
    %p70 = scmp.eq.s32.totalorder %s9, 0
    %p71 = por %p69, %p70
    %p72 = scmp.ne.s32.totalorder %s64, %s66
    %p73 = scmp.eq.s32.totalorder %s14, 1
    %p74 = por %p72, %p73
    %p75 = scmp.ne.s32.totalorder %s66, %s67
    %p76 = scmp.eq.s32.totalorder %s14, 0
    %p77 = por %p75, %p76
    %p78 = scmp.ne.s32.totalorder %s66, %s67
    %p79 = scmp.eq.s32.totalorder %s15, 1
    %p80 = por %p78, %p79
    %p82 = scmp.ne.s32.totalorder %s67, %s81
    %p83 = scmp.eq.s32.totalorder %s15, 0
    %p84 = por %p82, %p83
    %s85 = ssub.s32 %s9, %s16
    %p86 = scmp.eq.s32.totalorder %s85, 0
    %s88 = sadd.s32 %s87, 1
    %s89 = scalar_select %p86, %s87, %s88
    %p92 = pneg %p86
    %p93 = scmp.eq.s32.totalorder %s9, 1
    %p94 = por %p92, %p93
    %p95 = scmp.ne.s32.totalorder %s87, %s90
    %p96 = scmp.eq.s32.totalorder %s9, 0
    %p97 = por %p95, %p96
    %p98 = scmp.ne.s32.totalorder %s87, %s90
    %p99 = scmp.eq.s32.totalorder %s14, 1
    %p100 = por %p98, %p99
    %p101 = scmp.ne.s32.totalorder %s90, %s91
    %p102 = scmp.eq.s32.totalorder %s14, 0
    %p103 = por %p101, %p102
    %p104 = scmp.ne.s32.totalorder %s90, %s91
    %p105 = scmp.eq.s32.totalorder %s15, 1
    %p106 = por %p104, %p105
    %p108 = scmp.ne.s32.totalorder %s91, %s107
    %p109 = scmp.eq.s32.totalorder %s15, 0
    %p110 = por %p108, %p109
    %p111 = scmp.le.s32.totalorder 1, %s9
    %p112 = scmp.lt.s32.totalorder %s9, 3
    %p113 = pnand %p111, %p112
    %p114 = pneg %p113
    // Predicated region
    $region9: #{detector_backbone_with_fpn_forward.11} parent=5 // pred_check
      _
    $region10: #{detector_backbone_with_fpn_forward.11} parent=5 // pred_check_branch
      %116 = sbr.rel (%p113) target = $region12
    $region11: #{detector_backbone_with_fpn_forward.11} parent=5 // pred_region
      %s117 = ssub.s32 %s9, 1
      // Predicated region
      $region13: #{detector_backbone_with_fpn_forward.11} parent=11 // pred_check
        %p118 = pneg %p56
      $region14: #{detector_backbone_with_fpn_forward.11} parent=11 // pred_check_branch
        %120 = sbr.rel (%p118) target = $region16
      $region15: #{detector_backbone_with_fpn_forward.11} parent=11 // pred_region
        _
      $region16: #{detector_backbone_with_fpn_forward.11} parent=11 // pred_fallthru
        _
      // Predicated region
      $region17: #{detector_backbone_with_fpn_forward.11} parent=11 // pred_check
        %p121 = pneg %p77
      $region18: #{detector_backbone_with_fpn_forward.11} parent=11 // pred_check_branch
        %123 = sbr.rel (%p121) target = $region20
      $region19: #{detector_backbone_with_fpn_forward.11} parent=11 // pred_region
        _
      $region20: #{detector_backbone_with_fpn_forward.11} parent=11 // pred_fallthru
        _
    $region12: #{detector_backbone_with_fpn_forward.11} parent=5 // pred_fallthru
      _
    %p124 = scmp.lt.s32.totalorder %s9, 2
    // Predicated region
    $region21: #{detector_backbone_with_fpn_forward.11} parent=5 // pred_check
      %p125 = pneg %p124
    $region22: #{detector_backbone_with_fpn_forward.11} parent=5 // pred_check_branch
      %127 = sbr.rel (%p125) target = $region24
    $region23: #{detector_backbone_with_fpn_forward.11} parent=5 // pred_region
      // Predicated region
      $region25: #{detector_backbone_with_fpn_forward.11} parent=23 // pred_check
        %p128 = pneg %p29
      $region26: #{detector_backbone_with_fpn_forward.11} parent=23 // pred_check_branch
        %130 = sbr.rel (%p128) target = $region28
      $region27: #{detector_backbone_with_fpn_forward.11} parent=23 // pred_region
        %p131 = scmp.lt.s32.totalorder %s9, 1
        %s132 = scalar_select %p131, %s9, 1
        %s133 = smul.addr %s132, 2
        %s134 = smul.addr %s133, 4
        %s135 = scalar_lea.vmem %s0, %s134
      $region28: #{detector_backbone_with_fpn_forward.11} parent=23 // pred_fallthru
        _
    $region24: #{detector_backbone_with_fpn_forward.11} parent=5 // pred_fallthru
      _
    %p136 = scmp.le.s32.totalorder 1, %s9
    %p137 = scmp.lt.s32.totalorder %s9, 3
    %p138 = pnand %p136, %p137
    %p139 = pneg %p138
    // Predicated region
    $region29: #{detector_backbone_with_fpn_forward.11} parent=5 // pred_check
      _
    $region30: #{detector_backbone_with_fpn_forward.11} parent=5 // pred_check_branch
      %141 = sbr.rel (%p138) target = $region32
    $region31: #{detector_backbone_with_fpn_forward.11} parent=5 // pred_region
      %s142 = ssub.s32 %s9, 1
      %p143 = scmp.lt.s32.totalorder %s14, 1
      %s144 = scalar_select %p143, %s14, 1
      %s145 = smul.addr %s144, 2
      %s146 = smul.addr %s145, 4
      %s147 = scalar_lea.vmem %s0, %s146
      %p148 = pneg %p35
      %p149 = pneg %p32
      %p150 = pneg %p56
      %p151 = pneg %p53
      %p152 = pneg %p77
      %p153 = pneg %p74
      %p154 = pneg %p103
      %p155 = pneg %p100
      %p156 = scmp.lt.s32.totalorder %s14, 1
      %s157 = scalar_select %p156, %s14, 1
      %s158 = smul.addr %s157, 8
      %s159 = scalar_lea.vmem %s3, %s158
      %p160 = scmp.lt.s32.totalorder %s14, 1
      %s161 = scalar_select %p160, %s14, 1
      %s162 = smul.addr %s161, 2
      %s163 = smul.addr %s162, 4
      %s164 = scalar_lea.vmem %s0, %s163
      %p165 = scmp.lt.s32.totalorder %s14, 1
      %s166 = scalar_select %p165, %s14, 1
      %s167 = smul.addr %s166, 8
      %s168 = scalar_lea.vmem %s3, %s167
      %v170 = vld [vmem:[%s164] sm:$0x7]
      %v171 = vld [vmem:[%s1] sm:$0xf]
      %v172 = vld [vmem:[%s1 + $0x4] sm:$0xf]
      %v173 = vld [vmem:[%s1 + $0x8] sm:$0xf]
      %v174 = vld [vmem:[%s1 + $0xc] sm:$0xf]
      %v175 = vld [vmem:[%s1 + $0x10] sm:$0xf]
      %v176 = vld [vmem:[%s1 + $0x14] sm:$0xf]
      %v177 = vld [vmem:[%s1 + $0x18] sm:$0xf]
      %v178 = vld [vmem:[%s1 + $0x1c] sm:$0xf]
      %v179 = vld [vmem:[%s164] sm:$0xf]
      %s180 = scalar_lea.vmem %s1, 32
      %v181 = vld [vmem:[%s180] sm:$0xf]
      %v182 = vld [vmem:[%s180 + $0x4] sm:$0xf]
      %v183 = vld [vmem:[%s180 + $0x8] sm:$0xf]
      %v184 = vld [vmem:[%s180 + $0xc] sm:$0xf]
      %v185 = vld [vmem:[%s180 + $0x10] sm:$0xf]
      %v186 = vld [vmem:[%s180 + $0x14] sm:$0xf]
      %v187 = vld [vmem:[%s180 + $0x18] sm:$0xf]
      %v188 = vld [vmem:[%s180 + $0x1c] sm:$0xf]
      %v190 = vunpack.c.l.b16 %v179
      %v191 = vpack.c.b16 %v190, %v190
      %v193 = vshrl.u32 %v191, 16
      %v195 = vshll.u32 %v191, 16
      %v197 = vrot.slane %v195, 1
      %v198 = vor.u32 %v193, %v197
      %v207 = vunpack.c.l.b16 %v181
      %v208 = vunpack.c.l.b16 %v182
      %v209 = vunpack.c.l.b16 %v183
      %v210 = vunpack.c.l.b16 %v184
      %v211 = vunpack.c.l.b16 %v185
      %v212 = vunpack.c.l.b16 %v186
      %v213 = vunpack.c.l.b16 %v187
      %v214 = vunpack.c.l.b16 %v188
      %v215 = vpack.c.b16 %v208, %v207
      %v216 = vpack.c.b16 %v210, %v209
      %v217 = vpack.c.b16 %v212, %v211
      %v218 = vpack.c.b16 %v214, %v213
      %vm223 = vcmask 523264
      %v225 = vsel %vm223, %v198, 0
      %227 = vmatprep.subr.bf16.mxu0 0
      %228 = vmatpush1.bf16.msra.mxu0 0
      %229 = vmatprep.subr.bf16.mxu0 0
      %230 = vmatpush1.bf16.msra.mxu0 0
      %231 = vmatprep.subr.bf16.mxu0 0
      %232 = vmatpush1.bf16.msra.mxu0 0
      %233 = vmatprep.subr.bf16.mxu0 0
      %234 = vmatpush1.bf16.msra.mxu0 0
      %235 = vmatprep.subr.bf16.mxu0 0
      %236 = vmatpush1.bf16.msra.mxu0 %v218
      %237 = vmatprep.subr.bf16.mxu0 0
      %238 = vmatpush1.bf16.msra.mxu0 %v217
      %239 = vmatprep.subr.bf16.mxu0 0
      %240 = vmatpush1.bf16.msra.mxu0 %v216
      %241 = vmatprep.subr.bf16.mxu0 0
      %242 = vmatpush1.bf16.msra.mxu0 %v215
      %243 = vmatprep.subr.bf16.mxu0 0
      %244 = vmatpush2.bf16.msra.mxu0 0
      %245 = vmatprep.subr.bf16.mxu0 0
      %246 = vmatpush2.bf16.msra.mxu0 0
      %247 = vmatprep.subr.bf16.mxu0 0
      %248 = vmatpush2.bf16.msra.mxu0 0
      %249 = vmatprep.subr.bf16.mxu0 0
      %250 = vmatpush2.bf16.msra.mxu0 0
      %251 = vmatprep.subr.bf16.mxu0 0
      %252 = vmatpush2.bf16.msra.mxu0 0
      %253 = vmatprep.subr.bf16.mxu0 0
      %254 = vmatpush2.bf16.msra.mxu0 0
      %255 = vmatprep.subr.bf16.mxu0 0
      %256 = vmatpush2.bf16.msra.mxu0 0
      %257 = vmatprep.subr.bf16.mxu0 0
      %258 = vmatpush2.bf16.msra.mxu0 0
      %259 = vmatprep.mubr.bf16.mxu0 0
      %260 = vmatmul.mubr.bf16.gmra.mxu0 %v225
      %v261 = vpop.f32.mrf.mxu0
      %v262 = vadd.f32 0.0, %v261
      %v263 = vpop.f32.mrf.mxu0
      %v264 = vpop.f32.mrf.mxu0
      %v265 = vpop.f32.mrf.mxu0
      %266 = vdwg.mxu0
      %v275 = vunpack.c.l.b16 %v171
      %v276 = vunpack.c.l.b16 %v172
      %v277 = vunpack.c.l.b16 %v173
      %v278 = vunpack.c.l.b16 %v174
      %v279 = vunpack.c.l.b16 %v175
      %v280 = vunpack.c.l.b16 %v176
      %v281 = vunpack.c.l.b16 %v177
      %v282 = vunpack.c.l.b16 %v178
      %v283 = vpack.c.b16 %v276, %v275
      %v284 = vpack.c.b16 %v278, %v277
      %v285 = vpack.c.b16 %v280, %v279
      %v286 = vpack.c.b16 %v282, %v281
      %v292 = vsel %vm223, %v170, 0
      %294 = vmatprep.subr.bf16.mxu0 0
      %295 = vmatpush1.bf16.msra.mxu0 0
      %296 = vmatprep.subr.bf16.mxu0 0
      %297 = vmatpush1.bf16.msra.mxu0 0
      %298 = vmatprep.subr.bf16.mxu0 0
      %299 = vmatpush1.bf16.msra.mxu0 0
      %300 = vmatprep.subr.bf16.mxu0 0
      %301 = vmatpush1.bf16.msra.mxu0 0
      %302 = vmatprep.subr.bf16.mxu0 0
      %303 = vmatpush1.bf16.msra.mxu0 %v286
      %304 = vmatprep.subr.bf16.mxu0 0
      %305 = vmatpush1.bf16.msra.mxu0 %v285
      %306 = vmatprep.subr.bf16.mxu0 0
      %307 = vmatpush1.bf16.msra.mxu0 %v284
      %308 = vmatprep.subr.bf16.mxu0 0
      %309 = vmatpush1.bf16.msra.mxu0 %v283
      %310 = vmatprep.subr.bf16.mxu0 0
      %311 = vmatpush2.bf16.msra.mxu0 0
      %312 = vmatprep.subr.bf16.mxu0 0
      %313 = vmatpush2.bf16.msra.mxu0 0
      %314 = vmatprep.subr.bf16.mxu0 0
      %315 = vmatpush2.bf16.msra.mxu0 0
      %316 = vmatprep.subr.bf16.mxu0 0
      %317 = vmatpush2.bf16.msra.mxu0 0
      %318 = vmatprep.subr.bf16.mxu0 0
      %319 = vmatpush2.bf16.msra.mxu0 0
      %320 = vmatprep.subr.bf16.mxu0 0
      %321 = vmatpush2.bf16.msra.mxu0 0
      %322 = vmatprep.subr.bf16.mxu0 0
      %323 = vmatpush2.bf16.msra.mxu0 0
      %324 = vmatprep.subr.bf16.mxu0 0
      %325 = vmatpush2.bf16.msra.mxu0 0
      %326 = vmatprep.mubr.bf16.mxu0 0
      %327 = vmatmul.mubr.bf16.gmra.mxu0 %v292
      %v328 = vpop.f32.mrf.mxu0
      %v329 = vadd.f32 %v262, %v328
      %v330 = vpop.f32.mrf.mxu0
      %v331 = vpop.f32.mrf.mxu0
      %v332 = vpop.f32.mrf.mxu0
      %333 = vdwg.mxu0
      %v334 = vld [vmem:[%s164] sm:$0xe]
      %s335 = scalar_lea.vmem %s1, 64
      %v336 = vld [vmem:[%s335] sm:$0xf]
      %v337 = vld [vmem:[%s335 + $0x4] sm:$0xf]
      %v338 = vld [vmem:[%s335 + $0x8] sm:$0xf]
      %v339 = vld [vmem:[%s335 + $0xc] sm:$0xf]
      %v340 = vld [vmem:[%s335 + $0x10] sm:$0xf]
      %v341 = vld [vmem:[%s335 + $0x14] sm:$0xf]
      %v342 = vld [vmem:[%s335 + $0x18] sm:$0xf]
      %v343 = vld [vmem:[%s335 + $0x1c] sm:$0xf]
      %v345 = vunpack.c.l.b16 %v334
      %v346 = vpack.c.b16 %v345, %v345
      %v347 = vrot.slane %v346, 1
      %v356 = vunpack.c.l.b16 %v336
      %v357 = vunpack.c.l.b16 %v337
      %v358 = vunpack.c.l.b16 %v338
      %v359 = vunpack.c.l.b16 %v339
      %v360 = vunpack.c.l.b16 %v340
      %v361 = vunpack.c.l.b16 %v341
      %v362 = vunpack.c.l.b16 %v342
      %v363 = vunpack.c.l.b16 %v343
      %v364 = vpack.c.b16 %v357, %v356
      %v365 = vpack.c.b16 %v359, %v358
      %v366 = vpack.c.b16 %v361, %v360
      %v367 = vpack.c.b16 %v363, %v362
      %v373 = vsel %vm223, %v347, 0
      %375 = vmatprep.subr.bf16.mxu0 0
      %376 = vmatpush1.bf16.msra.mxu0 0
      %377 = vmatprep.subr.bf16.mxu0 0
      %378 = vmatpush1.bf16.msra.mxu0 0
      %379 = vmatprep.subr.bf16.mxu0 0
      %380 = vmatpush1.bf16.msra.mxu0 0
      %381 = vmatprep.subr.bf16.mxu0 0
      %382 = vmatpush1.bf16.msra.mxu0 0
      %383 = vmatprep.subr.bf16.mxu0 0
      %384 = vmatpush1.bf16.msra.mxu0 %v367
      %385 = vmatprep.subr.bf16.mxu0 0
      %386 = vmatpush1.bf16.msra.mxu0 %v366
      %387 = vmatprep.subr.bf16.mxu0 0
      %388 = vmatpush1.bf16.msra.mxu0 %v365
      %389 = vmatprep.subr.bf16.mxu0 0
      %390 = vmatpush1.bf16.msra.mxu0 %v364
      %391 = vmatprep.subr.bf16.mxu0 0
      %392 = vmatpush2.bf16.msra.mxu0 0
      %393 = vmatprep.subr.bf16.mxu0 0
      %394 = vmatpush2.bf16.msra.mxu0 0
      %395 = vmatprep.subr.bf16.mxu0 0
      %396 = vmatpush2.bf16.msra.mxu0 0
      %397 = vmatprep.subr.bf16.mxu0 0
      %398 = vmatpush2.bf16.msra.mxu0 0
      %399 = vmatprep.subr.bf16.mxu0 0
      %400 = vmatpush2.bf16.msra.mxu0 0
      %401 = vmatprep.subr.bf16.mxu0 0
      %402 = vmatpush2.bf16.msra.mxu0 0
      %403 = vmatprep.subr.bf16.mxu0 0
      %404 = vmatpush2.bf16.msra.mxu0 0
      %405 = vmatprep.subr.bf16.mxu0 0
      %406 = vmatpush2.bf16.msra.mxu0 0
      %407 = vmatprep.mubr.bf16.mxu0 0
      %408 = vmatmul.mubr.bf16.gmra.mxu0 %v373
      %v409 = vpop.f32.mrf.mxu0
      %v410 = vadd.f32 0.0, %v409
      %v411 = vpop.f32.mrf.mxu0
      %v412 = vpop.f32.mrf.mxu0
      %v413 = vpop.f32.mrf.mxu0
      %414 = vdwg.mxu0
      %v415 = vadd.f32 %v329, %v410
      %v416 = vld [vmem:[%s164] sm:$0xc]
      %v417 = vld [vmem:[%s164 + $0x4] sm:$0x1]
      %s418 = scalar_lea.vmem %s1, 96
      %v419 = vld [vmem:[%s418] sm:$0xf]
      %v420 = vld [vmem:[%s418 + $0x4] sm:$0xf]
      %v421 = vld [vmem:[%s418 + $0x8] sm:$0xf]
      %v422 = vld [vmem:[%s418 + $0xc] sm:$0xf]
      %v423 = vld [vmem:[%s418 + $0x10] sm:$0xf]
      %v424 = vld [vmem:[%s418 + $0x14] sm:$0xf]
      %v425 = vld [vmem:[%s418 + $0x18] sm:$0xf]
      %v426 = vld [vmem:[%s418 + $0x1c] sm:$0xf]
      %v429 = vunpack.c.l.b16 %v416
      %v430 = vunpack.c.l.b16 %v417
      %v431 = vpack.c.b16 %v430, %v429
      %v432 = vrot.slane %v431, 2
      %v441 = vunpack.c.l.b16 %v419
      %v442 = vunpack.c.l.b16 %v420
      %v443 = vunpack.c.l.b16 %v421
      %v444 = vunpack.c.l.b16 %v422
      %v445 = vunpack.c.l.b16 %v423
      %v446 = vunpack.c.l.b16 %v424
      %v447 = vunpack.c.l.b16 %v425
      %v448 = vunpack.c.l.b16 %v426
      %v449 = vpack.c.b16 %v442, %v441
      %v450 = vpack.c.b16 %v444, %v443
      %v451 = vpack.c.b16 %v446, %v445
      %v452 = vpack.c.b16 %v448, %v447
      %v458 = vsel %vm223, %v432, 0
      %460 = vmatprep.subr.bf16.mxu0 0
      %461 = vmatpush1.bf16.msra.mxu0 0
      %462 = vmatprep.subr.bf16.mxu0 0
      %463 = vmatpush1.bf16.msra.mxu0 0
      %464 = vmatprep.subr.bf16.mxu0 0
      %465 = vmatpush1.bf16.msra.mxu0 0
      %466 = vmatprep.subr.bf16.mxu0 0
      %467 = vmatpush1.bf16.msra.mxu0 0
      %468 = vmatprep.subr.bf16.mxu0 0
      %469 = vmatpush1.bf16.msra.mxu0 %v452
      %470 = vmatprep.subr.bf16.mxu0 0
      %471 = vmatpush1.bf16.msra.mxu0 %v451
      %472 = vmatprep.subr.bf16.mxu0 0
      %473 = vmatpush1.bf16.msra.mxu0 %v450
      %474 = vmatprep.subr.bf16.mxu0 0
      %475 = vmatpush1.bf16.msra.mxu0 %v449
      %476 = vmatprep.subr.bf16.mxu0 0
      %477 = vmatpush2.bf16.msra.mxu0 0
      %478 = vmatprep.subr.bf16.mxu0 0
      %479 = vmatpush2.bf16.msra.mxu0 0
      %480 = vmatprep.subr.bf16.mxu0 0
      %481 = vmatpush2.bf16.msra.mxu0 0
      %482 = vmatprep.subr.bf16.mxu0 0
      %483 = vmatpush2.bf16.msra.mxu0 0
      %484 = vmatprep.subr.bf16.mxu0 0
      %485 = vmatpush2.bf16.msra.mxu0 0
      %486 = vmatprep.subr.bf16.mxu0 0
      %487 = vmatpush2.bf16.msra.mxu0 0
      %488 = vmatprep.subr.bf16.mxu0 0
      %489 = vmatpush2.bf16.msra.mxu0 0
      %490 = vmatprep.subr.bf16.mxu0 0
      %491 = vmatpush2.bf16.msra.mxu0 0
      %492 = vmatprep.mubr.bf16.mxu0 0
      %493 = vmatmul.mubr.bf16.gmra.mxu0 %v458
      %v494 = vpop.f32.mrf.mxu0
      %v495 = vadd.f32 0.0, %v494
      %v496 = vpop.f32.mrf.mxu0
      %v497 = vpop.f32.mrf.mxu0
      %v498 = vpop.f32.mrf.mxu0
      %499 = vdwg.mxu0
      %v500 = vadd.f32 %v415, %v495
      %v501 = vld [vmem:[%s164 + $0x4] sm:$0x3]
      %s502 = scalar_lea.vmem %s1, 128
      %v503 = vld [vmem:[%s502] sm:$0xf]
      %v504 = vld [vmem:[%s502 + $0x4] sm:$0xf]
      %v505 = vld [vmem:[%s502 + $0x8] sm:$0xf]
      %v506 = vld [vmem:[%s502 + $0xc] sm:$0xf]
      %v507 = vld [vmem:[%s502 + $0x10] sm:$0xf]
      %v508 = vld [vmem:[%s502 + $0x14] sm:$0xf]
      %v509 = vld [vmem:[%s502 + $0x18] sm:$0xf]
      %v510 = vld [vmem:[%s502 + $0x1c] sm:$0xf]
      %v512 = vunpack.c.l.b16 %v501
      %v513 = vpack.c.b16 %v512, %v429
      %v515 = vshrl.u32 %v513, 16
      %v517 = vrot.slane %v515, 2
      %v518 = vshll.u32 %v513, 16
      %v520 = vrot.slane %v518, 3
      %v521 = vor.u32 %v517, %v520
      %v530 = vunpack.c.l.b16 %v503
      %v531 = vunpack.c.l.b16 %v504
      %v532 = vunpack.c.l.b16 %v505
      %v533 = vunpack.c.l.b16 %v506
      %v534 = vunpack.c.l.b16 %v507
      %v535 = vunpack.c.l.b16 %v508
      %v536 = vunpack.c.l.b16 %v509
      %v537 = vunpack.c.l.b16 %v510
      %v538 = vpack.c.b16 %v531, %v530
      %v539 = vpack.c.b16 %v533, %v532
      %v540 = vpack.c.b16 %v535, %v534
      %v541 = vpack.c.b16 %v537, %v536
      %v547 = vsel %vm223, %v521, 0
      %549 = vmatprep.subr.bf16.mxu0 0
      %550 = vmatpush1.bf16.msra.mxu0 0
      %551 = vmatprep.subr.bf16.mxu0 0
      %552 = vmatpush1.bf16.msra.mxu0 0
      %553 = vmatprep.subr.bf16.mxu0 0
      %554 = vmatpush1.bf16.msra.mxu0 0
      %555 = vmatprep.subr.bf16.mxu0 0
      %556 = vmatpush1.bf16.msra.mxu0 0
      %557 = vmatprep.subr.bf16.mxu0 0
      %558 = vmatpush1.bf16.msra.mxu0 %v541
      %559 = vmatprep.subr.bf16.mxu0 0
      %560 = vmatpush1.bf16.msra.mxu0 %v540
      %561 = vmatprep.subr.bf16.mxu0 0
      %562 = vmatpush1.bf16.msra.mxu0 %v539
      %563 = vmatprep.subr.bf16.mxu0 0
      %564 = vmatpush1.bf16.msra.mxu0 %v538
      %565 = vmatprep.subr.bf16.mxu0 0
      %566 = vmatpush2.bf16.msra.mxu0 0
      %567 = vmatprep.subr.bf16.mxu0 0
      %568 = vmatpush2.bf16.msra.mxu0 0
      %569 = vmatprep.subr.bf16.mxu0 0
      %570 = vmatpush2.bf16.msra.mxu0 0
      %571 = vmatprep.subr.bf16.mxu0 0
      %572 = vmatpush2.bf16.msra.mxu0 0
      %573 = vmatprep.subr.bf16.mxu0 0
      %574 = vmatpush2.bf16.msra.mxu0 0
      %575 = vmatprep.subr.bf16.mxu0 0
      %576 = vmatpush2.bf16.msra.mxu0 0
      %577 = vmatprep.subr.bf16.mxu0 0
      %578 = vmatpush2.bf16.msra.mxu0 0
      %579 = vmatprep.subr.bf16.mxu0 0
      %580 = vmatpush2.bf16.msra.mxu0 0
      %581 = vmatprep.mubr.bf16.mxu0 0
      %582 = vmatmul.mubr.bf16.gmra.mxu0 %v547
      %v583 = vpop.f32.mrf.mxu0
      %v584 = vadd.f32 0.0, %v583
      %v585 = vpop.f32.mrf.mxu0
      %v586 = vpop.f32.mrf.mxu0
      %v587 = vpop.f32.mrf.mxu0
      %588 = vdwg.mxu0
      %v589 = vadd.f32 %v500, %v584
      %v590 = vld [vmem:[%s164] sm:$0x8]
      %s591 = scalar_lea.vmem %s1, 160
      %v592 = vld [vmem:[%s591] sm:$0xf]
      %v593 = vld [vmem:[%s591 + $0x4] sm:$0xf]
      %v594 = vld [vmem:[%s591 + $0x8] sm:$0xf]
      %v595 = vld [vmem:[%s591 + $0xc] sm:$0xf]
      %v596 = vld [vmem:[%s591 + $0x10] sm:$0xf]
      %v597 = vld [vmem:[%s591 + $0x14] sm:$0xf]
      %v598 = vld [vmem:[%s591 + $0x18] sm:$0xf]
      %v599 = vld [vmem:[%s591 + $0x1c] sm:$0xf]
      %v601 = vunpack.c.l.b16 %v590
      %v602 = vpack.c.b16 %v512, %v601
      %v603 = vrot.slane %v602, 3
      %v612 = vunpack.c.l.b16 %v592
      %v613 = vunpack.c.l.b16 %v593
      %v614 = vunpack.c.l.b16 %v594
      %v615 = vunpack.c.l.b16 %v595
      %v616 = vunpack.c.l.b16 %v596
      %v617 = vunpack.c.l.b16 %v597
      %v618 = vunpack.c.l.b16 %v598
      %v619 = vunpack.c.l.b16 %v599
      %v620 = vpack.c.b16 %v613, %v612
      %v621 = vpack.c.b16 %v615, %v614
      %v622 = vpack.c.b16 %v617, %v616
      %v623 = vpack.c.b16 %v619, %v618
      %v629 = vsel %vm223, %v603, 0
      %631 = vmatprep.subr.bf16.mxu0 0
      %632 = vmatpush1.bf16.msra.mxu0 0
      %633 = vmatprep.subr.bf16.mxu0 0
      %634 = vmatpush1.bf16.msra.mxu0 0
      %635 = vmatprep.subr.bf16.mxu0 0
      %636 = vmatpush1.bf16.msra.mxu0 0
      %637 = vmatprep.subr.bf16.mxu0 0
      %638 = vmatpush1.bf16.msra.mxu0 0
      %639 = vmatprep.subr.bf16.mxu0 0
      %640 = vmatpush1.bf16.msra.mxu0 %v623
      %641 = vmatprep.subr.bf16.mxu0 0
      %642 = vmatpush1.bf16.msra.mxu0 %v622
      %643 = vmatprep.subr.bf16.mxu0 0
      %644 = vmatpush1.bf16.msra.mxu0 %v621
      %645 = vmatprep.subr.bf16.mxu0 0
      %646 = vmatpush1.bf16.msra.mxu0 %v620
      %647 = vmatprep.subr.bf16.mxu0 0
      %648 = vmatpush2.bf16.msra.mxu0 0
      %649 = vmatprep.subr.bf16.mxu0 0
      %650 = vmatpush2.bf16.msra.mxu0 0
      %651 = vmatprep.subr.bf16.mxu0 0
      %652 = vmatpush2.bf16.msra.mxu0 0
      %653 = vmatprep.subr.bf16.mxu0 0
      %654 = vmatpush2.bf16.msra.mxu0 0
      %655 = vmatprep.subr.bf16.mxu0 0
      %656 = vmatpush2.bf16.msra.mxu0 0
      %657 = vmatprep.subr.bf16.mxu0 0
      %658 = vmatpush2.bf16.msra.mxu0 0
      %659 = vmatprep.subr.bf16.mxu0 0
      %660 = vmatpush2.bf16.msra.mxu0 0
      %661 = vmatprep.subr.bf16.mxu0 0
      %662 = vmatpush2.bf16.msra.mxu0 0
      %663 = vmatprep.mubr.bf16.mxu0 0
      %664 = vmatmul.mubr.bf16.gmra.mxu0 %v629
      %v665 = vpop.f32.mrf.mxu0
      %v666 = vadd.f32 0.0, %v665
      %v667 = vpop.f32.mrf.mxu0
      %v668 = vpop.f32.mrf.mxu0
      %v669 = vpop.f32.mrf.mxu0
      %670 = vdwg.mxu0
      %v671 = vadd.f32 %v589, %v666
      %v672 = vld [vmem:[%s164 + $0x4] sm:$0x7]
      %s673 = scalar_lea.vmem %s1, 192
      %v674 = vld [vmem:[%s673] sm:$0xf]
      %v675 = vld [vmem:[%s673 + $0x4] sm:$0xf]
      %v676 = vld [vmem:[%s673 + $0x8] sm:$0xf]
      %v677 = vld [vmem:[%s673 + $0xc] sm:$0xf]
      %v678 = vld [vmem:[%s673 + $0x10] sm:$0xf]
      %v679 = vld [vmem:[%s673 + $0x14] sm:$0xf]
      %v680 = vld [vmem:[%s673 + $0x18] sm:$0xf]
      %v681 = vld [vmem:[%s673 + $0x1c] sm:$0xf]
      %v690 = vunpack.c.l.b16 %v674
      %v691 = vunpack.c.l.b16 %v675
      %v692 = vunpack.c.l.b16 %v676
      %v693 = vunpack.c.l.b16 %v677
      %v694 = vunpack.c.l.b16 %v678
      %v695 = vunpack.c.l.b16 %v679
      %v696 = vunpack.c.l.b16 %v680
      %v697 = vunpack.c.l.b16 %v681
      %v698 = vpack.c.b16 %v691, %v690
      %v699 = vpack.c.b16 %v693, %v692
      %v700 = vpack.c.b16 %v695, %v694
      %v701 = vpack.c.b16 %v697, %v696
      %v707 = vsel %vm223, %v672, 0
      %709 = vmatprep.subr.bf16.mxu0 0
      %710 = vmatpush1.bf16.msra.mxu0 0
      %711 = vmatprep.subr.bf16.mxu0 0
      %712 = vmatpush1.bf16.msra.mxu0 0
      %713 = vmatprep.subr.bf16.mxu0 0
      %714 = vmatpush1.bf16.msra.mxu0 0
      %715 = vmatprep.subr.bf16.mxu0 0
      %716 = vmatpush1.bf16.msra.mxu0 0
      %717 = vmatprep.subr.bf16.mxu0 0
      %718 = vmatpush1.bf16.msra.mxu0 %v701
      %719 = vmatprep.subr.bf16.mxu0 0
      %720 = vmatpush1.bf16.msra.mxu0 %v700
      %721 = vmatprep.subr.bf16.mxu0 0
      %722 = vmatpush1.bf16.msra.mxu0 %v699
      %723 = vmatprep.subr.bf16.mxu0 0
      %724 = vmatpush1.bf16.msra.mxu0 %v698
      %725 = vmatprep.subr.bf16.mxu0 0
      %726 = vmatpush2.bf16.msra.mxu0 0
      %727 = vmatprep.subr.bf16.mxu0 0
      %728 = vmatpush2.bf16.msra.mxu0 0
      %729 = vmatprep.subr.bf16.mxu0 0
      %730 = vmatpush2.bf16.msra.mxu0 0
      %731 = vmatprep.subr.bf16.mxu0 0
      %732 = vmatpush2.bf16.msra.mxu0 0
      %733 = vmatprep.subr.bf16.mxu0 0
      %734 = vmatpush2.bf16.msra.mxu0 0
      %735 = vmatprep.subr.bf16.mxu0 0
      %736 = vmatpush2.bf16.msra.mxu0 0
      %737 = vmatprep.subr.bf16.mxu0 0
      %738 = vmatpush2.bf16.msra.mxu0 0
      %739 = vmatprep.subr.bf16.mxu0 0
      %740 = vmatpush2.bf16.msra.mxu0 0
      %741 = vmatprep.mubr.bf16.mxu0 0
      %742 = vmatmul.mubr.bf16.gmra.mxu0 %v707
      %v743 = vpop.f32.mrf.mxu0
      %v744 = vadd.f32 0.0, %v743
      %v745 = vpop.f32.mrf.mxu0
      %v746 = vpop.f32.mrf.mxu0
      %v747 = vpop.f32.mrf.mxu0
      %748 = vdwg.mxu0
      %v749 = vadd.f32 %v671, %v744
      %v750 = vld [vmem:[%s164 + $0x4] sm:$0xf]
      %s751 = scalar_lea.vmem %s1, 224
      %v752 = vld [vmem:[%s751] sm:$0xf]
      %v753 = vld [vmem:[%s751 + $0x4] sm:$0xf]
      %v754 = vld [vmem:[%s751 + $0x8] sm:$0xf]
      %v755 = vld [vmem:[%s751 + $0xc] sm:$0xf]
      %v756 = vld [vmem:[%s751 + $0x10] sm:$0xf]
      %v757 = vld [vmem:[%s751 + $0x14] sm:$0xf]
      %v758 = vld [vmem:[%s751 + $0x18] sm:$0xf]
      %v759 = vld [vmem:[%s751 + $0x1c] sm:$0xf]
      %v761 = vunpack.c.l.b16 %v750
      %v762 = vpack.c.b16 %v761, %v761
      %v764 = vshrl.u32 %v762, 16
      %v766 = vshll.u32 %v762, 16
      %v768 = vrot.slane %v766, 1
      %v769 = vor.u32 %v764, %v768
      %v778 = vunpack.c.l.b16 %v752
      %v779 = vunpack.c.l.b16 %v753
      %v780 = vunpack.c.l.b16 %v754
      %v781 = vunpack.c.l.b16 %v755
      %v782 = vunpack.c.l.b16 %v756
      %v783 = vunpack.c.l.b16 %v757
      %v784 = vunpack.c.l.b16 %v758
      %v785 = vunpack.c.l.b16 %v759
      %v786 = vpack.c.b16 %v779, %v778
      %v787 = vpack.c.b16 %v781, %v780
      %v788 = vpack.c.b16 %v783, %v782
      %v789 = vpack.c.b16 %v785, %v784
      %v795 = vsel %vm223, %v769, 0
      %797 = vmatprep.subr.bf16.mxu0 0
      %798 = vmatpush1.bf16.msra.mxu0 0
      %799 = vmatprep.subr.bf16.mxu0 0
      %800 = vmatpush1.bf16.msra.mxu0 0
      %801 = vmatprep.subr.bf16.mxu0 0
      %802 = vmatpush1.bf16.msra.mxu0 0
      %803 = vmatprep.subr.bf16.mxu0 0
      %804 = vmatpush1.bf16.msra.mxu0 0
      %805 = vmatprep.subr.bf16.mxu0 0
      %806 = vmatpush1.bf16.msra.mxu0 %v789
      %807 = vmatprep.subr.bf16.mxu0 0
      %808 = vmatpush1.bf16.msra.mxu0 %v788
      %809 = vmatprep.subr.bf16.mxu0 0
      %810 = vmatpush1.bf16.msra.mxu0 %v787
      %811 = vmatprep.subr.bf16.mxu0 0
      %812 = vmatpush1.bf16.msra.mxu0 %v786
      %813 = vmatprep.subr.bf16.mxu0 0
      %814 = vmatpush2.bf16.msra.mxu0 0
      %815 = vmatprep.subr.bf16.mxu0 0
      %816 = vmatpush2.bf16.msra.mxu0 0
      %817 = vmatprep.subr.bf16.mxu0 0
      %818 = vmatpush2.bf16.msra.mxu0 0
      %819 = vmatprep.subr.bf16.mxu0 0
      %820 = vmatpush2.bf16.msra.mxu0 0
      %821 = vmatprep.subr.bf16.mxu0 0
      %822 = vmatpush2.bf16.msra.mxu0 0
      %823 = vmatprep.subr.bf16.mxu0 0
      %824 = vmatpush2.bf16.msra.mxu0 0
      %825 = vmatprep.subr.bf16.mxu0 0
      %826 = vmatpush2.bf16.msra.mxu0 0
      %827 = vmatprep.subr.bf16.mxu0 0
      %828 = vmatpush2.bf16.msra.mxu0 0
      %829 = vmatprep.mubr.bf16.mxu0 0
      %830 = vmatmul.mubr.bf16.gmra.mxu0 %v795
      %v831 = vpop.f32.mrf.mxu0
      %v832 = vadd.f32 0.0, %v831
      %v833 = vpop.f32.mrf.mxu0
      %v834 = vpop.f32.mrf.mxu0
      %v835 = vpop.f32.mrf.mxu0
      %836 = vdwg.mxu0
      %v837 = vadd.f32 %v749, %v832
      %v838 = vld [vmem:[%s164 + $0x4] sm:$0xe]
      %s839 = scalar_lea.vmem %s1, 256
      %v840 = vld [vmem:[%s839] sm:$0xf]
      %v841 = vld [vmem:[%s839 + $0x4] sm:$0xf]
      %v842 = vld [vmem:[%s839 + $0x8] sm:$0xf]
      %v843 = vld [vmem:[%s839 + $0xc] sm:$0xf]
      %v844 = vld [vmem:[%s839 + $0x10] sm:$0xf]
      %v845 = vld [vmem:[%s839 + $0x14] sm:$0xf]
      %v846 = vld [vmem:[%s839 + $0x18] sm:$0xf]
      %v847 = vld [vmem:[%s839 + $0x1c] sm:$0xf]
      %v849 = vunpack.c.l.b16 %v838
      %v850 = vpack.c.b16 %v849, %v849
      %v851 = vrot.slane %v850, 1
      %v860 = vunpack.c.l.b16 %v840
      %v861 = vunpack.c.l.b16 %v841
      %v862 = vunpack.c.l.b16 %v842
      %v863 = vunpack.c.l.b16 %v843
      %v864 = vunpack.c.l.b16 %v844
      %v865 = vunpack.c.l.b16 %v845
      %v866 = vunpack.c.l.b16 %v846
      %v867 = vunpack.c.l.b16 %v847
      %v868 = vpack.c.b16 %v861, %v860
      %v869 = vpack.c.b16 %v863, %v862
      %v870 = vpack.c.b16 %v865, %v864
      %v871 = vpack.c.b16 %v867, %v866
      %v877 = vsel %vm223, %v851, 0
      %879 = vmatprep.subr.bf16.mxu0 0
      %880 = vmatpush1.bf16.msra.mxu0 0
      %881 = vmatprep.subr.bf16.mxu0 0
      %882 = vmatpush1.bf16.msra.mxu0 0
      %883 = vmatprep.subr.bf16.mxu0 0
      %884 = vmatpush1.bf16.msra.mxu0 0
      %885 = vmatprep.subr.bf16.mxu0 0
      %886 = vmatpush1.bf16.msra.mxu0 0
      %887 = vmatprep.subr.bf16.mxu0 0
      %888 = vmatpush1.bf16.msra.mxu0 %v871
      %889 = vmatprep.subr.bf16.mxu0 0
      %890 = vmatpush1.bf16.msra.mxu0 %v870
      %891 = vmatprep.subr.bf16.mxu0 0
      %892 = vmatpush1.bf16.msra.mxu0 %v869
      %893 = vmatprep.subr.bf16.mxu0 0
      %894 = vmatpush1.bf16.msra.mxu0 %v868
      %895 = vmatprep.subr.bf16.mxu0 0
      %896 = vmatpush2.bf16.msra.mxu0 0
      %897 = vmatprep.subr.bf16.mxu0 0
      %898 = vmatpush2.bf16.msra.mxu0 0
      %899 = vmatprep.subr.bf16.mxu0 0
      %900 = vmatpush2.bf16.msra.mxu0 0
      %901 = vmatprep.subr.bf16.mxu0 0
      %902 = vmatpush2.bf16.msra.mxu0 0
      %903 = vmatprep.subr.bf16.mxu0 0
      %904 = vmatpush2.bf16.msra.mxu0 0
      %905 = vmatprep.subr.bf16.mxu0 0
      %906 = vmatpush2.bf16.msra.mxu0 0
      %907 = vmatprep.subr.bf16.mxu0 0
      %908 = vmatpush2.bf16.msra.mxu0 0
      %909 = vmatprep.subr.bf16.mxu0 0
      %910 = vmatpush2.bf16.msra.mxu0 0
      %911 = vmatprep.mubr.bf16.mxu0 0
      %912 = vmatmul.mubr.bf16.gmra.mxu0 %v877
      %v913 = vpop.f32.mrf.mxu0
      %v914 = vadd.f32 0.0, %v913
      %v915 = vpop.f32.mrf.mxu0
      %v916 = vpop.f32.mrf.mxu0
      %v917 = vpop.f32.mrf.mxu0
      %918 = vdwg.mxu0
      %v919 = vadd.f32 %v837, %v914
      %v920 = vld [vmem:[%s2] sm:$0x1]
      %v922 = vlaneseq
      %v923 = vshrl.u32 %v922, 7
      %v924 = vsub.s32 0, %v923
      %v925 = vrot.slane %v920, %v924
      %v927 = vadd.f32 %v919, %v925
      %vm928 = vcmask 521216
      %929 = vst.msk [vmem:[%s168] sm:$0x3f] %vm928, %v927
      %p930 = scmp.lt.s32.totalorder %s14, 1
      %s931 = scalar_select %p930, %s14, 1
      %s932 = smul.addr %s931, 8
      %s933 = scalar_lea.vmem %s3, %s932
      // Predicated region
      $region33: #{detector_backbone_with_fpn_forward.11} parent=31 // pred_check
        %p934 = pneg %p100
      $region34: #{detector_backbone_with_fpn_forward.11} parent=31 // pred_check_branch
        %936 = sbr.rel (%p934) target = $region36
      $region35: #{detector_backbone_with_fpn_forward.11} parent=31 // pred_region
        _
      $region36: #{detector_backbone_with_fpn_forward.11} parent=31 // pred_fallthru
        _
    $region32: #{detector_backbone_with_fpn_forward.11} parent=5 // pred_fallthru
      _
    %p937 = scmp.le.s32.totalorder 2, %s9
    // Predicated region
    $region37: #{detector_backbone_with_fpn_forward.11} parent=5 // pred_check
      %p938 = pneg %p937
    $region38: #{detector_backbone_with_fpn_forward.11} parent=5 // pred_check_branch
      %940 = sbr.rel (%p938) target = $region40
    $region39: #{detector_backbone_with_fpn_forward.11} parent=5 // pred_region
      %s941 = ssub.s32 %s9, 2
      // Predicated region
      $region41: #{detector_backbone_with_fpn_forward.11} parent=39 // pred_check
        %p942 = pneg %p106
      $region42: #{detector_backbone_with_fpn_forward.11} parent=39 // pred_check_branch
        %944 = sbr.rel (%p942) target = $region44
      $region43: #{detector_backbone_with_fpn_forward.11} parent=39 // pred_region
        %p945 = scmp.lt.s32.totalorder %s15, 1
        %s946 = scalar_select %p945, %s15, 1
        %s947 = smul.addr %s946, 8
        %s948 = scalar_lea.vmem %s3, %s947
      $region44: #{detector_backbone_with_fpn_forward.11} parent=39 // pred_fallthru
        _
    $region40: #{detector_backbone_with_fpn_forward.11} parent=5 // pred_fallthru
      _
  $region6: #{detector_backbone_with_fpn_forward.11} parent=0 // loop_footer
    %s13 = sadd.s32 1, %s9
  $region7: #{detector_backbone_with_fpn_forward.11} parent=0 // loop_footer_branch
    %8 = sbr.rel target = $region3
  $region8: #{detector_backbone_with_fpn_forward.11} parent=0 // loop_exit
    _

// kernel: detector_backbone_with_fpn_forward.15
$region0: #{detector_backbone_with_fpn_forward.15}
  #allocation0 [shape = 'u32[]', space=smem, size = 0x4, offset = 0x4, fixed_abs, tag = 'smem constant byte address 0x4 - core index']
  #allocation1 [shape = 'u32[144,128]{1,0:T(1,128)}', space=vmem, size = 0x12000, scoped, tag = 'internal scratch']
  %s0 = inlined_call_operand.vmem [shape: bf16[2,100,64], index: 0, kind: input, shape index: {}]
  %s1 = inlined_call_operand.vmem [shape: bf16[9,64,64], index: 1, kind: input, shape index: {}]
  %s2 = inlined_call_operand.vmem [shape: f32[1,64], index: 2, kind: input, shape index: {}]
  %s3 = inlined_call_operand.vmem [shape: f32[2,78,64], index: 3, kind: output, shape index: {}]
  %s4 = sld [smem:[#allocation0]]
  $region45: #{detector_backbone_with_fpn_forward.15} parent=0
    _
  %s6 = ssub.s32 1, %s4
  %s7 = scalar_select 0, %s6, %s4
  loop: start=0, step=1, limit=4
  $region2: #{detector_backbone_with_fpn_forward.15} parent=0 // loop_pre_header
    _
  $region3: #{detector_backbone_with_fpn_forward.15} parent=0 // loop_header
    %s9 = sphi 0, %s13
    %p10 = scmp.ge.s32.totalorder %s9, 4
    %s19 = sphi 0, %s21
    %s22 = sphi 0, %s19
    %s23 = sphi 0, %s22
    %s39 = sphi 0, %s23
    %s43 = sphi 0, %s43
    %s45 = sphi 0, %s43
    %s46 = sphi 0, %s45
    %s60 = sphi 0, %s46
    %s64 = sphi 0, %s64
    %s66 = sphi 0, %s64
    %s67 = sphi 0, %s66
    %s81 = sphi 0, %s67
    %s87 = sphi 0, %s89
    %s90 = sphi 0, %s87
    %s91 = sphi 0, %s90
    %s107 = sphi 0, %s91
  $region4: #{detector_backbone_with_fpn_forward.15} parent=0 // loop_header_branch
    %12 = sbr.rel (%p10) target = $region8
  $region5: #{detector_backbone_with_fpn_forward.15} parent=0 // loop_body
    %s14 = ssub.s32 %s9, 1
    %s15 = ssub.s32 %s9, 2
    %s16 = sadd.s32 %s9, 1
    %s17 = ssub.s32 %s9, %s16
    %p18 = scmp.eq.s32.totalorder %s17, 0
    %s20 = sadd.s32 %s19, 1
    %s21 = scalar_select %p18, %s19, %s20
    %p24 = pneg %p18
    %p25 = scmp.eq.s32.totalorder %s9, 1
    %p26 = por %p24, %p25
    %p27 = scmp.ne.s32.totalorder %s19, %s22
    %p28 = scmp.eq.s32.totalorder %s9, 0
    %p29 = por %p27, %p28
    %p30 = scmp.ne.s32.totalorder %s19, %s22
    %p31 = scmp.eq.s32.totalorder %s14, 1
    %p32 = por %p30, %p31
    %p33 = scmp.ne.s32.totalorder %s22, %s23
    %p34 = scmp.eq.s32.totalorder %s14, 0
    %p35 = por %p33, %p34
    %p36 = scmp.ne.s32.totalorder %s22, %s23
    %p37 = scmp.eq.s32.totalorder %s15, 1
    %p38 = por %p36, %p37
    %p40 = scmp.ne.s32.totalorder %s23, %s39
    %p41 = scmp.eq.s32.totalorder %s15, 0
    %p42 = por %p40, %p41
    %s44 = sadd.s32 %s43, 1
    %p47 = scmp.eq.s32.totalorder %s9, 1
    %p48 = scmp.ne.s32.totalorder %s43, %s45
    %p49 = scmp.eq.s32.totalorder %s9, 0
    %p50 = por %p48, %p49
    %p51 = scmp.ne.s32.totalorder %s43, %s45
    %p52 = scmp.eq.s32.totalorder %s14, 1
    %p53 = por %p51, %p52
    %p54 = scmp.ne.s32.totalorder %s45, %s46
    %p55 = scmp.eq.s32.totalorder %s14, 0
    %p56 = por %p54, %p55
    %p57 = scmp.ne.s32.totalorder %s45, %s46
    %p58 = scmp.eq.s32.totalorder %s15, 1
    %p59 = por %p57, %p58
    %p61 = scmp.ne.s32.totalorder %s46, %s60
    %p62 = scmp.eq.s32.totalorder %s15, 0
    %p63 = por %p61, %p62
    %s65 = sadd.s32 %s64, 1
    %p68 = scmp.eq.s32.totalorder %s9, 1
    %p69 = scmp.ne.s32.totalorder %s64, %s66
    %p70 = scmp.eq.s32.totalorder %s9, 0
    %p71 = por %p69, %p70
    %p72 = scmp.ne.s32.totalorder %s64, %s66
    %p73 = scmp.eq.s32.totalorder %s14, 1
    %p74 = por %p72, %p73
    %p75 = scmp.ne.s32.totalorder %s66, %s67
    %p76 = scmp.eq.s32.totalorder %s14, 0
    %p77 = por %p75, %p76
    %p78 = scmp.ne.s32.totalorder %s66, %s67
    %p79 = scmp.eq.s32.totalorder %s15, 1
    %p80 = por %p78, %p79
    %p82 = scmp.ne.s32.totalorder %s67, %s81
    %p83 = scmp.eq.s32.totalorder %s15, 0
    %p84 = por %p82, %p83
    %s85 = ssub.s32 %s9, %s16
    %p86 = scmp.eq.s32.totalorder %s85, 0
    %s88 = sadd.s32 %s87, 1
    %s89 = scalar_select %p86, %s87, %s88
    %p92 = pneg %p86
    %p93 = scmp.eq.s32.totalorder %s9, 1
    %p94 = por %p92, %p93
    %p95 = scmp.ne.s32.totalorder %s87, %s90
    %p96 = scmp.eq.s32.totalorder %s9, 0
    %p97 = por %p95, %p96
    %p98 = scmp.ne.s32.totalorder %s87, %s90
    %p99 = scmp.eq.s32.totalorder %s14, 1
    %p100 = por %p98, %p99
    %p101 = scmp.ne.s32.totalorder %s90, %s91
    %p102 = scmp.eq.s32.totalorder %s14, 0
    %p103 = por %p101, %p102
    %p104 = scmp.ne.s32.totalorder %s90, %s91
    %p105 = scmp.eq.s32.totalorder %s15, 1
    %p106 = por %p104, %p105
    %p108 = scmp.ne.s32.totalorder %s91, %s107
    %p109 = scmp.eq.s32.totalorder %s15, 0
    %p110 = por %p108, %p109
    %p111 = scmp.le.s32.totalorder 1, %s9
    %p112 = scmp.lt.s32.totalorder %s9, 3
    %p113 = pnand %p111, %p112
    %p114 = pneg %p113
    // Predicated region
    $region9: #{detector_backbone_with_fpn_forward.15} parent=5 // pred_check
      _
    $region10: #{detector_backbone_with_fpn_forward.15} parent=5 // pred_check_branch
      %116 = sbr.rel (%p113) target = $region12
    $region11: #{detector_backbone_with_fpn_forward.15} parent=5 // pred_region
      %s117 = ssub.s32 %s9, 1
      // Predicated region
      $region13: #{detector_backbone_with_fpn_forward.15} parent=11 // pred_check
        %p118 = pneg %p56
      $region14: #{detector_backbone_with_fpn_forward.15} parent=11 // pred_check_branch
        %120 = sbr.rel (%p118) target = $region16
      $region15: #{detector_backbone_with_fpn_forward.15} parent=11 // pred_region
        _
      $region16: #{detector_backbone_with_fpn_forward.15} parent=11 // pred_fallthru
        _
      // Predicated region
      $region17: #{detector_backbone_with_fpn_forward.15} parent=11 // pred_check
        %p121 = pneg %p77
      $region18: #{detector_backbone_with_fpn_forward.15} parent=11 // pred_check_branch
        %123 = sbr.rel (%p121) target = $region20
      $region19: #{detector_backbone_with_fpn_forward.15} parent=11 // pred_region
        _
      $region20: #{detector_backbone_with_fpn_forward.15} parent=11 // pred_fallthru
        _
    $region12: #{detector_backbone_with_fpn_forward.15} parent=5 // pred_fallthru
      _
    %p124 = scmp.lt.s32.totalorder %s9, 2
    // Predicated region
    $region21: #{detector_backbone_with_fpn_forward.15} parent=5 // pred_check
      %p125 = pneg %p124
    $region22: #{detector_backbone_with_fpn_forward.15} parent=5 // pred_check_branch
      %127 = sbr.rel (%p125) target = $region24
    $region23: #{detector_backbone_with_fpn_forward.15} parent=5 // pred_region
      // Predicated region
      $region25: #{detector_backbone_with_fpn_forward.15} parent=23 // pred_check
        %p128 = pneg %p29
      $region26: #{detector_backbone_with_fpn_forward.15} parent=23 // pred_check_branch
        %130 = sbr.rel (%p128) target = $region28
      $region27: #{detector_backbone_with_fpn_forward.15} parent=23 // pred_region
        %p131 = scmp.lt.s32.totalorder %s9, 1
        %s132 = scalar_select %p131, %s9, 1
        %s133 = smul.addr %s132, 13
        %s134 = smul.addr %s133, 4
        %s135 = scalar_lea.vmem %s0, %s134
      $region28: #{detector_backbone_with_fpn_forward.15} parent=23 // pred_fallthru
        _
    $region24: #{detector_backbone_with_fpn_forward.15} parent=5 // pred_fallthru
      _
    %p136 = scmp.le.s32.totalorder 1, %s9
    %p137 = scmp.lt.s32.totalorder %s9, 3
    %p138 = pnand %p136, %p137
    %p139 = pneg %p138
    // Predicated region
    $region29: #{detector_backbone_with_fpn_forward.15} parent=5 // pred_check
      _
    $region30: #{detector_backbone_with_fpn_forward.15} parent=5 // pred_check_branch
      %141 = sbr.rel (%p138) target = $region32
    $region31: #{detector_backbone_with_fpn_forward.15} parent=5 // pred_region
      %s142 = ssub.s32 %s9, 1
      %p143 = scmp.lt.s32.totalorder %s14, 1
      %s144 = scalar_select %p143, %s14, 1
      %s145 = smul.addr %s144, 13
      %s146 = smul.addr %s145, 4
      %s147 = scalar_lea.vmem %s0, %s146
      %p148 = pneg %p35
      %p149 = pneg %p32
      %p150 = pneg %p56
      %p151 = pneg %p53
      %p152 = pneg %p77
      %p153 = pneg %p74
      %p154 = pneg %p103
      %p155 = pneg %p100
      %p156 = scmp.lt.s32.totalorder %s14, 1
      %s157 = scalar_select %p156, %s14, 1
      %s158 = smul.addr %s157, 10
      %s159 = smul.addr %s158, 8
      %s160 = scalar_lea.vmem %s3, %s159
      %p161 = scmp.lt.s32.totalorder %s14, 1
      %s162 = scalar_select %p161, %s14, 1
      %s163 = smul.addr %s162, 13
      %s164 = smul.addr %s163, 4
      %s165 = scalar_lea.vmem %s0, %s164
      %p166 = scmp.lt.s32.totalorder %s14, 1
      %s167 = scalar_select %p166, %s14, 1
      %s168 = smul.addr %s167, 10
      %s169 = smul.addr %s168, 8
      %s170 = scalar_lea.vmem %s3, %s169
      %v172 = vld [vmem:[%s165] sm:$0xf]
      %v173 = vld [vmem:[%s165 + $0x4] sm:$0xf]
      %v174 = vld [vmem:[%s165 + $0x8] sm:$0xf]
      %v175 = vld [vmem:[%s165 + $0xc] sm:$0xf]
      %v176 = vld [vmem:[%s165 + $0x10] sm:$0xf]
      %v177 = vld [vmem:[%s165 + $0x14] sm:$0xf]
      %v178 = vld [vmem:[%s165 + $0x18] sm:$0xf]
      %v179 = vld [vmem:[%s165 + $0x1c] sm:$0xf]
      %v180 = vld [vmem:[%s165 + $0x20] sm:$0xf]
      %v181 = vld [vmem:[%s165 + $0x24] sm:$0x7]
      %v182 = vld [vmem:[%s1] sm:$0xf]
      %v183 = vld [vmem:[%s1 + $0x4] sm:$0xf]
      %v184 = vld [vmem:[%s1 + $0x8] sm:$0xf]
      %v185 = vld [vmem:[%s1 + $0xc] sm:$0xf]
      %v186 = vld [vmem:[%s1 + $0x10] sm:$0xf]
      %v187 = vld [vmem:[%s1 + $0x14] sm:$0xf]
      %v188 = vld [vmem:[%s1 + $0x18] sm:$0xf]
      %v189 = vld [vmem:[%s1 + $0x1c] sm:$0xf]
      %v190 = vld [vmem:[%s165 + $0x24] sm:$0xf]
      %s191 = scalar_lea.vmem %s1, 32
      %v192 = vld [vmem:[%s191] sm:$0xf]
      %v193 = vld [vmem:[%s191 + $0x4] sm:$0xf]
      %v194 = vld [vmem:[%s191 + $0x8] sm:$0xf]
      %v195 = vld [vmem:[%s191 + $0xc] sm:$0xf]
      %v196 = vld [vmem:[%s191 + $0x10] sm:$0xf]
      %v197 = vld [vmem:[%s191 + $0x14] sm:$0xf]
      %v198 = vld [vmem:[%s191 + $0x18] sm:$0xf]
      %v199 = vld [vmem:[%s191 + $0x1c] sm:$0xf]
      %v210 = vunpack.c.l.b16 %v172
      %v211 = vunpack.c.l.b16 %v173
      %v212 = vunpack.c.l.b16 %v174
      %v213 = vunpack.c.l.b16 %v175
      %v214 = vunpack.c.l.b16 %v176
      %v215 = vunpack.c.l.b16 %v177
      %v216 = vunpack.c.l.b16 %v178
      %v217 = vunpack.c.l.b16 %v179
      %v218 = vunpack.c.l.b16 %v180
      %v219 = vunpack.c.l.b16 %v190
      %v220 = vpack.c.b16 %v211, %v210
      %v221 = vpack.c.b16 %v213, %v212
      %v222 = vpack.c.b16 %v215, %v214
      %v223 = vpack.c.b16 %v217, %v216
      %v224 = vpack.c.b16 %v219, %v218
      %vm225 = vsmask.f32 7424
      %v227 = vshrl.u32 %v220, 16
      %v229 = vshll.u32 %v220, 16
      %v231 = vrot.slane %v229, 1
      %v232 = vor.u32 %v227, %v231
      %v234 = vshll.u32 %v221, 16
      %v236 = vrot.slane %v234, 1
      %v237 = vsel %vm225, %v232, %v236
      %v238 = vshrl.u32 %v221, 16
      %v240 = vor.u32 %v238, %v236
      %v242 = vshll.u32 %v222, 16
      %v244 = vrot.slane %v242, 1
      %v245 = vsel %vm225, %v240, %v244
      %v246 = vshrl.u32 %v222, 16
      %v248 = vor.u32 %v246, %v244
      %v250 = vshll.u32 %v223, 16
      %v252 = vrot.slane %v250, 1
      %v253 = vsel %vm225, %v248, %v252
      %v254 = vshrl.u32 %v223, 16
      %v256 = vor.u32 %v254, %v252
      %v258 = vshll.u32 %v224, 16
      %v260 = vrot.slane %v258, 1
      %v261 = vsel %vm225, %v256, %v260
      %v262 = vshrl.u32 %v224, 16
      %v264 = vor.u32 %v262, %v260
      %v273 = vunpack.c.l.b16 %v192
      %v274 = vunpack.c.l.b16 %v193
      %v275 = vunpack.c.l.b16 %v194
      %v276 = vunpack.c.l.b16 %v195
      %v277 = vunpack.c.l.b16 %v196
      %v278 = vunpack.c.l.b16 %v197
      %v279 = vunpack.c.l.b16 %v198
      %v280 = vunpack.c.l.b16 %v199
      %v281 = vpack.c.b16 %v274, %v273
      %v282 = vpack.c.b16 %v276, %v275
      %v283 = vpack.c.b16 %v278, %v277
      %v284 = vpack.c.b16 %v280, %v279
      %vm289 = vcmask 523264
      %v291 = vsel %vm289, %v237, 0
      %v294 = vsel %vm289, %v245, 0
      %v297 = vsel %vm289, %v253, 0
      %v300 = vsel %vm289, %v261, 0
      %v303 = vsel %vm289, %v264, 0
      %305 = vmatprep.subr.bf16.mxu0 0
      %306 = vmatpush1.bf16.msra.mxu0 0
      %307 = vmatprep.subr.bf16.mxu0 0
      %308 = vmatpush1.bf16.msra.mxu0 0
      %309 = vmatprep.subr.bf16.mxu0 0
      %310 = vmatpush1.bf16.msra.mxu0 0
      %311 = vmatprep.subr.bf16.mxu0 0
      %312 = vmatpush1.bf16.msra.mxu0 0
      %313 = vmatprep.subr.bf16.mxu0 0
      %314 = vmatpush1.bf16.msra.mxu0 %v284
      %315 = vmatprep.subr.bf16.mxu0 0
      %316 = vmatpush1.bf16.msra.mxu0 %v283
      %317 = vmatprep.subr.bf16.mxu0 0
      %318 = vmatpush1.bf16.msra.mxu0 %v282
      %319 = vmatprep.subr.bf16.mxu0 0
      %320 = vmatpush1.bf16.msra.mxu0 %v281
      %321 = vmatprep.subr.bf16.mxu0 0
      %322 = vmatpush2.bf16.msra.mxu0 0
      %323 = vmatprep.subr.bf16.mxu0 0
      %324 = vmatpush2.bf16.msra.mxu0 0
      %325 = vmatprep.subr.bf16.mxu0 0
      %326 = vmatpush2.bf16.msra.mxu0 0
      %327 = vmatprep.subr.bf16.mxu0 0
      %328 = vmatpush2.bf16.msra.mxu0 0
      %329 = vmatprep.subr.bf16.mxu0 0
      %330 = vmatpush2.bf16.msra.mxu0 0
      %331 = vmatprep.subr.bf16.mxu0 0
      %332 = vmatpush2.bf16.msra.mxu0 0
      %333 = vmatprep.subr.bf16.mxu0 0
      %334 = vmatpush2.bf16.msra.mxu0 0
      %335 = vmatprep.subr.bf16.mxu0 0
      %336 = vmatpush2.bf16.msra.mxu0 0
      %337 = vmatprep.mubr.bf16.mxu0 0
      %338 = vmatmul.mubr.bf16.gmra.mxu0 %v291
      %v339 = vpop.f32.mrf.mxu0
      %v340 = vadd.f32 0.0, %v339
      %v341 = vpop.f32.mrf.mxu0
      %v342 = vpop.f32.mrf.mxu0
      %v343 = vadd.f32 0.0, %v342
      %v344 = vpop.f32.mrf.mxu0
      %345 = vmatprep.mubr.bf16.mxu0 0
      %346 = vmatmul.mubr.bf16.gmra.mxu0 %v294
      %v347 = vpop.f32.mrf.mxu0
      %v348 = vadd.f32 0.0, %v347
      %v349 = vpop.f32.mrf.mxu0
      %v350 = vpop.f32.mrf.mxu0
      %v351 = vadd.f32 0.0, %v350
      %v352 = vpop.f32.mrf.mxu0
      %353 = vmatprep.mubr.bf16.mxu0 0
      %354 = vmatmul.mubr.bf16.gmra.mxu0 %v297
      %v355 = vpop.f32.mrf.mxu0
      %v356 = vadd.f32 0.0, %v355
      %v357 = vpop.f32.mrf.mxu0
      %v358 = vpop.f32.mrf.mxu0
      %v359 = vadd.f32 0.0, %v358
      %v360 = vpop.f32.mrf.mxu0
      %361 = vmatprep.mubr.bf16.mxu0 0
      %362 = vmatmul.mubr.bf16.gmra.mxu0 %v300
      %v363 = vpop.f32.mrf.mxu0
      %v364 = vadd.f32 0.0, %v363
      %v365 = vpop.f32.mrf.mxu0
      %v366 = vpop.f32.mrf.mxu0
      %v367 = vadd.f32 0.0, %v366
      %v368 = vpop.f32.mrf.mxu0
      %369 = vmatprep.mubr.bf16.mxu0 0
      %370 = vmatmul.mubr.bf16.gmra.mxu0 %v303
      %v371 = vpop.f32.mrf.mxu0
      %v372 = vadd.f32 0.0, %v371
      %v373 = vpop.f32.mrf.mxu0
      %v374 = vpop.f32.mrf.mxu0
      %v375 = vadd.f32 0.0, %v374
      %v376 = vpop.f32.mrf.mxu0
      %377 = vdwg.mxu0
      %v379 = vunpack.c.l.b16 %v181
      %v380 = vpack.c.b16 %v379, %v218
      %v389 = vunpack.c.l.b16 %v182
      %v390 = vunpack.c.l.b16 %v183
      %v391 = vunpack.c.l.b16 %v184
      %v392 = vunpack.c.l.b16 %v185
      %v393 = vunpack.c.l.b16 %v186
      %v394 = vunpack.c.l.b16 %v187
      %v395 = vunpack.c.l.b16 %v188
      %v396 = vunpack.c.l.b16 %v189
      %v397 = vpack.c.b16 %v390, %v389
      %v398 = vpack.c.b16 %v392, %v391
      %v399 = vpack.c.b16 %v394, %v393
      %v400 = vpack.c.b16 %v396, %v395
      %v405 = vsel %vm289, %v220, 0
      %v407 = vsel %vm289, %v221, 0
      %v409 = vsel %vm289, %v222, 0
      %v411 = vsel %vm289, %v223, 0
      %v414 = vsel %vm289, %v380, 0
      %416 = vmatprep.subr.bf16.mxu0 0
      %417 = vmatpush1.bf16.msra.mxu0 0
      %418 = vmatprep.subr.bf16.mxu0 0
      %419 = vmatpush1.bf16.msra.mxu0 0
      %420 = vmatprep.subr.bf16.mxu0 0
      %421 = vmatpush1.bf16.msra.mxu0 0
      %422 = vmatprep.subr.bf16.mxu0 0
      %423 = vmatpush1.bf16.msra.mxu0 0
      %424 = vmatprep.subr.bf16.mxu0 0
      %425 = vmatpush1.bf16.msra.mxu0 %v400
      %426 = vmatprep.subr.bf16.mxu0 0
      %427 = vmatpush1.bf16.msra.mxu0 %v399
      %428 = vmatprep.subr.bf16.mxu0 0
      %429 = vmatpush1.bf16.msra.mxu0 %v398
      %430 = vmatprep.subr.bf16.mxu0 0
      %431 = vmatpush1.bf16.msra.mxu0 %v397
      %432 = vmatprep.subr.bf16.mxu0 0
      %433 = vmatpush2.bf16.msra.mxu0 0
      %434 = vmatprep.subr.bf16.mxu0 0
      %435 = vmatpush2.bf16.msra.mxu0 0
      %436 = vmatprep.subr.bf16.mxu0 0
      %437 = vmatpush2.bf16.msra.mxu0 0
      %438 = vmatprep.subr.bf16.mxu0 0
      %439 = vmatpush2.bf16.msra.mxu0 0
      %440 = vmatprep.subr.bf16.mxu0 0
      %441 = vmatpush2.bf16.msra.mxu0 0
      %442 = vmatprep.subr.bf16.mxu0 0
      %443 = vmatpush2.bf16.msra.mxu0 0
      %444 = vmatprep.subr.bf16.mxu0 0
      %445 = vmatpush2.bf16.msra.mxu0 0
      %446 = vmatprep.subr.bf16.mxu0 0
      %447 = vmatpush2.bf16.msra.mxu0 0
      %448 = vmatprep.mubr.bf16.mxu0 0
      %449 = vmatmul.mubr.bf16.gmra.mxu0 %v405
      %v450 = vpop.f32.mrf.mxu0
      %v451 = vadd.f32 %v340, %v450
      %v452 = vpop.f32.mrf.mxu0
      %v453 = vpop.f32.mrf.mxu0
      %v454 = vadd.f32 %v343, %v453
      %v455 = vpop.f32.mrf.mxu0
      %456 = vmatprep.mubr.bf16.mxu0 0
      %457 = vmatmul.mubr.bf16.gmra.mxu0 %v407
      %v458 = vpop.f32.mrf.mxu0
      %v459 = vadd.f32 %v348, %v458
      %v460 = vpop.f32.mrf.mxu0
      %v461 = vpop.f32.mrf.mxu0
      %v462 = vadd.f32 %v351, %v461
      %v463 = vpop.f32.mrf.mxu0
      %464 = vmatprep.mubr.bf16.mxu0 0
      %465 = vmatmul.mubr.bf16.gmra.mxu0 %v409
      %v466 = vpop.f32.mrf.mxu0
      %v467 = vadd.f32 %v356, %v466
      %v468 = vpop.f32.mrf.mxu0
      %v469 = vpop.f32.mrf.mxu0
      %v470 = vadd.f32 %v359, %v469
      %v471 = vpop.f32.mrf.mxu0
      %472 = vmatprep.mubr.bf16.mxu0 0
      %473 = vmatmul.mubr.bf16.gmra.mxu0 %v411
      %v474 = vpop.f32.mrf.mxu0
      %v475 = vadd.f32 %v364, %v474
      %v476 = vpop.f32.mrf.mxu0
      %v477 = vpop.f32.mrf.mxu0
      %v478 = vadd.f32 %v367, %v477
      %v479 = vpop.f32.mrf.mxu0
      %480 = vmatprep.mubr.bf16.mxu0 0
      %481 = vmatmul.mubr.bf16.gmra.mxu0 %v414
      %v482 = vpop.f32.mrf.mxu0
      %v483 = vadd.f32 %v372, %v482
      %v484 = vpop.f32.mrf.mxu0
      %v485 = vpop.f32.mrf.mxu0
      %v486 = vadd.f32 %v375, %v485
      %v487 = vpop.f32.mrf.mxu0
      %488 = vdwg.mxu0
      %v489 = vld [vmem:[%s165] sm:$0xe]
      %s490 = scalar_lea.vmem %s1, 64
      %v491 = vld [vmem:[%s490] sm:$0xf]
      %v492 = vld [vmem:[%s490 + $0x4] sm:$0xf]
      %v493 = vld [vmem:[%s490 + $0x8] sm:$0xf]
      %v494 = vld [vmem:[%s490 + $0xc] sm:$0xf]
      %v495 = vld [vmem:[%s490 + $0x10] sm:$0xf]
      %v496 = vld [vmem:[%s490 + $0x14] sm:$0xf]
      %v497 = vld [vmem:[%s490 + $0x18] sm:$0xf]
      %v498 = vld [vmem:[%s490 + $0x1c] sm:$0xf]
      %v500 = vunpack.c.l.b16 %v489
      %v501 = vpack.c.b16 %v211, %v500
      %vm502 = vcmask 1046528
      %v503 = vrot.slane %v501, 1
      %v504 = vrot.slane %v221, 1
      %v505 = vsel %vm502, %v503, %v504
      %v506 = vrot.slane %v222, 1
      %v507 = vsel %vm502, %v504, %v506
      %v508 = vrot.slane %v223, 1
      %v509 = vsel %vm502, %v506, %v508
      %v510 = vrot.slane %v224, 1
      %v511 = vsel %vm502, %v508, %v510
      %v520 = vunpack.c.l.b16 %v491
      %v521 = vunpack.c.l.b16 %v492
      %v522 = vunpack.c.l.b16 %v493
      %v523 = vunpack.c.l.b16 %v494
      %v524 = vunpack.c.l.b16 %v495
      %v525 = vunpack.c.l.b16 %v496
      %v526 = vunpack.c.l.b16 %v497
      %v527 = vunpack.c.l.b16 %v498
      %v528 = vpack.c.b16 %v521, %v520
      %v529 = vpack.c.b16 %v523, %v522
      %v530 = vpack.c.b16 %v525, %v524
      %v531 = vpack.c.b16 %v527, %v526
      %v537 = vsel %vm289, %v505, 0
      %v540 = vsel %vm289, %v507, 0
      %v543 = vsel %vm289, %v509, 0
      %v546 = vsel %vm289, %v511, 0
      %v549 = vsel %vm289, %v510, 0
      %551 = vmatprep.subr.bf16.mxu0 0
      %552 = vmatpush1.bf16.msra.mxu0 0
      %553 = vmatprep.subr.bf16.mxu0 0
      %554 = vmatpush1.bf16.msra.mxu0 0
      %555 = vmatprep.subr.bf16.mxu0 0
      %556 = vmatpush1.bf16.msra.mxu0 0
      %557 = vmatprep.subr.bf16.mxu0 0
      %558 = vmatpush1.bf16.msra.mxu0 0
      %559 = vmatprep.subr.bf16.mxu0 0
      %560 = vmatpush1.bf16.msra.mxu0 %v531
      %561 = vmatprep.subr.bf16.mxu0 0
      %562 = vmatpush1.bf16.msra.mxu0 %v530
      %563 = vmatprep.subr.bf16.mxu0 0
      %564 = vmatpush1.bf16.msra.mxu0 %v529
      %565 = vmatprep.subr.bf16.mxu0 0
      %566 = vmatpush1.bf16.msra.mxu0 %v528
      %567 = vmatprep.subr.bf16.mxu0 0
      %568 = vmatpush2.bf16.msra.mxu0 0
      %569 = vmatprep.subr.bf16.mxu0 0
      %570 = vmatpush2.bf16.msra.mxu0 0
      %571 = vmatprep.subr.bf16.mxu0 0
      %572 = vmatpush2.bf16.msra.mxu0 0
      %573 = vmatprep.subr.bf16.mxu0 0
      %574 = vmatpush2.bf16.msra.mxu0 0
      %575 = vmatprep.subr.bf16.mxu0 0
      %576 = vmatpush2.bf16.msra.mxu0 0
      %577 = vmatprep.subr.bf16.mxu0 0
      %578 = vmatpush2.bf16.msra.mxu0 0
      %579 = vmatprep.subr.bf16.mxu0 0
      %580 = vmatpush2.bf16.msra.mxu0 0
      %581 = vmatprep.subr.bf16.mxu0 0
      %582 = vmatpush2.bf16.msra.mxu0 0
      %583 = vmatprep.mubr.bf16.mxu0 0
      %584 = vmatmul.mubr.bf16.gmra.mxu0 %v537
      %v585 = vpop.f32.mrf.mxu0
      %v586 = vadd.f32 0.0, %v585
      %v587 = vpop.f32.mrf.mxu0
      %v588 = vpop.f32.mrf.mxu0
      %v589 = vadd.f32 0.0, %v588
      %v590 = vpop.f32.mrf.mxu0
      %591 = vmatprep.mubr.bf16.mxu0 0
      %592 = vmatmul.mubr.bf16.gmra.mxu0 %v540
      %v593 = vpop.f32.mrf.mxu0
      %v594 = vadd.f32 0.0, %v593
      %v595 = vpop.f32.mrf.mxu0
      %v596 = vpop.f32.mrf.mxu0
      %v597 = vadd.f32 0.0, %v596
      %v598 = vpop.f32.mrf.mxu0
      %599 = vmatprep.mubr.bf16.mxu0 0
      %600 = vmatmul.mubr.bf16.gmra.mxu0 %v543
      %v601 = vpop.f32.mrf.mxu0
      %v602 = vadd.f32 0.0, %v601
      %v603 = vpop.f32.mrf.mxu0
      %v604 = vpop.f32.mrf.mxu0
      %v605 = vadd.f32 0.0, %v604
      %v606 = vpop.f32.mrf.mxu0
      %607 = vmatprep.mubr.bf16.mxu0 0
      %608 = vmatmul.mubr.bf16.gmra.mxu0 %v546
      %v609 = vpop.f32.mrf.mxu0
      %v610 = vadd.f32 0.0, %v609
      %v611 = vpop.f32.mrf.mxu0
      %v612 = vpop.f32.mrf.mxu0
      %v613 = vadd.f32 0.0, %v612
      %v614 = vpop.f32.mrf.mxu0
      %615 = vmatprep.mubr.bf16.mxu0 0
      %616 = vmatmul.mubr.bf16.gmra.mxu0 %v549
      %v617 = vpop.f32.mrf.mxu0
      %v618 = vadd.f32 0.0, %v617
      %v619 = vpop.f32.mrf.mxu0
      %v620 = vpop.f32.mrf.mxu0
      %v621 = vadd.f32 0.0, %v620
      %v622 = vpop.f32.mrf.mxu0
      %623 = vdwg.mxu0
      %v624 = vadd.f32 %v451, %v586
      %v625 = vadd.f32 %v454, %v589
      %v626 = vadd.f32 %v459, %v594
      %v627 = vadd.f32 %v462, %v597
      %v628 = vadd.f32 %v467, %v602
      %v629 = vadd.f32 %v470, %v605
      %v630 = vadd.f32 %v475, %v610
      %v631 = vadd.f32 %v478, %v613
      %v632 = vadd.f32 %v483, %v618
      %v633 = vadd.f32 %v486, %v621
      %v634 = vld [vmem:[%s165 + $0x4] sm:$0xe]
      %v635 = vld [vmem:[%s165 + $0x8] sm:$0xf]
      %v636 = vld [vmem:[%s165 + $0xc] sm:$0xf]
      %v637 = vld [vmem:[%s165 + $0x10] sm:$0xf]
      %v638 = vld [vmem:[%s165 + $0x14] sm:$0xf]
      %v639 = vld [vmem:[%s165 + $0x18] sm:$0xf]
      %v640 = vld [vmem:[%s165 + $0x1c] sm:$0xf]
      %v641 = vld [vmem:[%s165 + $0x20] sm:$0xf]
      %v642 = vld [vmem:[%s165 + $0x24] sm:$0xf]
      %v643 = vld [vmem:[%s165 + $0x28] sm:$0xf]
      %s644 = scalar_lea.vmem %s1, 96
      %v645 = vld [vmem:[%s644] sm:$0xf]
      %v646 = vld [vmem:[%s644 + $0x4] sm:$0xf]
      %v647 = vld [vmem:[%s644 + $0x8] sm:$0xf]
      %v648 = vld [vmem:[%s644 + $0xc] sm:$0xf]
      %v649 = vld [vmem:[%s644 + $0x10] sm:$0xf]
      %v650 = vld [vmem:[%s644 + $0x14] sm:$0xf]
      %v651 = vld [vmem:[%s644 + $0x18] sm:$0xf]
      %v652 = vld [vmem:[%s644 + $0x1c] sm:$0xf]
      %v663 = vunpack.c.l.b16 %v634
      %v664 = vunpack.c.l.b16 %v635
      %v665 = vunpack.c.l.b16 %v636
      %v666 = vunpack.c.l.b16 %v637
      %v667 = vunpack.c.l.b16 %v638
      %v668 = vunpack.c.l.b16 %v639
      %v669 = vunpack.c.l.b16 %v640
      %v670 = vunpack.c.l.b16 %v641
      %v671 = vunpack.c.l.b16 %v642
      %v672 = vunpack.c.l.b16 %v643
      %v673 = vpack.c.b16 %v664, %v663
      %v674 = vpack.c.b16 %v666, %v665
      %v675 = vpack.c.b16 %v668, %v667
      %v676 = vpack.c.b16 %v670, %v669
      %v677 = vpack.c.b16 %v672, %v671
      %v678 = vrot.slane %v673, 1
      %v679 = vrot.slane %v674, 1
      %v680 = vsel %vm502, %v678, %v679
      %v681 = vrot.slane %v675, 1
      %v682 = vsel %vm502, %v679, %v681
      %v683 = vrot.slane %v676, 1
      %v684 = vsel %vm502, %v681, %v683
      %v685 = vrot.slane %v677, 1
      %v686 = vsel %vm502, %v683, %v685
      %v695 = vunpack.c.l.b16 %v645
      %v696 = vunpack.c.l.b16 %v646
      %v697 = vunpack.c.l.b16 %v647
      %v698 = vunpack.c.l.b16 %v648
      %v699 = vunpack.c.l.b16 %v649
      %v700 = vunpack.c.l.b16 %v650
      %v701 = vunpack.c.l.b16 %v651
      %v702 = vunpack.c.l.b16 %v652
      %v703 = vpack.c.b16 %v696, %v695
      %v704 = vpack.c.b16 %v698, %v697
      %v705 = vpack.c.b16 %v700, %v699
      %v706 = vpack.c.b16 %v702, %v701
      %v712 = vsel %vm289, %v680, 0
      %v715 = vsel %vm289, %v682, 0
      %v718 = vsel %vm289, %v684, 0
      %v721 = vsel %vm289, %v686, 0
      %v724 = vsel %vm289, %v685, 0
      %726 = vmatprep.subr.bf16.mxu0 0
      %727 = vmatpush1.bf16.msra.mxu0 0
      %728 = vmatprep.subr.bf16.mxu0 0
      %729 = vmatpush1.bf16.msra.mxu0 0
      %730 = vmatprep.subr.bf16.mxu0 0
      %731 = vmatpush1.bf16.msra.mxu0 0
      %732 = vmatprep.subr.bf16.mxu0 0
      %733 = vmatpush1.bf16.msra.mxu0 0
      %734 = vmatprep.subr.bf16.mxu0 0
      %735 = vmatpush1.bf16.msra.mxu0 %v706
      %736 = vmatprep.subr.bf16.mxu0 0
      %737 = vmatpush1.bf16.msra.mxu0 %v705
      %738 = vmatprep.subr.bf16.mxu0 0
      %739 = vmatpush1.bf16.msra.mxu0 %v704
      %740 = vmatprep.subr.bf16.mxu0 0
      %741 = vmatpush1.bf16.msra.mxu0 %v703
      %742 = vmatprep.subr.bf16.mxu0 0
      %743 = vmatpush2.bf16.msra.mxu0 0
      %744 = vmatprep.subr.bf16.mxu0 0
      %745 = vmatpush2.bf16.msra.mxu0 0
      %746 = vmatprep.subr.bf16.mxu0 0
      %747 = vmatpush2.bf16.msra.mxu0 0
      %748 = vmatprep.subr.bf16.mxu0 0
      %749 = vmatpush2.bf16.msra.mxu0 0
      %750 = vmatprep.subr.bf16.mxu0 0
      %751 = vmatpush2.bf16.msra.mxu0 0
      %752 = vmatprep.subr.bf16.mxu0 0
      %753 = vmatpush2.bf16.msra.mxu0 0
      %754 = vmatprep.subr.bf16.mxu0 0
      %755 = vmatpush2.bf16.msra.mxu0 0
      %756 = vmatprep.subr.bf16.mxu0 0
      %757 = vmatpush2.bf16.msra.mxu0 0
      %758 = vmatprep.mubr.bf16.mxu0 0
      %759 = vmatmul.mubr.bf16.gmra.mxu0 %v712
      %v760 = vpop.f32.mrf.mxu0
      %v761 = vadd.f32 0.0, %v760
      %v762 = vpop.f32.mrf.mxu0
      %v763 = vpop.f32.mrf.mxu0
      %v764 = vadd.f32 0.0, %v763
      %v765 = vpop.f32.mrf.mxu0
      %766 = vmatprep.mubr.bf16.mxu0 0
      %767 = vmatmul.mubr.bf16.gmra.mxu0 %v715
      %v768 = vpop.f32.mrf.mxu0
      %v769 = vadd.f32 0.0, %v768
      %v770 = vpop.f32.mrf.mxu0
      %v771 = vpop.f32.mrf.mxu0
      %v772 = vadd.f32 0.0, %v771
      %v773 = vpop.f32.mrf.mxu0
      %774 = vmatprep.mubr.bf16.mxu0 0
      %775 = vmatmul.mubr.bf16.gmra.mxu0 %v718
      %v776 = vpop.f32.mrf.mxu0
      %v777 = vadd.f32 0.0, %v776
      %v778 = vpop.f32.mrf.mxu0
      %v779 = vpop.f32.mrf.mxu0
      %v780 = vadd.f32 0.0, %v779
      %v781 = vpop.f32.mrf.mxu0
      %782 = vmatprep.mubr.bf16.mxu0 0
      %783 = vmatmul.mubr.bf16.gmra.mxu0 %v721
      %v784 = vpop.f32.mrf.mxu0
      %v785 = vadd.f32 0.0, %v784
      %v786 = vpop.f32.mrf.mxu0
      %v787 = vpop.f32.mrf.mxu0
      %v788 = vadd.f32 0.0, %v787
      %v789 = vpop.f32.mrf.mxu0
      %790 = vmatprep.mubr.bf16.mxu0 0
      %791 = vmatmul.mubr.bf16.gmra.mxu0 %v724
      %v792 = vpop.f32.mrf.mxu0
      %v793 = vadd.f32 0.0, %v792
      %v794 = vpop.f32.mrf.mxu0
      %v795 = vpop.f32.mrf.mxu0
      %v796 = vadd.f32 0.0, %v795
      %v797 = vpop.f32.mrf.mxu0
      %798 = vdwg.mxu0
      %v799 = vadd.f32 %v624, %v761
      %v800 = vadd.f32 %v625, %v764
      %v801 = vadd.f32 %v626, %v769
      %v802 = vadd.f32 %v627, %v772
      %v803 = vadd.f32 %v628, %v777
      %v804 = vadd.f32 %v629, %v780
      %v805 = vadd.f32 %v630, %v785
      %v806 = vadd.f32 %v631, %v788
      %v807 = vadd.f32 %v632, %v793
      %v808 = vadd.f32 %v633, %v796
      %v809 = vld [vmem:[%s165 + $0x4] sm:$0xe]
      %v810 = vld [vmem:[%s165 + $0x8] sm:$0xf]
      %v811 = vld [vmem:[%s165 + $0xc] sm:$0xf]
      %v812 = vld [vmem:[%s165 + $0x10] sm:$0xf]
      %v813 = vld [vmem:[%s165 + $0x14] sm:$0xf]
      %v814 = vld [vmem:[%s165 + $0x18] sm:$0xf]
      %v815 = vld [vmem:[%s165 + $0x1c] sm:$0xf]
      %v816 = vld [vmem:[%s165 + $0x20] sm:$0xf]
      %v817 = vld [vmem:[%s165 + $0x24] sm:$0xf]
      %v818 = vld [vmem:[%s165 + $0x28] sm:$0xf]
      %v819 = vld [vmem:[%s165 + $0x2c] sm:$0x1]
      %s820 = scalar_lea.vmem %s1, 128
      %v821 = vld [vmem:[%s820] sm:$0xf]
      %v822 = vld [vmem:[%s820 + $0x4] sm:$0xf]
      %v823 = vld [vmem:[%s820 + $0x8] sm:$0xf]
      %v824 = vld [vmem:[%s820 + $0xc] sm:$0xf]
      %v825 = vld [vmem:[%s820 + $0x10] sm:$0xf]
      %v826 = vld [vmem:[%s820 + $0x14] sm:$0xf]
      %v827 = vld [vmem:[%s820 + $0x18] sm:$0xf]
      %v828 = vld [vmem:[%s820 + $0x1c] sm:$0xf]
      %v840 = vunpack.c.l.b16 %v809
      %v841 = vunpack.c.l.b16 %v810
      %v842 = vunpack.c.l.b16 %v811
      %v843 = vunpack.c.l.b16 %v812
      %v844 = vunpack.c.l.b16 %v813
      %v845 = vunpack.c.l.b16 %v814
      %v846 = vunpack.c.l.b16 %v815
      %v847 = vunpack.c.l.b16 %v816
      %v848 = vunpack.c.l.b16 %v817
      %v849 = vunpack.c.l.b16 %v818
      %v850 = vunpack.c.l.b16 %v819
      %v851 = vpack.c.b16 %v841, %v840
      %v852 = vpack.c.b16 %v843, %v842
      %v853 = vpack.c.b16 %v845, %v844
      %v854 = vpack.c.b16 %v847, %v846
      %v855 = vpack.c.b16 %v849, %v848
      %v856 = vpack.c.b16 %v850, %v850
      %vm857 = vsmask.f32 6400
      %v859 = vshrl.u32 %v851, 16
      %v861 = vrot.slane %v859, 1
      %v862 = vshll.u32 %v851, 16
      %v864 = vrot.slane %v862, 2
      %v865 = vor.u32 %v861, %v864
      %v867 = vshrl.u32 %v852, 16
      %v869 = vrot.slane %v867, 1
      %v870 = vshll.u32 %v852, 16
      %v872 = vrot.slane %v870, 2
      %v873 = vor.u32 %v869, %v872
      %v874 = vsel %vm857, %v865, %v873
      %v876 = vshrl.u32 %v853, 16
      %v878 = vrot.slane %v876, 1
      %v879 = vshll.u32 %v853, 16
      %v881 = vrot.slane %v879, 2
      %v882 = vor.u32 %v878, %v881
      %v883 = vsel %vm857, %v873, %v882
      %v885 = vshrl.u32 %v854, 16
      %v887 = vrot.slane %v885, 1
      %v888 = vshll.u32 %v854, 16
      %v890 = vrot.slane %v888, 2
      %v891 = vor.u32 %v887, %v890
      %v892 = vsel %vm857, %v882, %v891
      %v894 = vshrl.u32 %v855, 16
      %v896 = vrot.slane %v894, 1
      %v897 = vshll.u32 %v855, 16
      %v899 = vrot.slane %v897, 2
      %v900 = vor.u32 %v896, %v899
      %v901 = vsel %vm857, %v891, %v900
      %v903 = vshll.u32 %v856, 16
      %v905 = vrot.slane %v903, 2
      %v906 = vsel %vm857, %v900, %v905
      %v915 = vunpack.c.l.b16 %v821
      %v916 = vunpack.c.l.b16 %v822
      %v917 = vunpack.c.l.b16 %v823
      %v918 = vunpack.c.l.b16 %v824
      %v919 = vunpack.c.l.b16 %v825
      %v920 = vunpack.c.l.b16 %v826
      %v921 = vunpack.c.l.b16 %v827
      %v922 = vunpack.c.l.b16 %v828
      %v923 = vpack.c.b16 %v916, %v915
      %v924 = vpack.c.b16 %v918, %v917
      %v925 = vpack.c.b16 %v920, %v919
      %v926 = vpack.c.b16 %v922, %v921
      %v932 = vsel %vm289, %v874, 0
      %v935 = vsel %vm289, %v883, 0
      %v938 = vsel %vm289, %v892, 0
      %v941 = vsel %vm289, %v901, 0
      %v944 = vsel %vm289, %v906, 0
      %946 = vmatprep.subr.bf16.mxu0 0
      %947 = vmatpush1.bf16.msra.mxu0 0
      %948 = vmatprep.subr.bf16.mxu0 0
      %949 = vmatpush1.bf16.msra.mxu0 0
      %950 = vmatprep.subr.bf16.mxu0 0
      %951 = vmatpush1.bf16.msra.mxu0 0
      %952 = vmatprep.subr.bf16.mxu0 0
      %953 = vmatpush1.bf16.msra.mxu0 0
      %954 = vmatprep.subr.bf16.mxu0 0
      %955 = vmatpush1.bf16.msra.mxu0 %v926
      %956 = vmatprep.subr.bf16.mxu0 0
      %957 = vmatpush1.bf16.msra.mxu0 %v925
      %958 = vmatprep.subr.bf16.mxu0 0
      %959 = vmatpush1.bf16.msra.mxu0 %v924
      %960 = vmatprep.subr.bf16.mxu0 0
      %961 = vmatpush1.bf16.msra.mxu0 %v923
      %962 = vmatprep.subr.bf16.mxu0 0
      %963 = vmatpush2.bf16.msra.mxu0 0
      %964 = vmatprep.subr.bf16.mxu0 0
      %965 = vmatpush2.bf16.msra.mxu0 0
      %966 = vmatprep.subr.bf16.mxu0 0
      %967 = vmatpush2.bf16.msra.mxu0 0
      %968 = vmatprep.subr.bf16.mxu0 0
      %969 = vmatpush2.bf16.msra.mxu0 0
      %970 = vmatprep.subr.bf16.mxu0 0
      %971 = vmatpush2.bf16.msra.mxu0 0
      %972 = vmatprep.subr.bf16.mxu0 0
      %973 = vmatpush2.bf16.msra.mxu0 0
      %974 = vmatprep.subr.bf16.mxu0 0
      %975 = vmatpush2.bf16.msra.mxu0 0
      %976 = vmatprep.subr.bf16.mxu0 0
      %977 = vmatpush2.bf16.msra.mxu0 0
      %978 = vmatprep.mubr.bf16.mxu0 0
      %979 = vmatmul.mubr.bf16.gmra.mxu0 %v932
      %v980 = vpop.f32.mrf.mxu0
      %v981 = vadd.f32 0.0, %v980
      %v982 = vpop.f32.mrf.mxu0
      %v983 = vpop.f32.mrf.mxu0
      %v984 = vadd.f32 0.0, %v983
      %v985 = vpop.f32.mrf.mxu0
      %986 = vmatprep.mubr.bf16.mxu0 0
      %987 = vmatmul.mubr.bf16.gmra.mxu0 %v935
      %v988 = vpop.f32.mrf.mxu0
      %v989 = vadd.f32 0.0, %v988
      %v990 = vpop.f32.mrf.mxu0
      %v991 = vpop.f32.mrf.mxu0
      %v992 = vadd.f32 0.0, %v991
      %v993 = vpop.f32.mrf.mxu0
      %994 = vmatprep.mubr.bf16.mxu0 0
      %995 = vmatmul.mubr.bf16.gmra.mxu0 %v938
      %v996 = vpop.f32.mrf.mxu0
      %v997 = vadd.f32 0.0, %v996
      %v998 = vpop.f32.mrf.mxu0
      %v999 = vpop.f32.mrf.mxu0
      %v1000 = vadd.f32 0.0, %v999
      %v1001 = vpop.f32.mrf.mxu0
      %1002 = vmatprep.mubr.bf16.mxu0 0
      %1003 = vmatmul.mubr.bf16.gmra.mxu0 %v941
      %v1004 = vpop.f32.mrf.mxu0
      %v1005 = vadd.f32 0.0, %v1004
      %v1006 = vpop.f32.mrf.mxu0
      %v1007 = vpop.f32.mrf.mxu0
      %v1008 = vadd.f32 0.0, %v1007
      %v1009 = vpop.f32.mrf.mxu0
      %1010 = vmatprep.mubr.bf16.mxu0 0
      %1011 = vmatmul.mubr.bf16.gmra.mxu0 %v944
      %v1012 = vpop.f32.mrf.mxu0
      %v1013 = vadd.f32 0.0, %v1012
      %v1014 = vpop.f32.mrf.mxu0
      %v1015 = vpop.f32.mrf.mxu0
      %v1016 = vadd.f32 0.0, %v1015
      %v1017 = vpop.f32.mrf.mxu0
      %1018 = vdwg.mxu0
      %v1019 = vadd.f32 %v799, %v981
      %v1020 = vadd.f32 %v800, %v984
      %v1021 = vadd.f32 %v801, %v989
      %v1022 = vadd.f32 %v802, %v992
      %v1023 = vadd.f32 %v803, %v997
      %v1024 = vadd.f32 %v804, %v1000
      %v1025 = vadd.f32 %v805, %v1005
      %v1026 = vadd.f32 %v806, %v1008
      %v1027 = vadd.f32 %v807, %v1013
      %v1028 = vadd.f32 %v808, %v1016
      %v1029 = vld [vmem:[%s165 + $0x4] sm:$0xc]
      %s1030 = scalar_lea.vmem %s1, 160
      %v1031 = vld [vmem:[%s1030] sm:$0xf]
      %v1032 = vld [vmem:[%s1030 + $0x4] sm:$0xf]
      %v1033 = vld [vmem:[%s1030 + $0x8] sm:$0xf]
      %v1034 = vld [vmem:[%s1030 + $0xc] sm:$0xf]
      %v1035 = vld [vmem:[%s1030 + $0x10] sm:$0xf]
      %v1036 = vld [vmem:[%s1030 + $0x14] sm:$0xf]
      %v1037 = vld [vmem:[%s1030 + $0x18] sm:$0xf]
      %v1038 = vld [vmem:[%s1030 + $0x1c] sm:$0xf]
      %v1040 = vunpack.c.l.b16 %v1029
      %v1041 = vpack.c.b16 %v841, %v1040
      %vm1042 = vcmask 1045504
      %v1043 = vrot.slane %v1041, 2
      %v1044 = vrot.slane %v852, 2
      %v1045 = vsel %vm1042, %v1043, %v1044
      %v1046 = vrot.slane %v853, 2
      %v1047 = vsel %vm1042, %v1044, %v1046
      %v1048 = vrot.slane %v854, 2
      %v1049 = vsel %vm1042, %v1046, %v1048
      %v1050 = vrot.slane %v855, 2
      %v1051 = vsel %vm1042, %v1048, %v1050
      %v1052 = vrot.slane %v856, 2
      %v1053 = vsel %vm1042, %v1050, %v1052
      %v1062 = vunpack.c.l.b16 %v1031
      %v1063 = vunpack.c.l.b16 %v1032
      %v1064 = vunpack.c.l.b16 %v1033
      %v1065 = vunpack.c.l.b16 %v1034
      %v1066 = vunpack.c.l.b16 %v1035
      %v1067 = vunpack.c.l.b16 %v1036
      %v1068 = vunpack.c.l.b16 %v1037
      %v1069 = vunpack.c.l.b16 %v1038
      %v1070 = vpack.c.b16 %v1063, %v1062
      %v1071 = vpack.c.b16 %v1065, %v1064
      %v1072 = vpack.c.b16 %v1067, %v1066
      %v1073 = vpack.c.b16 %v1069, %v1068
      %v1079 = vsel %vm289, %v1045, 0
      %v1082 = vsel %vm289, %v1047, 0
      %v1085 = vsel %vm289, %v1049, 0
      %v1088 = vsel %vm289, %v1051, 0
      %v1091 = vsel %vm289, %v1053, 0
      %1093 = vmatprep.subr.bf16.mxu0 0
      %1094 = vmatpush1.bf16.msra.mxu0 0
      %1095 = vmatprep.subr.bf16.mxu0 0
      %1096 = vmatpush1.bf16.msra.mxu0 0
      %1097 = vmatprep.subr.bf16.mxu0 0
      %1098 = vmatpush1.bf16.msra.mxu0 0
      %1099 = vmatprep.subr.bf16.mxu0 0
      %1100 = vmatpush1.bf16.msra.mxu0 0
      %1101 = vmatprep.subr.bf16.mxu0 0
      %1102 = vmatpush1.bf16.msra.mxu0 %v1073
      %1103 = vmatprep.subr.bf16.mxu0 0
      %1104 = vmatpush1.bf16.msra.mxu0 %v1072
      %1105 = vmatprep.subr.bf16.mxu0 0
      %1106 = vmatpush1.bf16.msra.mxu0 %v1071
      %1107 = vmatprep.subr.bf16.mxu0 0
      %1108 = vmatpush1.bf16.msra.mxu0 %v1070
      %1109 = vmatprep.subr.bf16.mxu0 0
      %1110 = vmatpush2.bf16.msra.mxu0 0
      %1111 = vmatprep.subr.bf16.mxu0 0
      %1112 = vmatpush2.bf16.msra.mxu0 0
      %1113 = vmatprep.subr.bf16.mxu0 0
      %1114 = vmatpush2.bf16.msra.mxu0 0
      %1115 = vmatprep.subr.bf16.mxu0 0
      %1116 = vmatpush2.bf16.msra.mxu0 0
      %1117 = vmatprep.subr.bf16.mxu0 0
      %1118 = vmatpush2.bf16.msra.mxu0 0
      %1119 = vmatprep.subr.bf16.mxu0 0
      %1120 = vmatpush2.bf16.msra.mxu0 0
      %1121 = vmatprep.subr.bf16.mxu0 0
      %1122 = vmatpush2.bf16.msra.mxu0 0
      %1123 = vmatprep.subr.bf16.mxu0 0
      %1124 = vmatpush2.bf16.msra.mxu0 0
      %1125 = vmatprep.mubr.bf16.mxu0 0
      %1126 = vmatmul.mubr.bf16.gmra.mxu0 %v1079
      %v1127 = vpop.f32.mrf.mxu0
      %v1128 = vadd.f32 0.0, %v1127
      %v1129 = vpop.f32.mrf.mxu0
      %v1130 = vpop.f32.mrf.mxu0
      %v1131 = vadd.f32 0.0, %v1130
      %v1132 = vpop.f32.mrf.mxu0
      %1133 = vmatprep.mubr.bf16.mxu0 0
      %1134 = vmatmul.mubr.bf16.gmra.mxu0 %v1082
      %v1135 = vpop.f32.mrf.mxu0
      %v1136 = vadd.f32 0.0, %v1135
      %v1137 = vpop.f32.mrf.mxu0
      %v1138 = vpop.f32.mrf.mxu0
      %v1139 = vadd.f32 0.0, %v1138
      %v1140 = vpop.f32.mrf.mxu0
      %1141 = vmatprep.mubr.bf16.mxu0 0
      %1142 = vmatmul.mubr.bf16.gmra.mxu0 %v1085
      %v1143 = vpop.f32.mrf.mxu0
      %v1144 = vadd.f32 0.0, %v1143
      %v1145 = vpop.f32.mrf.mxu0
      %v1146 = vpop.f32.mrf.mxu0
      %v1147 = vadd.f32 0.0, %v1146
      %v1148 = vpop.f32.mrf.mxu0
      %1149 = vmatprep.mubr.bf16.mxu0 0
      %1150 = vmatmul.mubr.bf16.gmra.mxu0 %v1088
      %v1151 = vpop.f32.mrf.mxu0
      %v1152 = vadd.f32 0.0, %v1151
      %v1153 = vpop.f32.mrf.mxu0
      %v1154 = vpop.f32.mrf.mxu0
      %v1155 = vadd.f32 0.0, %v1154
      %v1156 = vpop.f32.mrf.mxu0
      %1157 = vmatprep.mubr.bf16.mxu0 0
      %1158 = vmatmul.mubr.bf16.gmra.mxu0 %v1091
      %v1159 = vpop.f32.mrf.mxu0
      %v1160 = vadd.f32 0.0, %v1159
      %v1161 = vpop.f32.mrf.mxu0
      %v1162 = vpop.f32.mrf.mxu0
      %v1163 = vadd.f32 0.0, %v1162
      %v1164 = vpop.f32.mrf.mxu0
      %1165 = vdwg.mxu0
      %v1166 = vadd.f32 %v1019, %v1128
      %v1167 = vadd.f32 %v1020, %v1131
      %v1168 = vadd.f32 %v1021, %v1136
      %v1169 = vadd.f32 %v1022, %v1139
      %v1170 = vadd.f32 %v1023, %v1144
      %v1171 = vadd.f32 %v1024, %v1147
      %v1172 = vadd.f32 %v1025, %v1152
      %v1173 = vadd.f32 %v1026, %v1155
      %v1174 = vadd.f32 %v1027, %v1160
      %v1175 = vadd.f32 %v1028, %v1163
      %v1176 = vld [vmem:[%s165 + $0x8] sm:$0xc]
      %v1177 = vld [vmem:[%s165 + $0xc] sm:$0xf]
      %v1178 = vld [vmem:[%s165 + $0x10] sm:$0xf]
      %v1179 = vld [vmem:[%s165 + $0x14] sm:$0xf]
      %v1180 = vld [vmem:[%s165 + $0x18] sm:$0xf]
      %v1181 = vld [vmem:[%s165 + $0x1c] sm:$0xf]
      %v1182 = vld [vmem:[%s165 + $0x20] sm:$0xf]
      %v1183 = vld [vmem:[%s165 + $0x24] sm:$0xf]
      %v1184 = vld [vmem:[%s165 + $0x28] sm:$0xf]
      %v1185 = vld [vmem:[%s165 + $0x2c] sm:$0xf]
      %v1186 = vld [vmem:[%s165 + $0x30] sm:$0x1]
      %s1187 = scalar_lea.vmem %s1, 192
      %v1188 = vld [vmem:[%s1187] sm:$0xf]
      %v1189 = vld [vmem:[%s1187 + $0x4] sm:$0xf]
      %v1190 = vld [vmem:[%s1187 + $0x8] sm:$0xf]
      %v1191 = vld [vmem:[%s1187 + $0xc] sm:$0xf]
      %v1192 = vld [vmem:[%s1187 + $0x10] sm:$0xf]
      %v1193 = vld [vmem:[%s1187 + $0x14] sm:$0xf]
      %v1194 = vld [vmem:[%s1187 + $0x18] sm:$0xf]
      %v1195 = vld [vmem:[%s1187 + $0x1c] sm:$0xf]
      %v1207 = vunpack.c.l.b16 %v1176
      %v1208 = vunpack.c.l.b16 %v1177
      %v1209 = vunpack.c.l.b16 %v1178
      %v1210 = vunpack.c.l.b16 %v1179
      %v1211 = vunpack.c.l.b16 %v1180
      %v1212 = vunpack.c.l.b16 %v1181
      %v1213 = vunpack.c.l.b16 %v1182
      %v1214 = vunpack.c.l.b16 %v1183
      %v1215 = vunpack.c.l.b16 %v1184
      %v1216 = vunpack.c.l.b16 %v1185
      %v1217 = vunpack.c.l.b16 %v1186
      %v1218 = vpack.c.b16 %v1208, %v1207
      %v1219 = vpack.c.b16 %v1210, %v1209
      %v1220 = vpack.c.b16 %v1212, %v1211
      %v1221 = vpack.c.b16 %v1214, %v1213
      %v1222 = vpack.c.b16 %v1216, %v1215
      %v1223 = vpack.c.b16 %v1217, %v1217
      %v1224 = vrot.slane %v1218, 2
      %v1225 = vrot.slane %v1219, 2
      %v1226 = vsel %vm1042, %v1224, %v1225
      %v1227 = vrot.slane %v1220, 2
      %v1228 = vsel %vm1042, %v1225, %v1227
      %v1229 = vrot.slane %v1221, 2
      %v1230 = vsel %vm1042, %v1227, %v1229
      %v1231 = vrot.slane %v1222, 2
      %v1232 = vsel %vm1042, %v1229, %v1231
      %v1233 = vrot.slane %v1223, 2
      %v1234 = vsel %vm1042, %v1231, %v1233
      %v1243 = vunpack.c.l.b16 %v1188
      %v1244 = vunpack.c.l.b16 %v1189
      %v1245 = vunpack.c.l.b16 %v1190
      %v1246 = vunpack.c.l.b16 %v1191
      %v1247 = vunpack.c.l.b16 %v1192
      %v1248 = vunpack.c.l.b16 %v1193
      %v1249 = vunpack.c.l.b16 %v1194
      %v1250 = vunpack.c.l.b16 %v1195
      %v1251 = vpack.c.b16 %v1244, %v1243
      %v1252 = vpack.c.b16 %v1246, %v1245
      %v1253 = vpack.c.b16 %v1248, %v1247
      %v1254 = vpack.c.b16 %v1250, %v1249
      %v1260 = vsel %vm289, %v1226, 0
      %v1263 = vsel %vm289, %v1228, 0
      %v1266 = vsel %vm289, %v1230, 0
      %v1269 = vsel %vm289, %v1232, 0
      %v1272 = vsel %vm289, %v1234, 0
      %1274 = vmatprep.subr.bf16.mxu0 0
      %1275 = vmatpush1.bf16.msra.mxu0 0
      %1276 = vmatprep.subr.bf16.mxu0 0
      %1277 = vmatpush1.bf16.msra.mxu0 0
      %1278 = vmatprep.subr.bf16.mxu0 0
      %1279 = vmatpush1.bf16.msra.mxu0 0
      %1280 = vmatprep.subr.bf16.mxu0 0
      %1281 = vmatpush1.bf16.msra.mxu0 0
      %1282 = vmatprep.subr.bf16.mxu0 0
      %1283 = vmatpush1.bf16.msra.mxu0 %v1254
      %1284 = vmatprep.subr.bf16.mxu0 0
      %1285 = vmatpush1.bf16.msra.mxu0 %v1253
      %1286 = vmatprep.subr.bf16.mxu0 0
      %1287 = vmatpush1.bf16.msra.mxu0 %v1252
      %1288 = vmatprep.subr.bf16.mxu0 0
      %1289 = vmatpush1.bf16.msra.mxu0 %v1251
      %1290 = vmatprep.subr.bf16.mxu0 0
      %1291 = vmatpush2.bf16.msra.mxu0 0
      %1292 = vmatprep.subr.bf16.mxu0 0
      %1293 = vmatpush2.bf16.msra.mxu0 0
      %1294 = vmatprep.subr.bf16.mxu0 0
      %1295 = vmatpush2.bf16.msra.mxu0 0
      %1296 = vmatprep.subr.bf16.mxu0 0
      %1297 = vmatpush2.bf16.msra.mxu0 0
      %1298 = vmatprep.subr.bf16.mxu0 0
      %1299 = vmatpush2.bf16.msra.mxu0 0
      %1300 = vmatprep.subr.bf16.mxu0 0
      %1301 = vmatpush2.bf16.msra.mxu0 0
      %1302 = vmatprep.subr.bf16.mxu0 0
      %1303 = vmatpush2.bf16.msra.mxu0 0
      %1304 = vmatprep.subr.bf16.mxu0 0
      %1305 = vmatpush2.bf16.msra.mxu0 0
      %1306 = vmatprep.mubr.bf16.mxu0 0
      %1307 = vmatmul.mubr.bf16.gmra.mxu0 %v1260
      %v1308 = vpop.f32.mrf.mxu0
      %v1309 = vadd.f32 0.0, %v1308
      %v1310 = vpop.f32.mrf.mxu0
      %v1311 = vpop.f32.mrf.mxu0
      %v1312 = vadd.f32 0.0, %v1311
      %v1313 = vpop.f32.mrf.mxu0
      %1314 = vmatprep.mubr.bf16.mxu0 0
      %1315 = vmatmul.mubr.bf16.gmra.mxu0 %v1263
      %v1316 = vpop.f32.mrf.mxu0
      %v1317 = vadd.f32 0.0, %v1316
      %v1318 = vpop.f32.mrf.mxu0
      %v1319 = vpop.f32.mrf.mxu0
      %v1320 = vadd.f32 0.0, %v1319
      %v1321 = vpop.f32.mrf.mxu0
      %1322 = vmatprep.mubr.bf16.mxu0 0
      %1323 = vmatmul.mubr.bf16.gmra.mxu0 %v1266
      %v1324 = vpop.f32.mrf.mxu0
      %v1325 = vadd.f32 0.0, %v1324
      %v1326 = vpop.f32.mrf.mxu0
      %v1327 = vpop.f32.mrf.mxu0
      %v1328 = vadd.f32 0.0, %v1327
      %v1329 = vpop.f32.mrf.mxu0
      %1330 = vmatprep.mubr.bf16.mxu0 0
      %1331 = vmatmul.mubr.bf16.gmra.mxu0 %v1269
      %v1332 = vpop.f32.mrf.mxu0
      %v1333 = vadd.f32 0.0, %v1332
      %v1334 = vpop.f32.mrf.mxu0
      %v1335 = vpop.f32.mrf.mxu0
      %v1336 = vadd.f32 0.0, %v1335
      %v1337 = vpop.f32.mrf.mxu0
      %1338 = vmatprep.mubr.bf16.mxu0 0
      %1339 = vmatmul.mubr.bf16.gmra.mxu0 %v1272
      %v1340 = vpop.f32.mrf.mxu0
      %v1341 = vadd.f32 0.0, %v1340
      %v1342 = vpop.f32.mrf.mxu0
      %v1343 = vpop.f32.mrf.mxu0
      %v1344 = vadd.f32 0.0, %v1343
      %v1345 = vpop.f32.mrf.mxu0
      %1346 = vdwg.mxu0
      %v1347 = vadd.f32 %v1166, %v1309
      %v1348 = vadd.f32 %v1167, %v1312
      %v1349 = vadd.f32 %v1168, %v1317
      %v1350 = vadd.f32 %v1169, %v1320
      %v1351 = vadd.f32 %v1170, %v1325
      %v1352 = vadd.f32 %v1171, %v1328
      %v1353 = vadd.f32 %v1172, %v1333
      %v1354 = vadd.f32 %v1173, %v1336
      %v1355 = vadd.f32 %v1174, %v1341
      %v1356 = vadd.f32 %v1175, %v1344
      %v1357 = vld [vmem:[%s165 + $0x30] sm:$0x3]
      %s1358 = scalar_lea.vmem %s1, 224
      %v1359 = vld [vmem:[%s1358] sm:$0xf]
      %v1360 = vld [vmem:[%s1358 + $0x4] sm:$0xf]
      %v1361 = vld [vmem:[%s1358 + $0x8] sm:$0xf]
      %v1362 = vld [vmem:[%s1358 + $0xc] sm:$0xf]
      %v1363 = vld [vmem:[%s1358 + $0x10] sm:$0xf]
      %v1364 = vld [vmem:[%s1358 + $0x14] sm:$0xf]
      %v1365 = vld [vmem:[%s1358 + $0x18] sm:$0xf]
      %v1366 = vld [vmem:[%s1358 + $0x1c] sm:$0xf]
      %v1368 = vunpack.c.l.b16 %v1357
      %v1369 = vpack.c.b16 %v1368, %v1368
      %vm1370 = vsmask.f32 5376
      %v1372 = vshrl.u32 %v1218, 16
      %v1374 = vrot.slane %v1372, 2
      %v1375 = vshll.u32 %v1218, 16
      %v1377 = vrot.slane %v1375, 3
      %v1378 = vor.u32 %v1374, %v1377
      %v1380 = vshrl.u32 %v1219, 16
      %v1382 = vrot.slane %v1380, 2
      %v1383 = vshll.u32 %v1219, 16
      %v1385 = vrot.slane %v1383, 3
      %v1386 = vor.u32 %v1382, %v1385
      %v1387 = vsel %vm1370, %v1378, %v1386
      %v1389 = vshrl.u32 %v1220, 16
      %v1391 = vrot.slane %v1389, 2
      %v1392 = vshll.u32 %v1220, 16
      %v1394 = vrot.slane %v1392, 3
      %v1395 = vor.u32 %v1391, %v1394
      %v1396 = vsel %vm1370, %v1386, %v1395
      %v1398 = vshrl.u32 %v1221, 16
      %v1400 = vrot.slane %v1398, 2
      %v1401 = vshll.u32 %v1221, 16
      %v1403 = vrot.slane %v1401, 3
      %v1404 = vor.u32 %v1400, %v1403
      %v1405 = vsel %vm1370, %v1395, %v1404
      %v1407 = vshrl.u32 %v1222, 16
      %v1409 = vrot.slane %v1407, 2
      %v1410 = vshll.u32 %v1222, 16
      %v1412 = vrot.slane %v1410, 3
      %v1413 = vor.u32 %v1409, %v1412
      %v1414 = vsel %vm1370, %v1404, %v1413
      %v1416 = vshrl.u32 %v1369, 16
      %v1418 = vrot.slane %v1416, 2
      %v1419 = vshll.u32 %v1369, 16
      %v1421 = vrot.slane %v1419, 3
      %v1422 = vor.u32 %v1418, %v1421
      %v1423 = vsel %vm1370, %v1413, %v1422
      %v1432 = vunpack.c.l.b16 %v1359
      %v1433 = vunpack.c.l.b16 %v1360
      %v1434 = vunpack.c.l.b16 %v1361
      %v1435 = vunpack.c.l.b16 %v1362
      %v1436 = vunpack.c.l.b16 %v1363
      %v1437 = vunpack.c.l.b16 %v1364
      %v1438 = vunpack.c.l.b16 %v1365
      %v1439 = vunpack.c.l.b16 %v1366
      %v1440 = vpack.c.b16 %v1433, %v1432
      %v1441 = vpack.c.b16 %v1435, %v1434
      %v1442 = vpack.c.b16 %v1437, %v1436
      %v1443 = vpack.c.b16 %v1439, %v1438
      %v1449 = vsel %vm289, %v1387, 0
      %v1452 = vsel %vm289, %v1396, 0
      %v1455 = vsel %vm289, %v1405, 0
      %v1458 = vsel %vm289, %v1414, 0
      %v1461 = vsel %vm289, %v1423, 0
      %1463 = vmatprep.subr.bf16.mxu0 0
      %1464 = vmatpush1.bf16.msra.mxu0 0
      %1465 = vmatprep.subr.bf16.mxu0 0
      %1466 = vmatpush1.bf16.msra.mxu0 0
      %1467 = vmatprep.subr.bf16.mxu0 0
      %1468 = vmatpush1.bf16.msra.mxu0 0
      %1469 = vmatprep.subr.bf16.mxu0 0
      %1470 = vmatpush1.bf16.msra.mxu0 0
      %1471 = vmatprep.subr.bf16.mxu0 0
      %1472 = vmatpush1.bf16.msra.mxu0 %v1443
      %1473 = vmatprep.subr.bf16.mxu0 0
      %1474 = vmatpush1.bf16.msra.mxu0 %v1442
      %1475 = vmatprep.subr.bf16.mxu0 0
      %1476 = vmatpush1.bf16.msra.mxu0 %v1441
      %1477 = vmatprep.subr.bf16.mxu0 0
      %1478 = vmatpush1.bf16.msra.mxu0 %v1440
      %1479 = vmatprep.subr.bf16.mxu0 0
      %1480 = vmatpush2.bf16.msra.mxu0 0
      %1481 = vmatprep.subr.bf16.mxu0 0
      %1482 = vmatpush2.bf16.msra.mxu0 0
      %1483 = vmatprep.subr.bf16.mxu0 0
      %1484 = vmatpush2.bf16.msra.mxu0 0
      %1485 = vmatprep.subr.bf16.mxu0 0
      %1486 = vmatpush2.bf16.msra.mxu0 0
      %1487 = vmatprep.subr.bf16.mxu0 0
      %1488 = vmatpush2.bf16.msra.mxu0 0
      %1489 = vmatprep.subr.bf16.mxu0 0
      %1490 = vmatpush2.bf16.msra.mxu0 0
      %1491 = vmatprep.subr.bf16.mxu0 0
      %1492 = vmatpush2.bf16.msra.mxu0 0
      %1493 = vmatprep.subr.bf16.mxu0 0
      %1494 = vmatpush2.bf16.msra.mxu0 0
      %1495 = vmatprep.mubr.bf16.mxu0 0
      %1496 = vmatmul.mubr.bf16.gmra.mxu0 %v1449
      %v1497 = vpop.f32.mrf.mxu0
      %v1498 = vadd.f32 0.0, %v1497
      %v1499 = vpop.f32.mrf.mxu0
      %v1500 = vpop.f32.mrf.mxu0
      %v1501 = vadd.f32 0.0, %v1500
      %v1502 = vpop.f32.mrf.mxu0
      %1503 = vmatprep.mubr.bf16.mxu0 0
      %1504 = vmatmul.mubr.bf16.gmra.mxu0 %v1452
      %v1505 = vpop.f32.mrf.mxu0
      %v1506 = vadd.f32 0.0, %v1505
      %v1507 = vpop.f32.mrf.mxu0
      %v1508 = vpop.f32.mrf.mxu0
      %v1509 = vadd.f32 0.0, %v1508
      %v1510 = vpop.f32.mrf.mxu0
      %1511 = vmatprep.mubr.bf16.mxu0 0
      %1512 = vmatmul.mubr.bf16.gmra.mxu0 %v1455
      %v1513 = vpop.f32.mrf.mxu0
      %v1514 = vadd.f32 0.0, %v1513
      %v1515 = vpop.f32.mrf.mxu0
      %v1516 = vpop.f32.mrf.mxu0
      %v1517 = vadd.f32 0.0, %v1516
      %v1518 = vpop.f32.mrf.mxu0
      %1519 = vmatprep.mubr.bf16.mxu0 0
      %1520 = vmatmul.mubr.bf16.gmra.mxu0 %v1458
      %v1521 = vpop.f32.mrf.mxu0
      %v1522 = vadd.f32 0.0, %v1521
      %v1523 = vpop.f32.mrf.mxu0
      %v1524 = vpop.f32.mrf.mxu0
      %v1525 = vadd.f32 0.0, %v1524
      %v1526 = vpop.f32.mrf.mxu0
      %1527 = vmatprep.mubr.bf16.mxu0 0
      %1528 = vmatmul.mubr.bf16.gmra.mxu0 %v1461
      %v1529 = vpop.f32.mrf.mxu0
      %v1530 = vadd.f32 0.0, %v1529
      %v1531 = vpop.f32.mrf.mxu0
      %v1532 = vpop.f32.mrf.mxu0
      %v1533 = vadd.f32 0.0, %v1532
      %v1534 = vpop.f32.mrf.mxu0
      %1535 = vdwg.mxu0
      %v1536 = vadd.f32 %v1347, %v1498
      %v1537 = vadd.f32 %v1348, %v1501
      %v1538 = vadd.f32 %v1349, %v1506
      %v1539 = vadd.f32 %v1350, %v1509
      %v1540 = vadd.f32 %v1351, %v1514
      %v1541 = vadd.f32 %v1352, %v1517
      %v1542 = vadd.f32 %v1353, %v1522
      %v1543 = vadd.f32 %v1354, %v1525
      %v1544 = vadd.f32 %v1355, %v1530
      %v1545 = vadd.f32 %v1356, %v1533
      %v1546 = vld [vmem:[%s165 + $0x8] sm:$0x8]
      %s1547 = scalar_lea.vmem %s1, 256
      %v1548 = vld [vmem:[%s1547] sm:$0xf]
      %v1549 = vld [vmem:[%s1547 + $0x4] sm:$0xf]
      %v1550 = vld [vmem:[%s1547 + $0x8] sm:$0xf]
      %v1551 = vld [vmem:[%s1547 + $0xc] sm:$0xf]
      %v1552 = vld [vmem:[%s1547 + $0x10] sm:$0xf]
      %v1553 = vld [vmem:[%s1547 + $0x14] sm:$0xf]
      %v1554 = vld [vmem:[%s1547 + $0x18] sm:$0xf]
      %v1555 = vld [vmem:[%s1547 + $0x1c] sm:$0xf]
      %v1557 = vunpack.c.l.b16 %v1546
      %v1558 = vpack.c.b16 %v1208, %v1557
      %vm1559 = vcmask 1044480
      %v1560 = vrot.slane %v1558, 3
      %v1561 = vrot.slane %v1219, 3
      %v1562 = vsel %vm1559, %v1560, %v1561
      %v1563 = vrot.slane %v1220, 3
      %v1564 = vsel %vm1559, %v1561, %v1563
      %v1565 = vrot.slane %v1221, 3
      %v1566 = vsel %vm1559, %v1563, %v1565
      %v1567 = vrot.slane %v1222, 3
      %v1568 = vsel %vm1559, %v1565, %v1567
      %v1569 = vrot.slane %v1369, 3
      %v1570 = vsel %vm1559, %v1567, %v1569
      %v1579 = vunpack.c.l.b16 %v1548
      %v1580 = vunpack.c.l.b16 %v1549
      %v1581 = vunpack.c.l.b16 %v1550
      %v1582 = vunpack.c.l.b16 %v1551
      %v1583 = vunpack.c.l.b16 %v1552
      %v1584 = vunpack.c.l.b16 %v1553
      %v1585 = vunpack.c.l.b16 %v1554
      %v1586 = vunpack.c.l.b16 %v1555
      %v1587 = vpack.c.b16 %v1580, %v1579
      %v1588 = vpack.c.b16 %v1582, %v1581
      %v1589 = vpack.c.b16 %v1584, %v1583
      %v1590 = vpack.c.b16 %v1586, %v1585
      %v1596 = vsel %vm289, %v1562, 0
      %v1599 = vsel %vm289, %v1564, 0
      %v1602 = vsel %vm289, %v1566, 0
      %v1605 = vsel %vm289, %v1568, 0
      %v1608 = vsel %vm289, %v1570, 0
      %1610 = vmatprep.subr.bf16.mxu0 0
      %1611 = vmatpush1.bf16.msra.mxu0 0
      %1612 = vmatprep.subr.bf16.mxu0 0
      %1613 = vmatpush1.bf16.msra.mxu0 0
      %1614 = vmatprep.subr.bf16.mxu0 0
      %1615 = vmatpush1.bf16.msra.mxu0 0
      %1616 = vmatprep.subr.bf16.mxu0 0
      %1617 = vmatpush1.bf16.msra.mxu0 0
      %1618 = vmatprep.subr.bf16.mxu0 0
      %1619 = vmatpush1.bf16.msra.mxu0 %v1590
      %1620 = vmatprep.subr.bf16.mxu0 0
      %1621 = vmatpush1.bf16.msra.mxu0 %v1589
      %1622 = vmatprep.subr.bf16.mxu0 0
      %1623 = vmatpush1.bf16.msra.mxu0 %v1588
      %1624 = vmatprep.subr.bf16.mxu0 0
      %1625 = vmatpush1.bf16.msra.mxu0 %v1587
      %1626 = vmatprep.subr.bf16.mxu0 0
      %1627 = vmatpush2.bf16.msra.mxu0 0
      %1628 = vmatprep.subr.bf16.mxu0 0
      %1629 = vmatpush2.bf16.msra.mxu0 0
      %1630 = vmatprep.subr.bf16.mxu0 0
      %1631 = vmatpush2.bf16.msra.mxu0 0
      %1632 = vmatprep.subr.bf16.mxu0 0
      %1633 = vmatpush2.bf16.msra.mxu0 0
      %1634 = vmatprep.subr.bf16.mxu0 0
      %1635 = vmatpush2.bf16.msra.mxu0 0
      %1636 = vmatprep.subr.bf16.mxu0 0
      %1637 = vmatpush2.bf16.msra.mxu0 0
      %1638 = vmatprep.subr.bf16.mxu0 0
      %1639 = vmatpush2.bf16.msra.mxu0 0
      %1640 = vmatprep.subr.bf16.mxu0 0
      %1641 = vmatpush2.bf16.msra.mxu0 0
      %1642 = vmatprep.mubr.bf16.mxu0 0
      %1643 = vmatmul.mubr.bf16.gmra.mxu0 %v1596
      %v1644 = vpop.f32.mrf.mxu0
      %v1645 = vadd.f32 0.0, %v1644
      %v1646 = vpop.f32.mrf.mxu0
      %v1647 = vpop.f32.mrf.mxu0
      %v1648 = vadd.f32 0.0, %v1647
      %v1649 = vpop.f32.mrf.mxu0
      %1650 = vmatprep.mubr.bf16.mxu0 0
      %1651 = vmatmul.mubr.bf16.gmra.mxu0 %v1599
      %v1652 = vpop.f32.mrf.mxu0
      %v1653 = vadd.f32 0.0, %v1652
      %v1654 = vpop.f32.mrf.mxu0
      %v1655 = vpop.f32.mrf.mxu0
      %v1656 = vadd.f32 0.0, %v1655
      %v1657 = vpop.f32.mrf.mxu0
      %1658 = vmatprep.mubr.bf16.mxu0 0
      %1659 = vmatmul.mubr.bf16.gmra.mxu0 %v1602
      %v1660 = vpop.f32.mrf.mxu0
      %v1661 = vadd.f32 0.0, %v1660
      %v1662 = vpop.f32.mrf.mxu0
      %v1663 = vpop.f32.mrf.mxu0
      %v1664 = vadd.f32 0.0, %v1663
      %v1665 = vpop.f32.mrf.mxu0
      %1666 = vmatprep.mubr.bf16.mxu0 0
      %1667 = vmatmul.mubr.bf16.gmra.mxu0 %v1605
      %v1668 = vpop.f32.mrf.mxu0
      %v1669 = vadd.f32 0.0, %v1668
      %v1670 = vpop.f32.mrf.mxu0
      %v1671 = vpop.f32.mrf.mxu0
      %v1672 = vadd.f32 0.0, %v1671
      %v1673 = vpop.f32.mrf.mxu0
      %1674 = vmatprep.mubr.bf16.mxu0 0
      %1675 = vmatmul.mubr.bf16.gmra.mxu0 %v1608
      %v1676 = vpop.f32.mrf.mxu0
      %v1677 = vadd.f32 0.0, %v1676
      %v1678 = vpop.f32.mrf.mxu0
      %v1679 = vpop.f32.mrf.mxu0
      %v1680 = vadd.f32 0.0, %v1679
      %v1681 = vpop.f32.mrf.mxu0
      %1682 = vdwg.mxu0
      %v1683 = vadd.f32 %v1536, %v1645
      %v1684 = vadd.f32 %v1537, %v1648
      %v1685 = vadd.f32 %v1538, %v1653
      %v1686 = vadd.f32 %v1539, %v1656
      %v1687 = vadd.f32 %v1540, %v1661
      %v1688 = vadd.f32 %v1541, %v1664
      %v1689 = vadd.f32 %v1542, %v1669
      %v1690 = vadd.f32 %v1543, %v1672
      %v1691 = vadd.f32 %v1544, %v1677
      %v1692 = vadd.f32 %v1545, %v1680
      %v1693 = vld [vmem:[%s2] sm:$0x1]
      %v1695 = vlaneseq
      %v1696 = vshrl.u32 %v1695, 7
      %v1697 = vsub.s32 0, %v1696
      %v1698 = vrot.slane %v1693, %v1697
      %v1700 = vadd.f32 %v1683, %v1698
      %v1701 = vadd.f32 %v1684, %v1698
      %v1702 = vadd.f32 %v1685, %v1698
      %v1703 = vadd.f32 %v1686, %v1698
      %v1704 = vadd.f32 %v1687, %v1698
      %v1705 = vadd.f32 %v1688, %v1698
      %v1706 = vadd.f32 %v1689, %v1698
      %v1707 = vadd.f32 %v1690, %v1698
      %v1708 = vadd.f32 %v1691, %v1698
      %v1709 = vadd.f32 %v1692, %v1698
      %1710 = vst.msk [vmem:[%s170] sm:$0xff] %vm289, %v1700
      %1711 = vst.msk [vmem:[%s170 + $0x8] sm:$0xff] %vm289, %v1701
      %1712 = vst.msk [vmem:[%s170 + $0x10] sm:$0xff] %vm289, %v1702
      %1713 = vst.msk [vmem:[%s170 + $0x18] sm:$0xff] %vm289, %v1703
      %1714 = vst.msk [vmem:[%s170 + $0x20] sm:$0xff] %vm289, %v1704
      %1715 = vst.msk [vmem:[%s170 + $0x28] sm:$0xff] %vm289, %v1705
      %1716 = vst.msk [vmem:[%s170 + $0x30] sm:$0xff] %vm289, %v1706
      %1717 = vst.msk [vmem:[%s170 + $0x38] sm:$0xff] %vm289, %v1707
      %1718 = vst.msk [vmem:[%s170 + $0x40] sm:$0xff] %vm289, %v1708
      %vm1719 = vcmask 521216
      %1720 = vst.msk [vmem:[%s170 + $0x48] sm:$0x3f] %vm1719, %v1709
      %p1721 = scmp.lt.s32.totalorder %s14, 1
      %s1722 = scalar_select %p1721, %s14, 1
      %s1723 = smul.addr %s1722, 10
      %s1724 = smul.addr %s1723, 8
      %s1725 = scalar_lea.vmem %s3, %s1724
      // Predicated region
      $region33: #{detector_backbone_with_fpn_forward.15} parent=31 // pred_check
        %p1726 = pneg %p100
      $region34: #{detector_backbone_with_fpn_forward.15} parent=31 // pred_check_branch
        %1728 = sbr.rel (%p1726) target = $region36
      $region35: #{detector_backbone_with_fpn_forward.15} parent=31 // pred_region
        _
      $region36: #{detector_backbone_with_fpn_forward.15} parent=31 // pred_fallthru
        _
    $region32: #{detector_backbone_with_fpn_forward.15} parent=5 // pred_fallthru
      _
    %p1729 = scmp.le.s32.totalorder 2, %s9
    // Predicated region
    $region37: #{detector_backbone_with_fpn_forward.15} parent=5 // pred_check
      %p1730 = pneg %p1729
    $region38: #{detector_backbone_with_fpn_forward.15} parent=5 // pred_check_branch
      %1732 = sbr.rel (%p1730) target = $region40
    $region39: #{detector_backbone_with_fpn_forward.15} parent=5 // pred_region
      %s1733 = ssub.s32 %s9, 2
      // Predicated region
      $region41: #{detector_backbone_with_fpn_forward.15} parent=39 // pred_check
        %p1734 = pneg %p106
      $region42: #{detector_backbone_with_fpn_forward.15} parent=39 // pred_check_branch
        %1736 = sbr.rel (%p1734) target = $region44
      $region43: #{detector_backbone_with_fpn_forward.15} parent=39 // pred_region
        %p1737 = scmp.lt.s32.totalorder %s15, 1
        %s1738 = scalar_select %p1737, %s15, 1
        %s1739 = smul.addr %s1738, 10
        %s1740 = smul.addr %s1739, 8
        %s1741 = scalar_lea.vmem %s3, %s1740
      $region44: #{detector_backbone_with_fpn_forward.15} parent=39 // pred_fallthru
        _
    $region40: #{detector_backbone_with_fpn_forward.15} parent=5 // pred_fallthru
      _
  $region6: #{detector_backbone_with_fpn_forward.15} parent=0 // loop_footer
    %s13 = sadd.s32 1, %s9
  $region7: #{detector_backbone_with_fpn_forward.15} parent=0 // loop_footer_branch
    %8 = sbr.rel target = $region3
  $region8: #{detector_backbone_with_fpn_forward.15} parent=0 // loop_exit
    _

</llo_original>
